<compile_context>
chip_gen: v5e
topology: v5e:2x2
jax: 0.10.0
libtpu: 0.0.40
codegen_flags: <defaults>
</compile_context>

<pallas_src>
import jax
import jax.numpy as jnp
from jax.experimental import pallas as pl
from jax.experimental.pallas import tpu as pltpu

# Keep the pure-JAX reference (and the fp32 in-kernel dots) at full fp32
# precision so the fp32 correctness check can be tight.
jax.config.update("jax_default_matmul_precision", "highest")

# ---- small, module-consistent sizes -----------------------------------------
S = 8            # source sequence length
ENC_HID = 16     # args.encoder_hidden_dim  -> encoder output feature = 2*ENC_HID
E = 2 * ENC_HID  # 32
I = 8            # args.encoder_input_dim
HD = 32          # args.decoder_hidden_dim
O = 16           # args.decoder_output_dim

LANES = 128
G = 3 * HD       # 96, GRU gate width (r|z|n)
XW = I + E       # 40, fused [input | weighted] width
XW_PAD = 48      # padded to a 16-row boundary (bf16 min tile is (16, 128))

# ---- weight-slab row offsets (all on 16-row boundaries: valid fp32 AND bf16) --
R_WE = 0                    # attn_we                          (E , HD)    cols [0:HD]
R_WH = R_WE + E             # [attn_wh | whh]                  (HD, 4*HD)  cols [0:128]
R_WXW = R_WH + HD           # [[wih_i|fcw_i];[wih_w|fcw_w];0]  (48, G+O)   cols [0:112]
R_FCO = R_WXW + XW_PAD      # fcw_o                            (HD, O)     cols [0:O]
R_TOTAL = R_FCO + HD        # 144 rows total

# ---- fp32 bias/aux slab rows (kept fp32 so gate math never sees bf16 biases) --
B_ATTN, B_BIH, B_BHH, B_FC, B_V = 0, 1, 2, 3, 4
B_ROWS = 8


def attn_decoder_kernel(w_ref, b_ref, x_ref, h0_ref, eo_ref, out_ref,
                        h_scr, encwe_scr):
    t = pl.program_id(1)                 # step axis (inner, "arbitrary")
    wdt = w_ref.dtype                    # MXU operand dtype (fp32 or bf16)
    TB = h0_ref.shape[0]                 # batch rows in this block

    # ---- once per batch block: load h0, hoist step-invariant enc @ W_e + b ----
    @pl.when(t == 0)
    def _init():
        h_scr[...] = h0_ref[...]
        eo2 = eo_ref[...].reshape(TB * S, E).astype(wdt)
        ew = jnp.dot(eo2, w_ref[R_WE:R_WE + E, :],
                     preferred_element_type=jnp.float32)[:, 0:HD]
        encwe_scr[...] = (ew.reshape(TB, S, HD)
                          + b_ref[B_ATTN:B_ATTN + 1, 0:HD][:, None, :])

    h = h_scr[...]                                            # (TB, HD) fp32
    x = x_ref[0]                                              # (TB, I)  fp32
    eo = eo_ref[...]                                          # (TB, S, E) fp32

    bih = b_ref[B_BIH:B_BIH + 1, 0:G]                         # (1, G)
    bhh = b_ref[B_BHH:B_BHH + 1, 0:G]                         # (1, G)
    fc_b = b_ref[B_FC:B_FC + 1, 0:O]                          # (1, O)
    v_row = b_ref[B_V:B_V + 1, 0:HD][:, None, :]              # (1, 1, HD)

    # ---- one fused MXU push for hidden: attention part AND GRU hh part --------
    h_wh = jnp.dot(h.astype(wdt), w_ref[R_WH:R_WH + HD, :],
                   preferred_element_type=jnp.float32)        # (TB, 128)

    # ---- attention: tanh(enc@We + h@Wh + b) . v, softmax over S ---------------
    energy = jnp.tanh(encwe_scr[...] + h_wh[:, None, 0:HD])   # (TB, S, HD)
    scores = jnp.sum(energy * v_row, axis=-1)                 # (TB, S)
    scores = scores - jnp.max(scores, axis=-1, keepdims=True)
    ev = jnp.exp(scores)
    a = ev / jnp.sum(ev, axis=-1, keepdims=True)              # exact reciprocal

    # ---- weighted = bmm(a, encoder_outputs) -> (TB, E) ------------------------
    weighted = jnp.einsum('bqs,bse->bqe', a[:, None, :], eo,
                          preferred_element_type=jnp.float32)[:, 0, :]

    # ---- fused projection of [x | weighted]: GRU ih gates + fc_out tail -------
    xw = jnp.concatenate(
        [x, weighted, jnp.zeros((TB, XW_PAD - XW), jnp.float32)], axis=1)
    pxw = jnp.dot(xw.astype(wdt), w_ref[R_WXW:R_WXW + XW_PAD, :],
                  preferred_element_type=jnp.float32)         # (TB, 128)

    # ---- GRU cell (all gate math fp32; safe on v5e, free under latency bound) -
    gx = pxw[:, 0:G] + bih
    gh = h_wh[:, HD:HD + G] + bhh
    r = jax.nn.sigmoid(gx[:, 0:HD] + gh[:, 0:HD])
    z = jax.nn.sigmoid(gx[:, HD:2 * HD] + gh[:, HD:2 * HD])
    n = jnp.tanh(gx[:, 2 * HD:G] + r * gh[:, 2 * HD:G])
    h_new = (1.0 - z) * n + z * h                             # (TB, HD)

    # ---- fc_out( cat(output, weighted, input_seq) ) ---------------------------
    pred = (jnp.dot(h_new.astype(wdt), w_ref[R_FCO:R_FCO + HD, :],
                    preferred_element_type=jnp.float32)[:, 0:O]
            + pxw[:, G:G + O] + fc_b)                         # (TB, O)

    # ---- carry hidden, single unmasked lane-dense store -----------------------
    h_scr[...] = h_new
    out_ref[...] = jnp.concatenate(
        [h_new, pred, jnp.zeros((TB, LANES - HD - O), jnp.float32)],
        axis=1)[None, :, :]


# ---- host-side packing --------------------------------------------------------
def pack_weights(p, dtype=jnp.float32):
    """One lane-dense weight slab; bf16 for v6e/v7x MXU, fp32 for strict checks."""
    w = jnp.zeros((R_TOTAL, LANES), jnp.float32)
    w = w.at[R_WE:R_WE + E, 0:HD].set(p["attn_we"])
    w = w.at[R_WH:R_WH + HD, 0:HD].set(p["attn_wh"])
    w = w.at[R_WH:R_WH + HD, HD:HD + G].set(p["whh"])
    w = w.at[R_WXW:R_WXW + I, 0:G].set(p["wih_i"])
    w = w.at[R_WXW:R_WXW + I, G:G + O].set(p["fcw_i"])
    w = w.at[R_WXW + I:R_WXW + I + E, 0:G].set(p["wih_w"])
    w = w.at[R_WXW + I:R_WXW + I + E, G:G + O].set(p["fcw_w"])
    w = w.at[R_FCO:R_FCO + HD, 0:O].set(p["fcw_o"])
    return w.astype(dtype)


def pack_biases(p):
    """Biases + attention vector, always fp32 (gate/softmax math stays fp32)."""
    b = jnp.zeros((B_ROWS, LANES), jnp.float32)
    b = b.at[B_ATTN, 0:HD].set(p["attn_b"][0])
    b = b.at[B_BIH, 0:G].set(p["bih"][0])
    b = b.at[B_BHH, 0:G].set(p["bhh"][0])
    b = b.at[B_FC, 0:O].set(p["fc_b"][0])
    b = b.at[B_V, 0:HD].set(p["attn_v"][0])
    return b


# ---- wrappers ------------------------------------------------------------------
def attn_decoder_decode(x_seq, h0, encoder_outputs, w_slab, b_slab, *,
                        batch_block=None):
    """Multi-step batched decode (loop + batch inside the kernel).

    x_seq:           (T, B, I)   per-step decoder inputs
    h0:              (B, HD)     initial hidden
    encoder_outputs: (B, S, E)
    returns preds (T, B, O), hiddens (T, B, HD)  -- one module forward per (t, b).
    """
    T, B, _ = x_seq.shape
    TB = B if batch_block is None else batch_block
    assert B % TB == 0 and (TB % 8 == 0 or TB == B)
    nb = B // TB

    out = pl.pallas_call(
        attn_decoder_kernel,
        out_shape=jax.ShapeDtypeStruct((T, B, LANES), jnp.float32),
        grid_spec=pltpu.PrefetchScalarGridSpec(
            num_scalar_prefetch=0,
            grid=(nb, T),
            in_specs=[
                # weights / biases: constant index_map -> DMA'd once, VMEM-resident
                pl.BlockSpec((R_TOTAL, LANES), lambda b, t: (0, 0)),
                pl.BlockSpec((B_ROWS, LANES), lambda b, t: (0, 0)),
                # per-step input row block
                pl.BlockSpec((1, TB, I), lambda b, t: (t, b, 0)),
                # initial hidden / encoder outputs: resident per batch block
                pl.BlockSpec((TB, HD), lambda b, t: (b, 0)),
                pl.BlockSpec((TB, S, E), lambda b, t: (b, 0, 0)),
            ],
            out_specs=pl.BlockSpec((1, TB, LANES), lambda b, t: (t, b, 0)),
            scratch_shapes=[
                pltpu.VMEM((TB, HD), jnp.float32),      # carried hidden
                pltpu.VMEM((TB, S, HD), jnp.float32),   # hoisted enc@We + attn_b
            ],
        ),
        compiler_params=pltpu.CompilerParams(
            # batch axis parallel (v7x: shard across both TCs); step axis is the
            # serial recurrence -> arbitrary.
            dimension_semantics=("parallel", "arbitrary")),
    )(w_slab, b_slab, x_seq, h0, encoder_outputs)

    return out[:, :, HD:HD + O], out[:, :, 0:HD]


def attn_decoder_step(input_seq, hidden, encoder_outputs, w_slab, b_slab):
    """Exactly the PyTorch module forward (single step, batch 1).

    input_seq: (1, I); hidden: (1, HD); encoder_outputs: (S, 1, E)
    returns (prediction (1, O), hidden (1, HD)).
    """
    eo = jnp.transpose(encoder_outputs, (1, 0, 2))        # (1, S, E)
    preds, hiddens = attn_decoder_decode(input_seq[None], hidden, eo,
                                         w_slab, b_slab)
    return preds[0], hiddens[0]


# ---- pure-JAX reference (stepped, batched; fp32) --------------------------------
def reference_decode(x_seq, h0, eo, p):
    def step(h, x):
        energy = jnp.tanh(eo @ p["attn_we"]
                          + (h @ p["attn_wh"])[:, None, :] + p["attn_b"])
        scores = jnp.sum(energy * p["attn_v"], axis=-1)           # (B, S)
        a = jax.nn.softmax(scores, axis=-1)
        weighted = jnp.einsum('bs,bse->be', a, eo)                # (B, E)
        gx = x @ p["wih_i"] + weighted @ p["wih_w"] + p["bih"]
        gh = h @ p["whh"] + p["bhh"]
        r = jax.nn.sigmoid(gx[:, :HD] + gh[:, :HD])
        z = jax.nn.sigmoid(gx[:, HD:2 * HD] + gh[:, HD:2 * HD])
        n = jnp.tanh(gx[:, 2 * HD:] + r * gh[:, 2 * HD:])
        h_new = (1 - z) * n + z * h
        pred = (h_new @ p["fcw_o"] + weighted @ p["fcw_w"]
                + x @ p["fcw_i"] + p["fc_b"])
        return h_new, (pred, h_new)

    _, (preds, hiddens) = jax.lax.scan(step, h0, x_seq)
    return preds, hiddens


def init_params(key):
    ks = jax.random.split(key, 16)

    def u(k, shape, fan_in):
        b = 1.0 / jnp.sqrt(fan_in)
        return jax.random.uniform(k, shape, jnp.float32, -b, b)

    return {
        # attention: Linear(E + HD -> HD), v: (1, HD)
        "attn_wh": u(ks[0], (HD, HD), E + HD),
        "attn_we": u(ks[1], (E, HD), E + HD),
        "attn_b":  u(ks[2], (1, HD), E + HD),
        "attn_v":  u(ks[3], (1, HD), HD),
        # GRU(E + I -> HD): weight_ih split into [input_seq | weighted] parts
        "wih_i":   u(ks[4], (I, 3 * HD), HD),
        "wih_w":   u(ks[5], (E, 3 * HD), HD),
        "bih":     u(ks[6], (1, 3 * HD), HD),
        "whh":     u(ks[7], (HD, 3 * HD), HD),
        "bhh":     u(ks[8], (1, 3 * HD), HD),
        # fc_out: Linear(HD + E + I -> O) split into [output | weighted | input]
        "fcw_o":   u(ks[9], (HD, O), HD + E + I),
        "fcw_w":   u(ks[10], (E, O), HD + E + I),
        "fcw_i":   u(ks[11], (I, O), HD + E + I),
        "fc_b":    u(ks[12], (1, O), HD + E + I),
    }


if __name__ == "__main__":
    key = jax.random.PRNGKey(0)
    k_x, k_h, k_e, k_p = jax.random.split(key, 4)

    T, B = 16, 8   # small demo shapes; production: B in 128-256, batch_block=128
    x_seq = jax.random.normal(k_x, (T, B, I), jnp.float32)
    h0 = jax.random.normal(k_h, (B, HD), jnp.float32)
    eo = jax.random.normal(k_e, (B, S, E), jnp.float32)
    params = init_params(k_p)

    b_slab = pack_biases(params)
    ref_preds, ref_hid = reference_decode(x_seq, h0, eo, params)

    # --- fp32 MXU operands (strict check; v5e-safe default) ---------------------
    w32 = pack_weights(params, jnp.float32)
    preds32, hid32 = attn_decoder_decode(x_seq, h0, eo, w32, b_slab)
    jax.block_until_ready((preds32, hid32))
    assert preds32.shape == (T, B, O) and hid32.shape == (T, B, HD)
    assert jnp.allclose(preds32, ref_preds, atol=2e-4, rtol=2e-4)
    assert jnp.allclose(hid32, ref_hid, atol=2e-4, rtol=2e-4)

    # --- bf16 MXU operands (v6e/v7x-preferred; gate math stays fp32) ------------
    w16 = pack_weights(params, jnp.bfloat16)
    preds16, hid16 = attn_decoder_decode(x_seq, h0, eo, w16, b_slab)
    jax.block_until_ready((preds16, hid16))
    assert jnp.allclose(preds16, ref_preds, atol=5e-2, rtol=5e-2)
    assert jnp.allclose(hid16, ref_hid, atol=5e-2, rtol=5e-2)

    # --- module-exact single-step, batch-1 call (original forward signature) ----
    input_seq = x_seq[0, 0:1]                         # (1, I)
    hidden = h0[0:1]                                  # (1, HD)
    enc_torch = jnp.transpose(eo[0:1], (1, 0, 2))     # (S, 1, E)
    pred1, hid1 = attn_decoder_step(input_seq, hidden, enc_torch, w32, b_slab)
    jax.block_until_ready((pred1, hid1))
    assert pred1.shape == (1, O) and hid1.shape == (1, HD)
    assert jnp.allclose(pred1, ref_preds[0, 0:1], atol=2e-4, rtol=2e-4)
    assert jnp.allclose(hid1, ref_hid[0, 0:1], atol=2e-4, rtol=2e-4)

    print("KERNEL_OK")
</pallas_src>

<mosaic_0001>
module attributes {stable_mosaic.version = 11 : i64} {
  func.func @attn_decoder_kernel(%arg0: i32, %arg1: i32, %arg2: memref<144x128xf32, #tpu.memory_space<vmem>>, %arg3: memref<8x128xf32, #tpu.memory_space<vmem>>, %arg4: memref<1x8x8xf32, #tpu.memory_space<vmem>>, %arg5: memref<8x32xf32, #tpu.memory_space<vmem>>, %arg6: memref<8x8x32xf32, #tpu.memory_space<vmem>>, %arg7: memref<1x8x128xf32, #tpu.memory_space<vmem>>, %arg8: memref<8x32xf32, #tpu.memory_space<vmem>>, %arg9: memref<8x8x32xf32, #tpu.memory_space<vmem>>) attributes {dimension_semantics = [#tpu.dimension_semantics<parallel>, #tpu.dimension_semantics<arbitrary>], iteration_bounds = array<i64: 1, 16>, scalar_prefetch = 0 : i64, scratch_operands = 2 : i64, tpu.core_type = #tpu.core_type<tc>, window_params = [{pipeline_mode = #tpu.pipeline_mode<synchronous>, transform_indices = @transform_0, window_bounds = array<i64: 144, 128>}, {pipeline_mode = #tpu.pipeline_mode<synchronous>, transform_indices = @transform_1, window_bounds = array<i64: 8, 128>}, {transform_indices = @transform_2, window_bounds = array<i64: 1, 8, 8>}, {transform_indices = @transform_3, window_bounds = array<i64: 8, 32>}, {transform_indices = @transform_4, window_bounds = array<i64: 8, 8, 32>}, {transform_indices = @transform_5, window_bounds = array<i64: 1, 8, 128>}]} {
    %c0_i32 = arith.constant 0 : i32
    %0 = arith.cmpi eq, %arg1, %c0_i32 : i32
    %1 = arith.extui %0 : i1 to i32
    %c0_i32_0 = arith.constant 0 : i32
    %2 = arith.cmpi ne, %1, %c0_i32_0 : i32
    scf.if %2 {
      %c0_34 = arith.constant 0 : index
      %c0_35 = arith.constant 0 : index
      %83 = vector.load %arg5[%c0_34, %c0_35] : memref<8x32xf32, #tpu.memory_space<vmem>>, vector<8x32xf32>
      %c0_36 = arith.constant 0 : index
      %c0_37 = arith.constant 0 : index
      %84 = vector.load %arg8[%c0_36, %c0_37] : memref<8x32xf32, #tpu.memory_space<vmem>>, vector<8x32xf32>
      tpu.vector_store %arg8[%c0_36, %c0_37], %83 {strides = array<i32>} : memref<8x32xf32, #tpu.memory_space<vmem>>, vector<8x32xf32>,
      %c0_38 = arith.constant 0 : index
      %c0_39 = arith.constant 0 : index
      %c0_40 = arith.constant 0 : index
      %85 = vector.load %arg6[%c0_38, %c0_39, %c0_40] : memref<8x8x32xf32, #tpu.memory_space<vmem>>, vector<8x8x32xf32>
      %86 = vector.shape_cast %85 : vector<8x8x32xf32> to vector<64x32xf32>
      %c0_41 = arith.constant 0 : index
      %c0_42 = arith.constant 0 : index
      %87 = vector.load %arg2[%c0_41, %c0_42] : memref<144x128xf32, #tpu.memory_space<vmem>>, vector<32x128xf32>
      %cst_43 = arith.constant dense<0.000000e+00> : vector<64x128xf32>
      %88 = tpu.matmul %86, %87, %cst_43 {dimension_numbers = #tpu.dot_dimension_numbers<[1], [0], [0], [1], [0, 0, 1, 1], [], []>, precision = #tpu.contract_precision<fp32>} : vector<64x32xf32>, vector<32x128xf32>, vector<64x128xf32> -> vector<64x128xf32>
      %89 = vector.extract_strided_slice %88 {offsets = [0, 0], sizes = [64, 32], strides = [1, 1]} : vector<64x128xf32> to vector<64x32xf32>
      %90 = vector.shape_cast %89 : vector<64x32xf32> to vector<8x8x32xf32>
      %c0_44 = arith.constant 0 : index
      %c0_45 = arith.constant 0 : index
      %91 = vector.load %arg3[%c0_44, %c0_45] : memref<8x128xf32, #tpu.memory_space<vmem>>, vector<1x32xf32>
      %92 = vector.shape_cast %91 : vector<1x32xf32> to vector<1x1x32xf32>
      %93 = vector.broadcast %92 : vector<1x1x32xf32> to vector<8x8x32xf32>
      %94 = arith.addf %90, %93 : vector<8x8x32xf32>
      %c0_46 = arith.constant 0 : index
      %c0_47 = arith.constant 0 : index
      %c0_48 = arith.constant 0 : index
      %95 = vector.load %arg9[%c0_46, %c0_47, %c0_48] : memref<8x8x32xf32, #tpu.memory_space<vmem>>, vector<8x8x32xf32>
      tpu.vector_store %arg9[%c0_46, %c0_47, %c0_48], %94 {strides = array<i32>} : memref<8x8x32xf32, #tpu.memory_space<vmem>>, vector<8x8x32xf32>,
    } else {
    }
    %c0 = arith.constant 0 : index
    %c0_1 = arith.constant 0 : index
    %3 = vector.load %arg8[%c0, %c0_1] : memref<8x32xf32, #tpu.memory_space<vmem>>, vector<8x32xf32>
    %c0_2 = arith.constant 0 : index
    %c0_3 = arith.constant 0 : index
    %c0_4 = arith.constant 0 : index
    %4 = vector.load %arg4[%c0_2, %c0_3, %c0_4] : memref<1x8x8xf32, #tpu.memory_space<vmem>>, vector<1x8x8xf32>
    %5 = vector.shape_cast %4 : vector<1x8x8xf32> to vector<8x8xf32>
    %c0_5 = arith.constant 0 : index
    %c0_6 = arith.constant 0 : index
    %c0_7 = arith.constant 0 : index
    %6 = vector.load %arg6[%c0_5, %c0_6, %c0_7] : memref<8x8x32xf32, #tpu.memory_space<vmem>>, vector<8x8x32xf32>
    %c1 = arith.constant 1 : index
    %c0_8 = arith.constant 0 : index
    %7 = vector.load %arg3[%c1, %c0_8] : memref<8x128xf32, #tpu.memory_space<vmem>>, vector<1x96xf32>
    %c2 = arith.constant 2 : index
    %c0_9 = arith.constant 0 : index
    %8 = vector.load %arg3[%c2, %c0_9] : memref<8x128xf32, #tpu.memory_space<vmem>>, vector<1x96xf32>
    %c3 = arith.constant 3 : index
    %c0_10 = arith.constant 0 : index
    %9 = vector.load %arg3[%c3, %c0_10] : memref<8x128xf32, #tpu.memory_space<vmem>>, vector<1x16xf32>
    %c4 = arith.constant 4 : index
    %c0_11 = arith.constant 0 : index
    %10 = vector.load %arg3[%c4, %c0_11] : memref<8x128xf32, #tpu.memory_space<vmem>>, vector<1x32xf32>
    %11 = vector.shape_cast %10 : vector<1x32xf32> to vector<1x1x32xf32>
    %c32 = arith.constant 32 : index
    %c0_12 = arith.constant 0 : index
    %12 = vector.load %arg2[%c32, %c0_12] : memref<144x128xf32, #tpu.memory_space<vmem>>, vector<32x128xf32>
    %cst = arith.constant dense<0.000000e+00> : vector<8x128xf32>
    %13 = tpu.matmul %3, %12, %cst {dimension_numbers = #tpu.dot_dimension_numbers<[1], [0], [0], [1], [0, 0, 1, 1], [], []>, precision = #tpu.contract_precision<fp32>} : vector<8x32xf32>, vector<32x128xf32>, vector<8x128xf32> -> vector<8x128xf32>
    %c0_13 = arith.constant 0 : index
    %c0_14 = arith.constant 0 : index
    %c0_15 = arith.constant 0 : index
    %14 = vector.load %arg9[%c0_13, %c0_14, %c0_15] : memref<8x8x32xf32, #tpu.memory_space<vmem>>, vector<8x8x32xf32>
    %15 = vector.extract_strided_slice %13 {offsets = [0, 0], sizes = [8, 32], strides = [1, 1]} : vector<8x128xf32> to vector<8x32xf32>
    %16 = vector.shape_cast %15 : vector<8x32xf32> to vector<8x1x32xf32>
    %17 = vector.broadcast %16 : vector<8x1x32xf32> to vector<8x8x32xf32>
    %18 = arith.addf %14, %17 : vector<8x8x32xf32>
    %19 = math.tanh %18 : vector<8x8x32xf32>
    %20 = vector.broadcast %11 : vector<1x1x32xf32> to vector<8x8x32xf32>
    %21 = arith.mulf %19, %20 : vector<8x8x32xf32>
    %cst_16 = arith.constant dense<0.000000e+00> : vector<8x8xf32>
    %22 = vector.multi_reduction <add>, %21, %cst_16 [2] : vector<8x8x32xf32> to vector<8x8xf32>
    %cst_17 = arith.constant dense<0xFF800000> : vector<8xf32>
    %23 = vector.multi_reduction <maximumf>, %22, %cst_17 [1] : vector<8x8xf32> to vector<8xf32>
    %24 = vector.shape_cast %23 : vector<8xf32> to vector<8x1xf32>
    %25 = vector.broadcast %24 : vector<8x1xf32> to vector<8x8xf32>
    %26 = arith.subf %22, %25 : vector<8x8xf32>
    %27 = math.exp %26 : vector<8x8xf32>
    %cst_18 = arith.constant dense<0.000000e+00> : vector<8xf32>
    %28 = vector.multi_reduction <add>, %27, %cst_18 [1] : vector<8x8xf32> to vector<8xf32>
    %29 = vector.shape_cast %28 : vector<8xf32> to vector<8x1xf32>
    %30 = vector.broadcast %29 : vector<8x1xf32> to vector<8x8xf32>
    %31 = arith.divf %27, %30 : vector<8x8xf32>
    %32 = vector.shape_cast %31 : vector<8x8xf32> to vector<8x1x8xf32>
    "tpu.trace_start"() <{level = 10 : i32, message = "bqs,bse->bqe"}> : () -> ()
    %cst_19 = arith.constant dense<0.000000e+00> : vector<8x1x32xf32>
    %33 = tpu.matmul %32, %6, %cst_19 {dimension_numbers = #tpu.dot_dimension_numbers<[2], [1], [1], [2], [0, 0, 0, 1, 1, 2], [0], [0]>, precision = #tpu.contract_precision<fp32>} : vector<8x1x8xf32>, vector<8x8x32xf32>, vector<8x1x32xf32> -> vector<8x1x32xf32>
    "tpu.trace_stop"() : () -> ()
    %34 = vector.shape_cast %33 : vector<8x1x32xf32> to vector<8x32xf32>
    %cst_20 = arith.constant 0.000000e+00 : f32
    %35 = vector.broadcast %cst_20 : f32 to vector<8x8xf32>
    %36 = tpu.concatenate %5, %34, %35 in 1 : vector<8x8xf32>, vector<8x32xf32>, vector<8x8xf32> -> vector<8x48xf32>
    %c64 = arith.constant 64 : index
    %c0_21 = arith.constant 0 : index
    %37 = vector.load %arg2[%c64, %c0_21] : memref<144x128xf32, #tpu.memory_space<vmem>>, vector<48x128xf32>
    %cst_22 = arith.constant dense<0.000000e+00> : vector<8x128xf32>
    %38 = tpu.matmul %36, %37, %cst_22 {dimension_numbers = #tpu.dot_dimension_numbers<[1], [0], [0], [1], [0, 0, 1, 1], [], []>, precision = #tpu.contract_precision<fp32>} : vector<8x48xf32>, vector<48x128xf32>, vector<8x128xf32> -> vector<8x128xf32>
    %39 = vector.extract_strided_slice %38 {offsets = [0, 0], sizes = [8, 96], strides = [1, 1]} : vector<8x128xf32> to vector<8x96xf32>
    %40 = vector.broadcast %7 : vector<1x96xf32> to vector<8x96xf32>
    %41 = arith.addf %39, %40 : vector<8x96xf32>
    %42 = vector.extract_strided_slice %13 {offsets = [0, 32], sizes = [8, 96], strides = [1, 1]} : vector<8x128xf32> to vector<8x96xf32>
    %43 = vector.broadcast %8 : vector<1x96xf32> to vector<8x96xf32>
    %44 = arith.addf %42, %43 : vector<8x96xf32>
    %45 = vector.extract_strided_slice %41 {offsets = [0, 0], sizes = [8, 32], strides = [1, 1]} : vector<8x96xf32> to vector<8x32xf32>
    %46 = vector.extract_strided_slice %44 {offsets = [0, 0], sizes = [8, 32], strides = [1, 1]} : vector<8x96xf32> to vector<8x32xf32>
    %47 = arith.addf %45, %46 : vector<8x32xf32>
    %48 = arith.negf %47 : vector<8x32xf32>
    %49 = math.exp %48 : vector<8x32xf32>
    %cst_23 = arith.constant 1.000000e+00 : f32
    %50 = vector.broadcast %cst_23 : f32 to vector<8x32xf32>
    %51 = arith.addf %50, %49 : vector<8x32xf32>
    %52 = arith.divf %50, %51 : vector<8x32xf32>
    %53 = vector.extract_strided_slice %41 {offsets = [0, 32], sizes = [8, 32], strides = [1, 1]} : vector<8x96xf32> to vector<8x32xf32>
    %54 = vector.extract_strided_slice %44 {offsets = [0, 32], sizes = [8, 32], strides = [1, 1]} : vector<8x96xf32> to vector<8x32xf32>
    %55 = arith.addf %53, %54 : vector<8x32xf32>
    %56 = arith.negf %55 : vector<8x32xf32>
    %57 = math.exp %56 : vector<8x32xf32>
    %cst_24 = arith.constant 1.000000e+00 : f32
    %58 = vector.broadcast %cst_24 : f32 to vector<8x32xf32>
    %59 = arith.addf %58, %57 : vector<8x32xf32>
    %60 = arith.divf %58, %59 : vector<8x32xf32>
    %61 = vector.extract_strided_slice %41 {offsets = [0, 64], sizes = [8, 32], strides = [1, 1]} : vector<8x96xf32> to vector<8x32xf32>
    %62 = vector.extract_strided_slice %44 {offsets = [0, 64], sizes = [8, 32], strides = [1, 1]} : vector<8x96xf32> to vector<8x32xf32>
    %63 = arith.mulf %52, %62 : vector<8x32xf32>
    %64 = arith.addf %61, %63 : vector<8x32xf32>
    %65 = math.tanh %64 : vector<8x32xf32>
    %cst_25 = arith.constant 1.000000e+00 : f32
    %66 = vector.broadcast %cst_25 : f32 to vector<8x32xf32>
    %67 = arith.subf %66, %60 : vector<8x32xf32>
    %68 = arith.mulf %67, %65 : vector<8x32xf32>
    %69 = arith.mulf %60, %3 : vector<8x32xf32>
    %70 = arith.addf %68, %69 : vector<8x32xf32>
    %c112 = arith.constant 112 : index
    %c0_26 = arith.constant 0 : index
    %71 = vector.load %arg2[%c112, %c0_26] : memref<144x128xf32, #tpu.memory_space<vmem>>, vector<32x128xf32>
    %cst_27 = arith.constant dense<0.000000e+00> : vector<8x128xf32>
    %72 = tpu.matmul %70, %71, %cst_27 {dimension_numbers = #tpu.dot_dimension_numbers<[1], [0], [0], [1], [0, 0, 1, 1], [], []>, precision = #tpu.contract_precision<fp32>} : vector<8x32xf32>, vector<32x128xf32>, vector<8x128xf32> -> vector<8x128xf32>
    %73 = vector.extract_strided_slice %72 {offsets = [0, 0], sizes = [8, 16], strides = [1, 1]} : vector<8x128xf32> to vector<8x16xf32>
    %74 = vector.extract_strided_slice %38 {offsets = [0, 96], sizes = [8, 16], strides = [1, 1]} : vector<8x128xf32> to vector<8x16xf32>
    %75 = arith.addf %73, %74 : vector<8x16xf32>
    %76 = vector.broadcast %9 : vector<1x16xf32> to vector<8x16xf32>
    %77 = arith.addf %75, %76 : vector<8x16xf32>
    %c0_28 = arith.constant 0 : index
    %c0_29 = arith.constant 0 : index
    %78 = vector.load %arg8[%c0_28, %c0_29] : memref<8x32xf32, #tpu.memory_space<vmem>>, vector<8x32xf32>
    tpu.vector_store %arg8[%c0_28, %c0_29], %70 {strides = array<i32>} : memref<8x32xf32, #tpu.memory_space<vmem>>, vector<8x32xf32>,
    %cst_30 = arith.constant 0.000000e+00 : f32
    %79 = vector.broadcast %cst_30 : f32 to vector<8x80xf32>
    %80 = tpu.concatenate %70, %77, %79 in 1 : vector<8x32xf32>, vector<8x16xf32>, vector<8x80xf32> -> vector<8x128xf32>
    %81 = vector.shape_cast %80 : vector<8x128xf32> to vector<1x8x128xf32>
    %c0_31 = arith.constant 0 : index
    %c0_32 = arith.constant 0 : index
    %c0_33 = arith.constant 0 : index
    %82 = vector.load %arg7[%c0_31, %c0_32, %c0_33] : memref<1x8x128xf32, #tpu.memory_space<vmem>>, vector<1x8x128xf32>
    tpu.vector_store %arg7[%c0_31, %c0_32, %c0_33], %81 {strides = array<i32>} : memref<1x8x128xf32, #tpu.memory_space<vmem>>, vector<1x8x128xf32>,
    return
  }
  func.func @transform_0(%arg0: i32, %arg1: i32) -> (i32, i32) {
    %c0_i32 = arith.constant 0 : i32
    %c0_i32_0 = arith.constant 0 : i32
    %c0_i32_1 = arith.constant 0 : i32
    return %c0_i32, %c0_i32_0 : i32, i32
  }
  func.func @transform_1(%arg0: i32, %arg1: i32) -> (i32, i32) {
    %c0_i32 = arith.constant 0 : i32
    %c0_i32_0 = arith.constant 0 : i32
    %c0_i32_1 = arith.constant 0 : i32
    return %c0_i32, %c0_i32_0 : i32, i32
  }
  func.func @transform_2(%arg0: i32, %arg1: i32) -> (i32, i32, i32) {
    %c0_i32 = arith.constant 0 : i32
    %c0_i32_0 = arith.constant 0 : i32
    return %arg1, %arg0, %c0_i32 : i32, i32, i32
  }
  func.func @transform_3(%arg0: i32, %arg1: i32) -> (i32, i32) {
    %c0_i32 = arith.constant 0 : i32
    %c0_i32_0 = arith.constant 0 : i32
    return %arg0, %c0_i32 : i32, i32
  }
  func.func @transform_4(%arg0: i32, %arg1: i32) -> (i32, i32, i32) {
    %c0_i32 = arith.constant 0 : i32
    %c0_i32_0 = arith.constant 0 : i32
    %c0_i32_1 = arith.constant 0 : i32
    return %arg0, %c0_i32, %c0_i32_0 : i32, i32, i32
  }
  func.func @transform_5(%arg0: i32, %arg1: i32) -> (i32, i32, i32) {
    %c0_i32 = arith.constant 0 : i32
    %c0_i32_0 = arith.constant 0 : i32
    return %arg1, %arg0, %c0_i32 : i32, i32, i32
  }
}

</mosaic_0001>

<llo_original>
// kernel: tpu_custom_call.1
$region0: #{tpu_custom_call.1}
  #allocation0 [shape = 'u32[]', space=smem, size = 0x4, offset = 0x4, fixed_abs, tag = 'smem constant byte address 0x4 - core index']
  #allocation1 [shape = 'u32[72,128]{1,0:T(1,128)}', space=vmem, size = 0x9000, scoped, tag = 'internal scratch']
  #allocation2 [shape = 'f32[8,32]{1,0:T(8,128)}', space=vmem, size = 0x1000, scoped, tag = 'scratch operand']
  #allocation3 [shape = 'f32[8,8,32]{2,1,0:T(8,128)}', space=vmem, size = 0x8000, scoped, tag = 'scratch operand']
  %s0 = inlined_call_operand.vmem [shape: f32[144,128], index: 0, kind: input, shape index: {}]
  %s1 = inlined_call_operand.vmem [shape: f32[8,128], index: 1, kind: input, shape index: {}]
  %s2 = inlined_call_operand.vmem [shape: f32[16,8,8], index: 2, kind: input, shape index: {}]
  %s3 = inlined_call_operand.vmem [shape: f32[8,32], index: 3, kind: input, shape index: {}]
  %s4 = inlined_call_operand.hbm [shape: f32[8,8,32], index: 4, kind: input, shape index: {}]
  %s5 = inlined_call_operand.hbm [shape: f32[16,8,128], index: 5, kind: output, shape index: {}]
  %s6 = sld [smem:[#allocation0]]
  $region61: #{tpu_custom_call.1} parent=0
    _
  %s8 = ssub.s32 1, %s6
  %s9 = scalar_select 0, %s8, %s6
  $region1: #{tpu_custom_call.1} parent=0
    #allocation4 [shape = 'u8[32768]{0}', space=vmem, size = 0x8000, scoped, tag = 'input window, operand 4, single buffered']
    #allocation5 [shape = 's32[2]{0}', space=sflag, size = 0x8, scoped, tag = 'scoped memory for tpu_custom_call.1']
    #allocation6 [shape = 's32[2]{0}', space=sflag, size = 0x8, scoped, tag = 'scoped memory for tpu_custom_call.1']
    #allocation7 [shape = 'u8[8192]{0}', space=vmem, size = 0x2000, scoped, tag = 'output window, operand 0']
    %10 = vsyncpa [#allocation5], 0
    %11 = vsyncpa [#allocation6], 0
    %s12 = scalar_lea.sflag [#allocation6], 1
    %13 = vsyncpa %s12, 0
    loop: start=0, step=1, limit=18
    $region2: #{tpu_custom_call.1} parent=1 // loop_pre_header
      _
    $region3: #{tpu_custom_call.1} parent=1 // loop_header
      %s15 = sphi 0, %s19
      %p16 = scmp.ge.s32.totalorder %s15, 18
      %s22 = sphi 0, %s34
      %s23 = sphi 0, %s30
      %s24 = sphi 0, %s22
      %s25 = sphi 0, %s23
      %s26 = sphi 0, %s24
      %s27 = sphi 0, %s25
      %s35 = sphi 0, %s35
      %s37 = sphi 0, %s35
      %s38 = sphi 0, %s37
      %s52 = sphi 0, %s38
      %s56 = sphi 0, %s56
      %s58 = sphi 0, %s56
      %s59 = sphi 0, %s58
      %s73 = sphi 0, %s59
      %s81 = sphi 0, %s83
      %s84 = sphi 0, %s81
      %s85 = sphi 0, %s84
      %s101 = sphi 0, %s85
      %s107 = sphi 0, %s109
      %s110 = sphi 0, %s107
      %s111 = sphi 0, %s110
      %s127 = sphi 0, %s111
      %s133 = sphi 0, %s135
      %s136 = sphi 0, %s133
      %s137 = sphi 0, %s136
      %s153 = sphi 0, %s137
      %s161 = sphi 0, %s163
      %s164 = sphi 0, %s161
      %s165 = sphi 0, %s164
      %s181 = sphi 0, %s165
    $region4: #{tpu_custom_call.1} parent=1 // loop_header_branch
      %18 = sbr.rel (%p16) target = $region8
    $region5: #{tpu_custom_call.1} parent=1 // loop_body
      %s20 = ssub.s32 %s15, 1
      %s21 = ssub.s32 %s15, 2
      %s28 = sadd.s32 1, %s23
      %p29 = scmp.ge.s32.totalorder %s28, 16
      %s30 = scalar_select %p29, 0, %s28
      %s31 = sadd.s32 1, %s22
      %s32 = scalar_select %p29, %s31, %s22
      %p33 = scmp.ge.s32.totalorder %s32, 1
      %s34 = scalar_select %p33, 0, %s32
      %s36 = sadd.s32 %s35, 1
      %p39 = scmp.eq.s32.totalorder %s15, 15
      %p40 = scmp.ne.s32.totalorder %s35, %s37
      %p41 = scmp.eq.s32.totalorder %s15, 0
      %p42 = por %p40, %p41
      %p43 = scmp.ne.s32.totalorder %s35, %s37
      %p44 = scmp.eq.s32.totalorder %s20, 15
      %p45 = por %p43, %p44
      %p46 = scmp.ne.s32.totalorder %s37, %s38
      %p47 = scmp.eq.s32.totalorder %s20, 0
      %p48 = por %p46, %p47
      %p49 = scmp.ne.s32.totalorder %s37, %s38
      %p50 = scmp.eq.s32.totalorder %s21, 15
      %p51 = por %p49, %p50
      %p53 = scmp.ne.s32.totalorder %s38, %s52
      %p54 = scmp.eq.s32.totalorder %s21, 0
      %p55 = por %p53, %p54
      %s57 = sadd.s32 %s56, 1
      %p60 = scmp.eq.s32.totalorder %s15, 15
      %p61 = scmp.ne.s32.totalorder %s56, %s58
      %p62 = scmp.eq.s32.totalorder %s15, 0
      %p63 = por %p61, %p62
      %p64 = scmp.ne.s32.totalorder %s56, %s58
      %p65 = scmp.eq.s32.totalorder %s20, 15
      %p66 = por %p64, %p65
      %p67 = scmp.ne.s32.totalorder %s58, %s59
      %p68 = scmp.eq.s32.totalorder %s20, 0
      %p69 = por %p67, %p68
      %p70 = scmp.ne.s32.totalorder %s58, %s59
      %p71 = scmp.eq.s32.totalorder %s21, 15
      %p72 = por %p70, %p71
      %p74 = scmp.ne.s32.totalorder %s59, %s73
      %p75 = scmp.eq.s32.totalorder %s21, 0
      %p76 = por %p74, %p75
      %s77 = ssub.s32 %s23, %s30
      %s78 = ssub.s32 %s22, %s34
      %s79 = sor.u32 %s77, %s78
      %p80 = scmp.eq.s32.totalorder %s79, 0
      %s82 = sadd.s32 %s81, 1
      %s83 = scalar_select %p80, %s81, %s82
      %p86 = pneg %p80
      %p87 = scmp.eq.s32.totalorder %s15, 15
      %p88 = por %p86, %p87
      %p89 = scmp.ne.s32.totalorder %s81, %s84
      %p90 = scmp.eq.s32.totalorder %s15, 0
      %p91 = por %p89, %p90
      %p92 = scmp.ne.s32.totalorder %s81, %s84
      %p93 = scmp.eq.s32.totalorder %s20, 15
      %p94 = por %p92, %p93
      %p95 = scmp.ne.s32.totalorder %s84, %s85
      %p96 = scmp.eq.s32.totalorder %s20, 0
      %p97 = por %p95, %p96
      %p98 = scmp.ne.s32.totalorder %s84, %s85
      %p99 = scmp.eq.s32.totalorder %s21, 15
      %p100 = por %p98, %p99
      %p102 = scmp.ne.s32.totalorder %s85, %s101
      %p103 = scmp.eq.s32.totalorder %s21, 0
      %p104 = por %p102, %p103
      %s105 = ssub.s32 %s22, %s34
      %p106 = scmp.eq.s32.totalorder %s105, 0
      %s108 = sadd.s32 %s107, 1
      %s109 = scalar_select %p106, %s107, %s108
      %p112 = pneg %p106
      %p113 = scmp.eq.s32.totalorder %s15, 15
      %p114 = por %p112, %p113
      %p115 = scmp.ne.s32.totalorder %s107, %s110
      %p116 = scmp.eq.s32.totalorder %s15, 0
      %p117 = por %p115, %p116
      %p118 = scmp.ne.s32.totalorder %s107, %s110
      %p119 = scmp.eq.s32.totalorder %s20, 15
      %p120 = por %p118, %p119
      %p121 = scmp.ne.s32.totalorder %s110, %s111
      %p122 = scmp.eq.s32.totalorder %s20, 0
      %p123 = por %p121, %p122
      %p124 = scmp.ne.s32.totalorder %s110, %s111
      %p125 = scmp.eq.s32.totalorder %s21, 15
      %p126 = por %p124, %p125
      %p128 = scmp.ne.s32.totalorder %s111, %s127
      %p129 = scmp.eq.s32.totalorder %s21, 0
      %p130 = por %p128, %p129
      %s131 = ssub.s32 %s22, %s34
      %p132 = scmp.eq.s32.totalorder %s131, 0
      %s134 = sadd.s32 %s133, 1
      %s135 = scalar_select %p132, %s133, %s134
      %p138 = pneg %p132
      %p139 = scmp.eq.s32.totalorder %s15, 15
      %p140 = por %p138, %p139
      %p141 = scmp.ne.s32.totalorder %s133, %s136
      %p142 = scmp.eq.s32.totalorder %s15, 0
      %p143 = por %p141, %p142
      %p144 = scmp.ne.s32.totalorder %s133, %s136
      %p145 = scmp.eq.s32.totalorder %s20, 15
      %p146 = por %p144, %p145
      %p147 = scmp.ne.s32.totalorder %s136, %s137
      %p148 = scmp.eq.s32.totalorder %s20, 0
      %p149 = por %p147, %p148
      %p150 = scmp.ne.s32.totalorder %s136, %s137
      %p151 = scmp.eq.s32.totalorder %s21, 15
      %p152 = por %p150, %p151
      %p154 = scmp.ne.s32.totalorder %s137, %s153
      %p155 = scmp.eq.s32.totalorder %s21, 0
      %p156 = por %p154, %p155
      %s157 = ssub.s32 %s23, %s30
      %s158 = ssub.s32 %s22, %s34
      %s159 = sor.u32 %s157, %s158
      %p160 = scmp.eq.s32.totalorder %s159, 0
      %s162 = sadd.s32 %s161, 1
      %s163 = scalar_select %p160, %s161, %s162
      %p166 = pneg %p160
      %p167 = scmp.eq.s32.totalorder %s15, 15
      %p168 = por %p166, %p167
      %p169 = scmp.ne.s32.totalorder %s161, %s164
      %p170 = scmp.eq.s32.totalorder %s15, 0
      %p171 = por %p169, %p170
      %p172 = scmp.ne.s32.totalorder %s161, %s164
      %p173 = scmp.eq.s32.totalorder %s20, 15
      %p174 = por %p172, %p173
      %p175 = scmp.ne.s32.totalorder %s164, %s165
      %p176 = scmp.eq.s32.totalorder %s20, 0
      %p177 = por %p175, %p176
      %p178 = scmp.ne.s32.totalorder %s164, %s165
      %p179 = scmp.eq.s32.totalorder %s21, 15
      %p180 = por %p178, %p179
      %p182 = scmp.ne.s32.totalorder %s165, %s181
      %p183 = scmp.eq.s32.totalorder %s21, 0
      %p184 = por %p182, %p183
      %p185 = scmp.le.s32.totalorder 1, %s15
      %p186 = scmp.lt.s32.totalorder %s15, 17
      %p187 = pnand %p185, %p186
      %p188 = pneg %p187
      // Predicated region
      $region9: #{tpu_custom_call.1} parent=5 // pred_check
        _
      $region10: #{tpu_custom_call.1} parent=5 // pred_check_branch
        %190 = sbr.rel (%p187) target = $region12
      $region11: #{tpu_custom_call.1} parent=5 // pred_region
        %s191 = ssub.s32 %s15, 1
        // Predicated region
        $region13: #{tpu_custom_call.1} parent=11 // pred_check
          %p192 = pneg %p48
        $region14: #{tpu_custom_call.1} parent=11 // pred_check_branch
          %194 = sbr.rel (%p192) target = $region16
        $region15: #{tpu_custom_call.1} parent=11 // pred_region
          _
        $region16: #{tpu_custom_call.1} parent=11 // pred_fallthru
          _
        // Predicated region
        $region17: #{tpu_custom_call.1} parent=11 // pred_check
          %p195 = pneg %p69
        $region18: #{tpu_custom_call.1} parent=11 // pred_check_branch
          %197 = sbr.rel (%p195) target = $region20
        $region19: #{tpu_custom_call.1} parent=11 // pred_region
          _
        $region20: #{tpu_custom_call.1} parent=11 // pred_fallthru
          _
        // Predicated region
        $region21: #{tpu_custom_call.1} parent=11 // pred_check
          %p198 = pneg %p123
        $region22: #{tpu_custom_call.1} parent=11 // pred_check_branch
          %200 = sbr.rel (%p198) target = $region24
        $region23: #{tpu_custom_call.1} parent=11 // pred_region
          %p201 = scmp.lt.s32.totalorder %s24, 0
          %s202 = scalar_select %p201, %s24, 0
          %s203 = smul.addr %s202, 8
          %s204 = scalar_lea.vmem %s3, %s203
        $region24: #{tpu_custom_call.1} parent=11 // pred_fallthru
          _
        // Predicated region
        $region25: #{tpu_custom_call.1} parent=11 // pred_check
          %p205 = pneg %p149
        $region26: #{tpu_custom_call.1} parent=11 // pred_check_branch
          %207 = sbr.rel (%p205) target = $region28
        $region27: #{tpu_custom_call.1} parent=11 // pred_region
          %s208 = smul.u32 8, %s24
          %210 = vsyncadd [#allocation5], 0
          %s211 = smul.addr %s208, 8
          %s212 = scalar_lea.hbm %s4, %s211
          %s213 = sshll.u32 %s212, 4
          %s214 = int_to_ptr.hbm [resolvable:$true] %s213
          %s215 = sshll.u32 [#allocation4], 4
          %s216 = int_to_ptr.vmem [resolvable:$true] %s215
          %221 = dma.hbm_to_vmem [thread:$0]  %s214, 1024, %s216, [#allocation5], 128, 128, 8
        $region28: #{tpu_custom_call.1} parent=11 // pred_fallthru
          _
      $region12: #{tpu_custom_call.1} parent=5 // pred_fallthru
        _
      %p222 = scmp.lt.s32.totalorder %s15, 16
      // Predicated region
      $region29: #{tpu_custom_call.1} parent=5 // pred_check
        %p223 = pneg %p222
      $region30: #{tpu_custom_call.1} parent=5 // pred_check_branch
        %225 = sbr.rel (%p223) target = $region32
      $region31: #{tpu_custom_call.1} parent=5 // pred_region
        // Predicated region
        $region33: #{tpu_custom_call.1} parent=31 // pred_check
          %p226 = pneg %p91
        $region34: #{tpu_custom_call.1} parent=31 // pred_check_branch
          %228 = sbr.rel (%p226) target = $region36
        $region35: #{tpu_custom_call.1} parent=31 // pred_region
          %p229 = scmp.lt.s32.totalorder %s23, 15
          %s230 = scalar_select %p229, %s23, 15
          %p231 = scmp.lt.s32.totalorder %s22, 0
          %s232 = scalar_select %p231, %s22, 0
          %s233 = sadd.s32 %s232, %s230
          %s234 = smul.addr %s233, 8
          %s235 = scalar_lea.vmem %s2, %s234
        $region36: #{tpu_custom_call.1} parent=31 // pred_fallthru
          _
      $region32: #{tpu_custom_call.1} parent=5 // pred_fallthru
        _
      %p236 = scmp.le.s32.totalorder 1, %s15
      %p237 = scmp.lt.s32.totalorder %s15, 17
      %p238 = pnand %p236, %p237
      %p239 = pneg %p238
      // Predicated region
      $region37: #{tpu_custom_call.1} parent=5 // pred_check
        _
      $region38: #{tpu_custom_call.1} parent=5 // pred_check_branch
        %241 = sbr.rel (%p238) target = $region40
      $region39: #{tpu_custom_call.1} parent=5 // pred_region
        %s242 = ssub.s32 %s15, 1
        // Predicated region
        $region41: #{tpu_custom_call.1} parent=39 // pred_check
          %p243 = pneg %p149
        $region42: #{tpu_custom_call.1} parent=39 // pred_check_branch
          %245 = sbr.rel (%p243) target = $region44
        $region43: #{tpu_custom_call.1} parent=39 // pred_region
          %247 = dma.done [#allocation5], 1024
        $region44: #{tpu_custom_call.1} parent=39 // pred_fallthru
          _
        %p248 = pneg %p48
        %p249 = pneg %p45
        %p250 = pneg %p69
        %p251 = pneg %p66
        %p252 = scmp.lt.s32.totalorder %s25, 15
        %s253 = scalar_select %p252, %s25, 15
        %p254 = scmp.lt.s32.totalorder %s24, 0
        %s255 = scalar_select %p254, %s24, 0
        %s256 = sadd.s32 %s255, %s253
        %s257 = smul.addr %s256, 8
        %s258 = scalar_lea.vmem %s2, %s257
        %p259 = pneg %p97
        %p260 = pneg %p94
        %p261 = scmp.lt.s32.totalorder %s24, 0
        %s262 = scalar_select %p261, %s24, 0
        %s263 = smul.addr %s262, 8
        %s264 = scalar_lea.vmem %s3, %s263
        %p265 = pneg %p123
        %p266 = pneg %p120
        %p267 = pneg %p149
        %p268 = pneg %p146
        %p269 = pneg %p177
        %p270 = pneg %p174
        %s271 = sand.u32 %s164, 1
        %s272 = scalar_lea.sflag [#allocation6], %s271
        %s273 = sand.u32 %s164, 1
        %s274 = smul.addr %s273, 8
        %s275 = scalar_lea.vmem [#allocation7], %s274
        %p276 = scmp.lt.s32.totalorder %s25, 15
        %s277 = scalar_select %p276, %s25, 15
        %p278 = scmp.lt.s32.totalorder %s24, 0
        %s279 = scalar_select %p278, %s24, 0
        %s280 = sadd.s32 %s279, %s277
        %s281 = smul.addr %s280, 8
        %s282 = scalar_lea.vmem %s2, %s281
        %p283 = scmp.lt.s32.totalorder %s24, 0
        %s284 = scalar_select %p283, %s24, 0
        %s285 = smul.addr %s284, 8
        %s286 = scalar_lea.vmem %s3, %s285
        %s287 = smul.u32 8, %s24
        %p288 = scmp.eq.s32.totalorder %s25, 0
        // Predicated region
        $region45: #{tpu_custom_call.1} parent=39 // pred_check
          %p289 = pneg %p288
        $region46: #{tpu_custom_call.1} parent=39 // pred_check_branch
          %291 = sbr.rel (%p289) target = $region48
        $region47: #{tpu_custom_call.1} parent=39 // pred_region
          %v292 = vld [vmem:[%s286] sm:$0xff]
          %vm293 = vcmask 261120
          %294 = vst.msk [vmem:[#allocation2] sm:$0xff] %vm293, %v292
          %v295 = vld [vmem:[#allocation4] sm:$0xff]
          %v296 = vld [vmem:[#allocation4 + $0x8] sm:$0xff]
          %v297 = vld [vmem:[#allocation4 + $0x10] sm:$0xff]
          %v298 = vld [vmem:[#allocation4 + $0x18] sm:$0xff]
          %v299 = vld [vmem:[#allocation4 + $0x20] sm:$0xff]
          %v300 = vld [vmem:[#allocation4 + $0x28] sm:$0xff]
          %v301 = vld [vmem:[#allocation4 + $0x30] sm:$0xff]
          %v302 = vld [vmem:[#allocation4 + $0x38] sm:$0xff]
          %v303 = vld [vmem:[%s0] sm:$0xff]
          %v304 = vld [vmem:[%s0 + $0x8] sm:$0xff]
          %v305 = vld [vmem:[%s0 + $0x10] sm:$0xff]
          %v306 = vld [vmem:[%s0 + $0x18] sm:$0xff]
          %v308 = vsel %vm293, %v295, 0
          %v311 = vsel %vm293, %v296, 0
          %v314 = vsel %vm293, %v297, 0
          %v317 = vsel %vm293, %v298, 0
          %v320 = vsel %vm293, %v299, 0
          %v323 = vsel %vm293, %v300, 0
          %v326 = vsel %vm293, %v301, 0
          %v329 = vsel %vm293, %v302, 0
          %331 = vmatpush.msra.mxu0 0.0
          %332 = vmatpush.msra.mxu0 0.0
          %333 = vmatpush.msra.mxu0 0.0
          %334 = vmatpush.msra.mxu0 0.0
          %335 = vmatpush.msra.mxu0 0.0
          %336 = vmatpush.msra.mxu0 0.0
          %337 = vmatpush.msra.mxu0 0.0
          %338 = vmatpush.msra.mxu0 0.0
          %339 = vmatpush.msra.mxu0 0.0
          %340 = vmatpush.msra.mxu0 0.0
          %341 = vmatpush.msra.mxu0 0.0
          %342 = vmatpush.msra.mxu0 0.0
          %v343 = vand.u32 %v306, 4294901760
          %344 = vmatpush.msra.mxu0 %v343
          %v345 = vand.u32 %v305, 4294901760
          %346 = vmatpush.msra.mxu0 %v345
          %v347 = vand.u32 %v304, 4294901760
          %348 = vmatpush.msra.mxu0 %v347
          %v349 = vand.u32 %v303, 4294901760
          %350 = vmatpush.msra.mxu0 %v349
          %v351 = vand.u32 %v308, 4294901760
          %v352 = vsub.f32 %v308, %v351
          %v353 = vand.u32 %v352, 4294901760
          %v354 = vsub.f32 %v352, %v353
          %v355 = vand.u32 %v354, 4294901760
          %356 = vmatmul.f32.gmra.mxu0 %v355
          %v357 = vpop.f32.mrf.mxu0
          %v358 = vadd.f32 0.0, %v357
          %v359 = vand.u32 %v311, 4294901760
          %v360 = vsub.f32 %v311, %v359
          %v361 = vand.u32 %v360, 4294901760
          %v362 = vsub.f32 %v360, %v361
          %v363 = vand.u32 %v362, 4294901760
          %364 = vmatmul.f32.gmra.mxu0 %v363
          %v365 = vpop.f32.mrf.mxu0
          %v366 = vadd.f32 0.0, %v365
          %v367 = vand.u32 %v314, 4294901760
          %v368 = vsub.f32 %v314, %v367
          %v369 = vand.u32 %v368, 4294901760
          %v370 = vsub.f32 %v368, %v369
          %v371 = vand.u32 %v370, 4294901760
          %372 = vmatmul.f32.gmra.mxu0 %v371
          %v373 = vpop.f32.mrf.mxu0
          %v374 = vadd.f32 0.0, %v373
          %v375 = vand.u32 %v317, 4294901760
          %v376 = vsub.f32 %v317, %v375
          %v377 = vand.u32 %v376, 4294901760
          %v378 = vsub.f32 %v376, %v377
          %v379 = vand.u32 %v378, 4294901760
          %380 = vmatmul.f32.gmra.mxu0 %v379
          %v381 = vpop.f32.mrf.mxu0
          %v382 = vadd.f32 0.0, %v381
          %v383 = vand.u32 %v320, 4294901760
          %v384 = vsub.f32 %v320, %v383
          %v385 = vand.u32 %v384, 4294901760
          %v386 = vsub.f32 %v384, %v385
          %v387 = vand.u32 %v386, 4294901760
          %388 = vmatmul.f32.gmra.mxu0 %v387
          %v389 = vpop.f32.mrf.mxu0
          %v390 = vadd.f32 0.0, %v389
          %v391 = vand.u32 %v323, 4294901760
          %v392 = vsub.f32 %v323, %v391
          %v393 = vand.u32 %v392, 4294901760
          %v394 = vsub.f32 %v392, %v393
          %v395 = vand.u32 %v394, 4294901760
          %396 = vmatmul.f32.gmra.mxu0 %v395
          %v397 = vpop.f32.mrf.mxu0
          %v398 = vadd.f32 0.0, %v397
          %v399 = vand.u32 %v326, 4294901760
          %v400 = vsub.f32 %v326, %v399
          %v401 = vand.u32 %v400, 4294901760
          %v402 = vsub.f32 %v400, %v401
          %v403 = vand.u32 %v402, 4294901760
          %404 = vmatmul.f32.gmra.mxu0 %v403
          %v405 = vpop.f32.mrf.mxu0
          %v406 = vadd.f32 0.0, %v405
          %v407 = vand.u32 %v329, 4294901760
          %v408 = vsub.f32 %v329, %v407
          %v409 = vand.u32 %v408, 4294901760
          %v410 = vsub.f32 %v408, %v409
          %v411 = vand.u32 %v410, 4294901760
          %412 = vmatmul.f32.gmra.mxu0 %v411
          %v413 = vpop.f32.mrf.mxu0
          %v414 = vadd.f32 0.0, %v413
          %415 = vdwg.mxu0
          %416 = vmatpush.msra.mxu0 0.0
          %417 = vmatpush.msra.mxu0 0.0
          %418 = vmatpush.msra.mxu0 0.0
          %419 = vmatpush.msra.mxu0 0.0
          %420 = vmatpush.msra.mxu0 0.0
          %421 = vmatpush.msra.mxu0 0.0
          %422 = vmatpush.msra.mxu0 0.0
          %423 = vmatpush.msra.mxu0 0.0
          %424 = vmatpush.msra.mxu0 0.0
          %425 = vmatpush.msra.mxu0 0.0
          %426 = vmatpush.msra.mxu0 0.0
          %427 = vmatpush.msra.mxu0 0.0
          %v428 = vand.u32 %v306, 4294901760
          %v429 = vsub.f32 %v306, %v428
          %v430 = vand.u32 %v429, 4294901760
          %v431 = vsub.f32 %v429, %v430
          %v432 = vand.u32 %v431, 4294901760
          %433 = vmatpush.msra.mxu0 %v432
          %v434 = vand.u32 %v305, 4294901760
          %v435 = vsub.f32 %v305, %v434
          %v436 = vand.u32 %v435, 4294901760
          %v437 = vsub.f32 %v435, %v436
          %v438 = vand.u32 %v437, 4294901760
          %439 = vmatpush.msra.mxu0 %v438
          %v440 = vand.u32 %v304, 4294901760
          %v441 = vsub.f32 %v304, %v440
          %v442 = vand.u32 %v441, 4294901760
          %v443 = vsub.f32 %v441, %v442
          %v444 = vand.u32 %v443, 4294901760
          %445 = vmatpush.msra.mxu0 %v444
          %v446 = vand.u32 %v303, 4294901760
          %v447 = vsub.f32 %v303, %v446
          %v448 = vand.u32 %v447, 4294901760
          %v449 = vsub.f32 %v447, %v448
          %v450 = vand.u32 %v449, 4294901760
          %451 = vmatpush.msra.mxu0 %v450
          %v452 = vand.u32 %v308, 4294901760
          %453 = vmatmul.f32.gmra.mxu0 %v452
          %v454 = vpop.f32.mrf.mxu0
          %v455 = vadd.f32 %v358, %v454
          %v456 = vand.u32 %v311, 4294901760
          %457 = vmatmul.f32.gmra.mxu0 %v456
          %v458 = vpop.f32.mrf.mxu0
          %v459 = vadd.f32 %v366, %v458
          %v460 = vand.u32 %v314, 4294901760
          %461 = vmatmul.f32.gmra.mxu0 %v460
          %v462 = vpop.f32.mrf.mxu0
          %v463 = vadd.f32 %v374, %v462
          %v464 = vand.u32 %v317, 4294901760
          %465 = vmatmul.f32.gmra.mxu0 %v464
          %v466 = vpop.f32.mrf.mxu0
          %v467 = vadd.f32 %v382, %v466
          %v468 = vand.u32 %v320, 4294901760
          %469 = vmatmul.f32.gmra.mxu0 %v468
          %v470 = vpop.f32.mrf.mxu0
          %v471 = vadd.f32 %v390, %v470
          %v472 = vand.u32 %v323, 4294901760
          %473 = vmatmul.f32.gmra.mxu0 %v472
          %v474 = vpop.f32.mrf.mxu0
          %v475 = vadd.f32 %v398, %v474
          %v476 = vand.u32 %v326, 4294901760
          %477 = vmatmul.f32.gmra.mxu0 %v476
          %v478 = vpop.f32.mrf.mxu0
          %v479 = vadd.f32 %v406, %v478
          %v480 = vand.u32 %v329, 4294901760
          %481 = vmatmul.f32.gmra.mxu0 %v480
          %v482 = vpop.f32.mrf.mxu0
          %v483 = vadd.f32 %v414, %v482
          %484 = vdwg.mxu0
          %485 = vmatpush.msra.mxu0 0.0
          %486 = vmatpush.msra.mxu0 0.0
          %487 = vmatpush.msra.mxu0 0.0
          %488 = vmatpush.msra.mxu0 0.0
          %489 = vmatpush.msra.mxu0 0.0
          %490 = vmatpush.msra.mxu0 0.0
          %491 = vmatpush.msra.mxu0 0.0
          %492 = vmatpush.msra.mxu0 0.0
          %493 = vmatpush.msra.mxu0 0.0
          %494 = vmatpush.msra.mxu0 0.0
          %495 = vmatpush.msra.mxu0 0.0
          %496 = vmatpush.msra.mxu0 0.0
          %v497 = vand.u32 %v306, 4294901760
          %v498 = vsub.f32 %v306, %v497
          %499 = vmatpush.msra.mxu0 %v498
          %v500 = vand.u32 %v305, 4294901760
          %v501 = vsub.f32 %v305, %v500
          %502 = vmatpush.msra.mxu0 %v501
          %v503 = vand.u32 %v304, 4294901760
          %v504 = vsub.f32 %v304, %v503
          %505 = vmatpush.msra.mxu0 %v504
          %v506 = vand.u32 %v303, 4294901760
          %v507 = vsub.f32 %v303, %v506
          %508 = vmatpush.msra.mxu0 %v507
          %v509 = vand.u32 %v308, 4294901760
          %v510 = vsub.f32 %v308, %v509
          %511 = vmatmul.f32.gmra.mxu0 %v510
          %v512 = vpop.f32.mrf.mxu0
          %v513 = vadd.f32 %v455, %v512
          %v514 = vand.u32 %v311, 4294901760
          %v515 = vsub.f32 %v311, %v514
          %516 = vmatmul.f32.gmra.mxu0 %v515
          %v517 = vpop.f32.mrf.mxu0
          %v518 = vadd.f32 %v459, %v517
          %v519 = vand.u32 %v314, 4294901760
          %v520 = vsub.f32 %v314, %v519
          %521 = vmatmul.f32.gmra.mxu0 %v520
          %v522 = vpop.f32.mrf.mxu0
          %v523 = vadd.f32 %v463, %v522
          %v524 = vand.u32 %v317, 4294901760
          %v525 = vsub.f32 %v317, %v524
          %526 = vmatmul.f32.gmra.mxu0 %v525
          %v527 = vpop.f32.mrf.mxu0
          %v528 = vadd.f32 %v467, %v527
          %v529 = vand.u32 %v320, 4294901760
          %v530 = vsub.f32 %v320, %v529
          %531 = vmatmul.f32.gmra.mxu0 %v530
          %v532 = vpop.f32.mrf.mxu0
          %v533 = vadd.f32 %v471, %v532
          %v534 = vand.u32 %v323, 4294901760
          %v535 = vsub.f32 %v323, %v534
          %536 = vmatmul.f32.gmra.mxu0 %v535
          %v537 = vpop.f32.mrf.mxu0
          %v538 = vadd.f32 %v475, %v537
          %v539 = vand.u32 %v326, 4294901760
          %v540 = vsub.f32 %v326, %v539
          %541 = vmatmul.f32.gmra.mxu0 %v540
          %v542 = vpop.f32.mrf.mxu0
          %v543 = vadd.f32 %v479, %v542
          %v544 = vand.u32 %v329, 4294901760
          %v545 = vsub.f32 %v329, %v544
          %546 = vmatmul.f32.gmra.mxu0 %v545
          %v547 = vpop.f32.mrf.mxu0
          %v548 = vadd.f32 %v483, %v547
          %549 = vdwg.mxu0
          %550 = vmatpush.msra.mxu0 0.0
          %551 = vmatpush.msra.mxu0 0.0
          %552 = vmatpush.msra.mxu0 0.0
          %553 = vmatpush.msra.mxu0 0.0
          %554 = vmatpush.msra.mxu0 0.0
          %555 = vmatpush.msra.mxu0 0.0
          %556 = vmatpush.msra.mxu0 0.0
          %557 = vmatpush.msra.mxu0 0.0
          %558 = vmatpush.msra.mxu0 0.0
          %559 = vmatpush.msra.mxu0 0.0
          %560 = vmatpush.msra.mxu0 0.0
          %561 = vmatpush.msra.mxu0 0.0
          %v562 = vand.u32 %v306, 4294901760
          %563 = vmatpush.msra.mxu0 %v562
          %v564 = vand.u32 %v305, 4294901760
          %565 = vmatpush.msra.mxu0 %v564
          %v566 = vand.u32 %v304, 4294901760
          %567 = vmatpush.msra.mxu0 %v566
          %v568 = vand.u32 %v303, 4294901760
          %569 = vmatpush.msra.mxu0 %v568
          %v570 = vand.u32 %v308, 4294901760
          %v571 = vsub.f32 %v308, %v570
          %v572 = vand.u32 %v571, 4294901760
          %573 = vmatmul.f32.gmra.mxu0 %v572
          %v574 = vpop.f32.mrf.mxu0
          %v575 = vadd.f32 %v513, %v574
          %v576 = vand.u32 %v311, 4294901760
          %v577 = vsub.f32 %v311, %v576
          %v578 = vand.u32 %v577, 4294901760
          %579 = vmatmul.f32.gmra.mxu0 %v578
          %v580 = vpop.f32.mrf.mxu0
          %v581 = vadd.f32 %v518, %v580
          %v582 = vand.u32 %v314, 4294901760
          %v583 = vsub.f32 %v314, %v582
          %v584 = vand.u32 %v583, 4294901760
          %585 = vmatmul.f32.gmra.mxu0 %v584
          %v586 = vpop.f32.mrf.mxu0
          %v587 = vadd.f32 %v523, %v586
          %v588 = vand.u32 %v317, 4294901760
          %v589 = vsub.f32 %v317, %v588
          %v590 = vand.u32 %v589, 4294901760
          %591 = vmatmul.f32.gmra.mxu0 %v590
          %v592 = vpop.f32.mrf.mxu0
          %v593 = vadd.f32 %v528, %v592
          %v594 = vand.u32 %v320, 4294901760
          %v595 = vsub.f32 %v320, %v594
          %v596 = vand.u32 %v595, 4294901760
          %597 = vmatmul.f32.gmra.mxu0 %v596
          %v598 = vpop.f32.mrf.mxu0
          %v599 = vadd.f32 %v533, %v598
          %v600 = vand.u32 %v323, 4294901760
          %v601 = vsub.f32 %v323, %v600
          %v602 = vand.u32 %v601, 4294901760
          %603 = vmatmul.f32.gmra.mxu0 %v602
          %v604 = vpop.f32.mrf.mxu0
          %v605 = vadd.f32 %v538, %v604
          %v606 = vand.u32 %v326, 4294901760
          %v607 = vsub.f32 %v326, %v606
          %v608 = vand.u32 %v607, 4294901760
          %609 = vmatmul.f32.gmra.mxu0 %v608
          %v610 = vpop.f32.mrf.mxu0
          %v611 = vadd.f32 %v543, %v610
          %v612 = vand.u32 %v329, 4294901760
          %v613 = vsub.f32 %v329, %v612
          %v614 = vand.u32 %v613, 4294901760
          %615 = vmatmul.f32.gmra.mxu0 %v614
          %v616 = vpop.f32.mrf.mxu0
          %v617 = vadd.f32 %v548, %v616
          %618 = vdwg.mxu0
          %619 = vmatpush.msra.mxu0 0.0
          %620 = vmatpush.msra.mxu0 0.0
          %621 = vmatpush.msra.mxu0 0.0
          %622 = vmatpush.msra.mxu0 0.0
          %623 = vmatpush.msra.mxu0 0.0
          %624 = vmatpush.msra.mxu0 0.0
          %625 = vmatpush.msra.mxu0 0.0
          %626 = vmatpush.msra.mxu0 0.0
          %627 = vmatpush.msra.mxu0 0.0
          %628 = vmatpush.msra.mxu0 0.0
          %629 = vmatpush.msra.mxu0 0.0
          %630 = vmatpush.msra.mxu0 0.0
          %v631 = vand.u32 %v306, 4294901760
          %v632 = vsub.f32 %v306, %v631
          %v633 = vand.u32 %v632, 4294901760
          %634 = vmatpush.msra.mxu0 %v633
          %v635 = vand.u32 %v305, 4294901760
          %v636 = vsub.f32 %v305, %v635
          %v637 = vand.u32 %v636, 4294901760
          %638 = vmatpush.msra.mxu0 %v637
          %v639 = vand.u32 %v304, 4294901760
          %v640 = vsub.f32 %v304, %v639
          %v641 = vand.u32 %v640, 4294901760
          %642 = vmatpush.msra.mxu0 %v641
          %v643 = vand.u32 %v303, 4294901760
          %v644 = vsub.f32 %v303, %v643
          %v645 = vand.u32 %v644, 4294901760
          %646 = vmatpush.msra.mxu0 %v645
          %v647 = vand.u32 %v308, 4294901760
          %648 = vmatmul.f32.gmra.mxu0 %v647
          %v649 = vpop.f32.mrf.mxu0
          %v650 = vadd.f32 %v575, %v649
          %v651 = vand.u32 %v311, 4294901760
          %652 = vmatmul.f32.gmra.mxu0 %v651
          %v653 = vpop.f32.mrf.mxu0
          %v654 = vadd.f32 %v581, %v653
          %v655 = vand.u32 %v314, 4294901760
          %656 = vmatmul.f32.gmra.mxu0 %v655
          %v657 = vpop.f32.mrf.mxu0
          %v658 = vadd.f32 %v587, %v657
          %v659 = vand.u32 %v317, 4294901760
          %660 = vmatmul.f32.gmra.mxu0 %v659
          %v661 = vpop.f32.mrf.mxu0
          %v662 = vadd.f32 %v593, %v661
          %v663 = vand.u32 %v320, 4294901760
          %664 = vmatmul.f32.gmra.mxu0 %v663
          %v665 = vpop.f32.mrf.mxu0
          %v666 = vadd.f32 %v599, %v665
          %v667 = vand.u32 %v323, 4294901760
          %668 = vmatmul.f32.gmra.mxu0 %v667
          %v669 = vpop.f32.mrf.mxu0
          %v670 = vadd.f32 %v605, %v669
          %v671 = vand.u32 %v326, 4294901760
          %672 = vmatmul.f32.gmra.mxu0 %v671
          %v673 = vpop.f32.mrf.mxu0
          %v674 = vadd.f32 %v611, %v673
          %v675 = vand.u32 %v329, 4294901760
          %676 = vmatmul.f32.gmra.mxu0 %v675
          %v677 = vpop.f32.mrf.mxu0
          %v678 = vadd.f32 %v617, %v677
          %679 = vdwg.mxu0
          %680 = vmatpush.msra.mxu0 0.0
          %681 = vmatpush.msra.mxu0 0.0
          %682 = vmatpush.msra.mxu0 0.0
          %683 = vmatpush.msra.mxu0 0.0
          %684 = vmatpush.msra.mxu0 0.0
          %685 = vmatpush.msra.mxu0 0.0
          %686 = vmatpush.msra.mxu0 0.0
          %687 = vmatpush.msra.mxu0 0.0
          %688 = vmatpush.msra.mxu0 0.0
          %689 = vmatpush.msra.mxu0 0.0
          %690 = vmatpush.msra.mxu0 0.0
          %691 = vmatpush.msra.mxu0 0.0
          %v692 = vand.u32 %v306, 4294901760
          %693 = vmatpush.msra.mxu0 %v692
          %v694 = vand.u32 %v305, 4294901760
          %695 = vmatpush.msra.mxu0 %v694
          %v696 = vand.u32 %v304, 4294901760
          %697 = vmatpush.msra.mxu0 %v696
          %v698 = vand.u32 %v303, 4294901760
          %699 = vmatpush.msra.mxu0 %v698
          %v700 = vand.u32 %v308, 4294901760
          %701 = vmatmul.f32.gmra.mxu0 %v700
          %v702 = vpop.f32.mrf.mxu0
          %v703 = vadd.f32 %v650, %v702
          %v704 = vand.u32 %v311, 4294901760
          %705 = vmatmul.f32.gmra.mxu0 %v704
          %v706 = vpop.f32.mrf.mxu0
          %v707 = vadd.f32 %v654, %v706
          %v708 = vand.u32 %v314, 4294901760
          %709 = vmatmul.f32.gmra.mxu0 %v708
          %v710 = vpop.f32.mrf.mxu0
          %v711 = vadd.f32 %v658, %v710
          %v712 = vand.u32 %v317, 4294901760
          %713 = vmatmul.f32.gmra.mxu0 %v712
          %v714 = vpop.f32.mrf.mxu0
          %v715 = vadd.f32 %v662, %v714
          %v716 = vand.u32 %v320, 4294901760
          %717 = vmatmul.f32.gmra.mxu0 %v716
          %v718 = vpop.f32.mrf.mxu0
          %v719 = vadd.f32 %v666, %v718
          %v720 = vand.u32 %v323, 4294901760
          %721 = vmatmul.f32.gmra.mxu0 %v720
          %v722 = vpop.f32.mrf.mxu0
          %v723 = vadd.f32 %v670, %v722
          %v724 = vand.u32 %v326, 4294901760
          %725 = vmatmul.f32.gmra.mxu0 %v724
          %v726 = vpop.f32.mrf.mxu0
          %v727 = vadd.f32 %v674, %v726
          %v728 = vand.u32 %v329, 4294901760
          %729 = vmatmul.f32.gmra.mxu0 %v728
          %v730 = vpop.f32.mrf.mxu0
          %v731 = vadd.f32 %v678, %v730
          %732 = vdwg.mxu0
          %v733 = vld [vmem:[%s1] sm:$0x1]
          %v734 = vperm.slane %v733, 0
          %v735 = vadd.f32 %v703, %v734
          %v736 = vadd.f32 %v707, %v734
          %v737 = vadd.f32 %v711, %v734
          %v738 = vadd.f32 %v715, %v734
          %v739 = vadd.f32 %v719, %v734
          %v740 = vadd.f32 %v723, %v734
          %v741 = vadd.f32 %v727, %v734
          %v742 = vadd.f32 %v731, %v734
          %743 = vst.msk [vmem:[#allocation3] sm:$0xff] %vm293, %v735
          %744 = vst.msk [vmem:[#allocation3 + $0x8] sm:$0xff] %vm293, %v736
          %745 = vst.msk [vmem:[#allocation3 + $0x10] sm:$0xff] %vm293, %v737
          %746 = vst.msk [vmem:[#allocation3 + $0x18] sm:$0xff] %vm293, %v738
          %747 = vst.msk [vmem:[#allocation3 + $0x20] sm:$0xff] %vm293, %v739
          %748 = vst.msk [vmem:[#allocation3 + $0x28] sm:$0xff] %vm293, %v740
          %749 = vst.msk [vmem:[#allocation3 + $0x30] sm:$0xff] %vm293, %v741
          %750 = vst.msk [vmem:[#allocation3 + $0x38] sm:$0xff] %vm293, %v742
        $region48: #{tpu_custom_call.1} parent=39 // pred_fallthru
          _
        %v751 = vld [vmem:[#allocation2] sm:$0xff]
        %v752 = vld [vmem:[%s282] sm:$0xff]
        %v753 = vld [vmem:[#allocation4] sm:$0xff]
        %v754 = vld [vmem:[#allocation4 + $0x8] sm:$0xff]
        %v755 = vld [vmem:[#allocation4 + $0x10] sm:$0xff]
        %v756 = vld [vmem:[#allocation4 + $0x18] sm:$0xff]
        %v757 = vld [vmem:[#allocation4 + $0x20] sm:$0xff]
        %v758 = vld [vmem:[#allocation4 + $0x28] sm:$0xff]
        %v759 = vld [vmem:[#allocation4 + $0x30] sm:$0xff]
        %v760 = vld [vmem:[#allocation4 + $0x38] sm:$0xff]
        %v761 = vld [vmem:[%s1 + $0x1] sm:$0x1]
        %v762 = vld [vmem:[%s1 + $0x2] sm:$0x1]
        %v763 = vld [vmem:[%s1 + $0x3] sm:$0x1]
        %v764 = vld [vmem:[%s1 + $0x4] sm:$0x1]
        %v765 = vld [vmem:[%s0 + $0x20] sm:$0xff]
        %v766 = vld [vmem:[%s0 + $0x28] sm:$0xff]
        %v767 = vld [vmem:[%s0 + $0x30] sm:$0xff]
        %v768 = vld [vmem:[%s0 + $0x38] sm:$0xff]
        %vm769 = vcmask 261120
        %v771 = vsel %vm769, %v751, 0
        %773 = vmatpush.msra.mxu0 0.0
        %774 = vmatpush.msra.mxu0 0.0
        %775 = vmatpush.msra.mxu0 0.0
        %776 = vmatpush.msra.mxu0 0.0
        %777 = vmatpush.msra.mxu0 0.0
        %778 = vmatpush.msra.mxu0 0.0
        %779 = vmatpush.msra.mxu0 0.0
        %780 = vmatpush.msra.mxu0 0.0
        %781 = vmatpush.msra.mxu0 0.0
        %782 = vmatpush.msra.mxu0 0.0
        %783 = vmatpush.msra.mxu0 0.0
        %784 = vmatpush.msra.mxu0 0.0
        %v785 = vand.u32 %v768, 4294901760
        %786 = vmatpush.msra.mxu0 %v785
        %v787 = vand.u32 %v767, 4294901760
        %788 = vmatpush.msra.mxu0 %v787
        %v789 = vand.u32 %v766, 4294901760
        %790 = vmatpush.msra.mxu0 %v789
        %v791 = vand.u32 %v765, 4294901760
        %792 = vmatpush.msra.mxu0 %v791
        %v793 = vand.u32 %v771, 4294901760
        %v794 = vsub.f32 %v771, %v793
        %v795 = vand.u32 %v794, 4294901760
        %v796 = vsub.f32 %v794, %v795
        %v797 = vand.u32 %v796, 4294901760
        %798 = vmatmul.f32.gmra.mxu0 %v797
        %v799 = vpop.f32.mrf.mxu0
        %v800 = vadd.f32 0.0, %v799
        %801 = vdwg.mxu0
        %802 = vmatpush.msra.mxu0 0.0
        %803 = vmatpush.msra.mxu0 0.0
        %804 = vmatpush.msra.mxu0 0.0
        %805 = vmatpush.msra.mxu0 0.0
        %806 = vmatpush.msra.mxu0 0.0
        %807 = vmatpush.msra.mxu0 0.0
        %808 = vmatpush.msra.mxu0 0.0
        %809 = vmatpush.msra.mxu0 0.0
        %810 = vmatpush.msra.mxu0 0.0
        %811 = vmatpush.msra.mxu0 0.0
        %812 = vmatpush.msra.mxu0 0.0
        %813 = vmatpush.msra.mxu0 0.0
        %v814 = vand.u32 %v768, 4294901760
        %v815 = vsub.f32 %v768, %v814
        %v816 = vand.u32 %v815, 4294901760
        %v817 = vsub.f32 %v815, %v816
        %v818 = vand.u32 %v817, 4294901760
        %819 = vmatpush.msra.mxu0 %v818
        %v820 = vand.u32 %v767, 4294901760
        %v821 = vsub.f32 %v767, %v820
        %v822 = vand.u32 %v821, 4294901760
        %v823 = vsub.f32 %v821, %v822
        %v824 = vand.u32 %v823, 4294901760
        %825 = vmatpush.msra.mxu0 %v824
        %v826 = vand.u32 %v766, 4294901760
        %v827 = vsub.f32 %v766, %v826
        %v828 = vand.u32 %v827, 4294901760
        %v829 = vsub.f32 %v827, %v828
        %v830 = vand.u32 %v829, 4294901760
        %831 = vmatpush.msra.mxu0 %v830
        %v832 = vand.u32 %v765, 4294901760
        %v833 = vsub.f32 %v765, %v832
        %v834 = vand.u32 %v833, 4294901760
        %v835 = vsub.f32 %v833, %v834
        %v836 = vand.u32 %v835, 4294901760
        %837 = vmatpush.msra.mxu0 %v836
        %v838 = vand.u32 %v771, 4294901760
        %839 = vmatmul.f32.gmra.mxu0 %v838
        %v840 = vpop.f32.mrf.mxu0
        %v841 = vadd.f32 %v800, %v840
        %842 = vdwg.mxu0
        %843 = vmatpush.msra.mxu0 0.0
        %844 = vmatpush.msra.mxu0 0.0
        %845 = vmatpush.msra.mxu0 0.0
        %846 = vmatpush.msra.mxu0 0.0
        %847 = vmatpush.msra.mxu0 0.0
        %848 = vmatpush.msra.mxu0 0.0
        %849 = vmatpush.msra.mxu0 0.0
        %850 = vmatpush.msra.mxu0 0.0
        %851 = vmatpush.msra.mxu0 0.0
        %852 = vmatpush.msra.mxu0 0.0
        %853 = vmatpush.msra.mxu0 0.0
        %854 = vmatpush.msra.mxu0 0.0
        %v855 = vand.u32 %v768, 4294901760
        %v856 = vsub.f32 %v768, %v855
        %857 = vmatpush.msra.mxu0 %v856
        %v858 = vand.u32 %v767, 4294901760
        %v859 = vsub.f32 %v767, %v858
        %860 = vmatpush.msra.mxu0 %v859
        %v861 = vand.u32 %v766, 4294901760
        %v862 = vsub.f32 %v766, %v861
        %863 = vmatpush.msra.mxu0 %v862
        %v864 = vand.u32 %v765, 4294901760
        %v865 = vsub.f32 %v765, %v864
        %866 = vmatpush.msra.mxu0 %v865
        %v867 = vand.u32 %v771, 4294901760
        %v868 = vsub.f32 %v771, %v867
        %869 = vmatmul.f32.gmra.mxu0 %v868
        %v870 = vpop.f32.mrf.mxu0
        %v871 = vadd.f32 %v841, %v870
        %872 = vdwg.mxu0
        %873 = vmatpush.msra.mxu0 0.0
        %874 = vmatpush.msra.mxu0 0.0
        %875 = vmatpush.msra.mxu0 0.0
        %876 = vmatpush.msra.mxu0 0.0
        %877 = vmatpush.msra.mxu0 0.0
        %878 = vmatpush.msra.mxu0 0.0
        %879 = vmatpush.msra.mxu0 0.0
        %880 = vmatpush.msra.mxu0 0.0
        %881 = vmatpush.msra.mxu0 0.0
        %882 = vmatpush.msra.mxu0 0.0
        %883 = vmatpush.msra.mxu0 0.0
        %884 = vmatpush.msra.mxu0 0.0
        %v885 = vand.u32 %v768, 4294901760
        %886 = vmatpush.msra.mxu0 %v885
        %v887 = vand.u32 %v767, 4294901760
        %888 = vmatpush.msra.mxu0 %v887
        %v889 = vand.u32 %v766, 4294901760
        %890 = vmatpush.msra.mxu0 %v889
        %v891 = vand.u32 %v765, 4294901760
        %892 = vmatpush.msra.mxu0 %v891
        %v893 = vand.u32 %v771, 4294901760
        %v894 = vsub.f32 %v771, %v893
        %v895 = vand.u32 %v894, 4294901760
        %896 = vmatmul.f32.gmra.mxu0 %v895
        %v897 = vpop.f32.mrf.mxu0
        %v898 = vadd.f32 %v871, %v897
        %899 = vdwg.mxu0
        %900 = vmatpush.msra.mxu0 0.0
        %901 = vmatpush.msra.mxu0 0.0
        %902 = vmatpush.msra.mxu0 0.0
        %903 = vmatpush.msra.mxu0 0.0
        %904 = vmatpush.msra.mxu0 0.0
        %905 = vmatpush.msra.mxu0 0.0
        %906 = vmatpush.msra.mxu0 0.0
        %907 = vmatpush.msra.mxu0 0.0
        %908 = vmatpush.msra.mxu0 0.0
        %909 = vmatpush.msra.mxu0 0.0
        %910 = vmatpush.msra.mxu0 0.0
        %911 = vmatpush.msra.mxu0 0.0
        %v912 = vand.u32 %v768, 4294901760
        %v913 = vsub.f32 %v768, %v912
        %v914 = vand.u32 %v913, 4294901760
        %915 = vmatpush.msra.mxu0 %v914
        %v916 = vand.u32 %v767, 4294901760
        %v917 = vsub.f32 %v767, %v916
        %v918 = vand.u32 %v917, 4294901760
        %919 = vmatpush.msra.mxu0 %v918
        %v920 = vand.u32 %v766, 4294901760
        %v921 = vsub.f32 %v766, %v920
        %v922 = vand.u32 %v921, 4294901760
        %923 = vmatpush.msra.mxu0 %v922
        %v924 = vand.u32 %v765, 4294901760
        %v925 = vsub.f32 %v765, %v924
        %v926 = vand.u32 %v925, 4294901760
        %927 = vmatpush.msra.mxu0 %v926
        %v928 = vand.u32 %v771, 4294901760
        %929 = vmatmul.f32.gmra.mxu0 %v928
        %v930 = vpop.f32.mrf.mxu0
        %v931 = vadd.f32 %v898, %v930
        %932 = vdwg.mxu0
        %933 = vmatpush.msra.mxu0 0.0
        %934 = vmatpush.msra.mxu0 0.0
        %935 = vmatpush.msra.mxu0 0.0
        %936 = vmatpush.msra.mxu0 0.0
        %937 = vmatpush.msra.mxu0 0.0
        %938 = vmatpush.msra.mxu0 0.0
        %939 = vmatpush.msra.mxu0 0.0
        %940 = vmatpush.msra.mxu0 0.0
        %941 = vmatpush.msra.mxu0 0.0
        %942 = vmatpush.msra.mxu0 0.0
        %943 = vmatpush.msra.mxu0 0.0
        %944 = vmatpush.msra.mxu0 0.0
        %v945 = vand.u32 %v768, 4294901760
        %946 = vmatpush.msra.mxu0 %v945
        %v947 = vand.u32 %v767, 4294901760
        %948 = vmatpush.msra.mxu0 %v947
        %v949 = vand.u32 %v766, 4294901760
        %950 = vmatpush.msra.mxu0 %v949
        %v951 = vand.u32 %v765, 4294901760
        %952 = vmatpush.msra.mxu0 %v951
        %v953 = vand.u32 %v771, 4294901760
        %954 = vmatmul.f32.gmra.mxu0 %v953
        %v955 = vpop.f32.mrf.mxu0
        %v956 = vadd.f32 %v931, %v955
        %957 = vdwg.mxu0
        %v958 = vld [vmem:[#allocation3] sm:$0xff]
        %v959 = vld [vmem:[#allocation3 + $0x8] sm:$0xff]
        %v960 = vld [vmem:[#allocation3 + $0x10] sm:$0xff]
        %v961 = vld [vmem:[#allocation3 + $0x18] sm:$0xff]
        %v962 = vld [vmem:[#allocation3 + $0x20] sm:$0xff]
        %v963 = vld [vmem:[#allocation3 + $0x28] sm:$0xff]
        %v964 = vld [vmem:[#allocation3 + $0x30] sm:$0xff]
        %v965 = vld [vmem:[#allocation3 + $0x38] sm:$0xff]
        %v967 = vrot.slane %v956, 1
        %v968 = vrot.slane %v956, 2
        %v969 = vrot.slane %v956, 3
        %v970 = vrot.slane %v956, 4
        %v971 = vrot.slane %v956, 5
        %v972 = vrot.slane %v956, 6
        %v973 = vrot.slane %v956, 7
        %v974 = vperm.slane %v956, 0
        %v975 = vperm.slane %v967, 0
        %v976 = vperm.slane %v968, 0
        %v977 = vperm.slane %v969, 0
        %v978 = vperm.slane %v970, 0
        %v979 = vperm.slane %v971, 0
        %v980 = vperm.slane %v972, 0
        %v981 = vperm.slane %v973, 0
        %v990 = vadd.f32 %v958, %v974
        %v991 = vadd.f32 %v959, %v975
        %v992 = vadd.f32 %v960, %v976
        %v993 = vadd.f32 %v961, %v977
        %v994 = vadd.f32 %v962, %v978
        %v995 = vadd.f32 %v963, %v979
        %v996 = vadd.f32 %v964, %v980
        %v997 = vadd.f32 %v965, %v981
        %v998 = vtanh.pop %v990
        %v999 = vtanh.pop %v991
        %v1000 = vtanh.pop %v992
        %v1001 = vtanh.pop %v993
        %v1002 = vtanh.pop %v994
        %v1003 = vtanh.pop %v995
        %v1004 = vtanh.pop %v996
        %v1005 = vtanh.pop %v997
        %v1006 = vperm.slane %v764, 0
        %v1007 = vmul.f32 %v998, %v1006
        %v1008 = vmul.f32 %v999, %v1006
        %v1009 = vmul.f32 %v1000, %v1006
        %v1010 = vmul.f32 %v1001, %v1006
        %v1011 = vmul.f32 %v1002, %v1006
        %v1012 = vmul.f32 %v1003, %v1006
        %v1013 = vmul.f32 %v1004, %v1006
        %v1014 = vmul.f32 %v1005, %v1006
        %v1015 = vsel %vm769, %v1007, 0.0
        %1016 = vadd.xlane.f32.xlu0 %v1015
        %v1017 = vpop.xlane.xlu0 %1016
        %v1018 = vsel %vm769, %v1008, 0.0
        %1019 = vadd.xlane.f32.xlu0 %v1018
        %v1020 = vpop.xlane.xlu0 %1019
        %v1021 = vsel %vm769, %v1009, 0.0
        %1022 = vadd.xlane.f32.xlu0 %v1021
        %v1023 = vpop.xlane.xlu0 %1022
        %v1024 = vsel %vm769, %v1010, 0.0
        %1025 = vadd.xlane.f32.xlu0 %v1024
        %v1026 = vpop.xlane.xlu0 %1025
        %v1027 = vsel %vm769, %v1011, 0.0
        %1028 = vadd.xlane.f32.xlu0 %v1027
        %v1029 = vpop.xlane.xlu0 %1028
        %v1030 = vsel %vm769, %v1012, 0.0
        %1031 = vadd.xlane.f32.xlu0 %v1030
        %v1032 = vpop.xlane.xlu0 %1031
        %v1033 = vsel %vm769, %v1013, 0.0
        %1034 = vadd.xlane.f32.xlu0 %v1033
        %v1035 = vpop.xlane.xlu0 %1034
        %v1036 = vsel %vm769, %v1014, 0.0
        %1037 = vadd.xlane.f32.xlu0 %v1036
        %v1038 = vpop.xlane.xlu0 %1037
        %v1047 = vlaneseq
        %v1048 = vand.u32 %v1047, 127
        %v1049 = vperm.slane %v1017, %v1048
        %v1050 = vperm.slane %v1020, %v1048
        %v1051 = vperm.slane %v1023, %v1048
        %v1052 = vperm.slane %v1026, %v1048
        %v1053 = vperm.slane %v1029, %v1048
        %v1054 = vperm.slane %v1032, %v1048
        %v1055 = vperm.slane %v1035, %v1048
        %v1056 = vperm.slane %v1038, %v1048
        %vm1057 = vcmask 1041409
        %v1058 = vsel %vm1057, %v1050, %v1049
        %vm1059 = vcmask 1042434
        %v1060 = vsel %vm1059, %v1051, %v1058
        %vm1061 = vcmask 1043459
        %v1062 = vsel %vm1061, %v1052, %v1060
        %vm1063 = vcmask 1044484
        %v1064 = vsel %vm1063, %v1053, %v1062
        %vm1065 = vcmask 1045509
        %v1066 = vsel %vm1065, %v1054, %v1064
        %vm1067 = vcmask 1046534
        %v1068 = vsel %vm1067, %v1055, %v1066
        %vm1069 = vcmask 1047559
        %v1070 = vsel %vm1069, %v1056, %v1068
        %vm1072 = vcmask 64512
        %v1073 = vsel %vm1072, %v1070, -inf
        %1074 = vmax.xlane.f32.xlu0 %v1073
        %v1075 = vpop.xlane.xlu0 %1074
        %v1077 = vperm.slane %v1075, 0
        %v1078 = vperm.slane %v1075, 1
        %v1079 = vperm.slane %v1075, 2
        %v1080 = vperm.slane %v1075, 3
        %v1081 = vperm.slane %v1075, 4
        %v1082 = vperm.slane %v1075, 5
        %v1083 = vperm.slane %v1075, 6
        %v1084 = vperm.slane %v1075, 7
        %v1093 = vsub.f32 %v1017, %v1077
        %v1094 = vsub.f32 %v1020, %v1078
        %v1095 = vsub.f32 %v1023, %v1079
        %v1096 = vsub.f32 %v1026, %v1080
        %v1097 = vsub.f32 %v1029, %v1081
        %v1098 = vsub.f32 %v1032, %v1082
        %v1099 = vsub.f32 %v1035, %v1083
        %v1100 = vsub.f32 %v1038, %v1084
        %v1101 = vmul.f32 %v1093, 1.442695
        %v1102 = vpow.pop %v1101
        %v1103 = vmul.f32 %v1094, 1.442695
        %v1104 = vpow.pop %v1103
        %v1105 = vmul.f32 %v1095, 1.442695
        %v1106 = vpow.pop %v1105
        %v1107 = vmul.f32 %v1096, 1.442695
        %v1108 = vpow.pop %v1107
        %v1109 = vmul.f32 %v1097, 1.442695
        %v1110 = vpow.pop %v1109
        %v1111 = vmul.f32 %v1098, 1.442695
        %v1112 = vpow.pop %v1111
        %v1113 = vmul.f32 %v1099, 1.442695
        %v1114 = vpow.pop %v1113
        %v1115 = vmul.f32 %v1100, 1.442695
        %v1116 = vpow.pop %v1115
        %1125 = vset.pattern.permute.xlu0 0
        %1126 = vperm.xlu0 %1125, %v1102
        %v1127 = vpop.permute.xlu0 %1126
        %1128 = vset.pattern.permute.xlu0 0
        %1129 = vperm.xlu0 %1128, %v1104
        %v1130 = vpop.permute.xlu0 %1129
        %1131 = vset.pattern.permute.xlu0 0
        %1132 = vperm.xlu0 %1131, %v1106
        %v1133 = vpop.permute.xlu0 %1132
        %1134 = vset.pattern.permute.xlu0 0
        %1135 = vperm.xlu0 %1134, %v1108
        %v1136 = vpop.permute.xlu0 %1135
        %1137 = vset.pattern.permute.xlu0 0
        %1138 = vperm.xlu0 %1137, %v1110
        %v1139 = vpop.permute.xlu0 %1138
        %1140 = vset.pattern.permute.xlu0 0
        %1141 = vperm.xlu0 %1140, %v1112
        %v1142 = vpop.permute.xlu0 %1141
        %1143 = vset.pattern.permute.xlu0 0
        %1144 = vperm.xlu0 %1143, %v1114
        %v1145 = vpop.permute.xlu0 %1144
        %1146 = vset.pattern.permute.xlu0 0
        %1147 = vperm.xlu0 %1146, %v1116
        %v1148 = vpop.permute.xlu0 %1147
        %v1149 = vperm.slane %v1127, %v1048
        %v1150 = vperm.slane %v1130, %v1048
        %v1151 = vperm.slane %v1133, %v1048
        %v1152 = vperm.slane %v1136, %v1048
        %v1153 = vperm.slane %v1139, %v1048
        %v1154 = vperm.slane %v1142, %v1048
        %v1155 = vperm.slane %v1145, %v1048
        %v1156 = vperm.slane %v1148, %v1048
        %v1157 = vsel %vm1057, %v1150, %v1149
        %v1158 = vsel %vm1059, %v1151, %v1157
        %v1159 = vsel %vm1061, %v1152, %v1158
        %v1160 = vsel %vm1063, %v1153, %v1159
        %v1161 = vsel %vm1065, %v1154, %v1160
        %v1162 = vsel %vm1067, %v1155, %v1161
        %v1163 = vsel %vm1069, %v1156, %v1162
        %v1165 = vsel %vm1072, %v1163, 0.0
        %1166 = vadd.xlane.f32.xlu0 %v1165
        %v1167 = vpop.xlane.xlu0 %1166
        %v1169 = vperm.slane %v1167, 0
        %v1170 = vperm.slane %v1167, 1
        %v1171 = vperm.slane %v1167, 2
        %v1172 = vperm.slane %v1167, 3
        %v1173 = vperm.slane %v1167, 4
        %v1174 = vperm.slane %v1167, 5
        %v1175 = vperm.slane %v1167, 6
        %v1176 = vperm.slane %v1167, 7
        %v1185 = vrcp.pop %v1169
        %v1186 = vmul.f32 %v1169, %v1185
        %v1187 = vsub.f32 1.0, %v1186
        %v1188 = vmul.f32 %v1185, %v1187
        %v1189 = vadd.f32 %v1185, %v1188
        %vm1190 = vweird.f32 %v1169
        %vm1191 = vweird.f32 %v1185
        %vm1192 = vmor %vm1190, %vm1191
        %v1193 = vsel %vm1192, %v1185, %v1189
        %v1194 = vand.u32 2147483647, %v1169
        %vm1195 = vcmp.eq.f32.partialorder %v1194, 8.507059e+37
        %v1196 = vand.u32 %v1169, 2147483648
        %v1197 = vor.u32 1.1754944e-38, %v1196
        %v1198 = vsel %vm1195, %v1197, %v1193
        %v1199 = vmul.f32 %v1102, %v1198
        %v1200 = vrcp.pop %v1170
        %v1201 = vmul.f32 %v1170, %v1200
        %v1202 = vsub.f32 1.0, %v1201
        %v1203 = vmul.f32 %v1200, %v1202
        %v1204 = vadd.f32 %v1200, %v1203
        %vm1205 = vweird.f32 %v1170
        %vm1206 = vweird.f32 %v1200
        %vm1207 = vmor %vm1205, %vm1206
        %v1208 = vsel %vm1207, %v1200, %v1204
        %v1209 = vand.u32 2147483647, %v1170
        %vm1210 = vcmp.eq.f32.partialorder %v1209, 8.507059e+37
        %v1211 = vand.u32 %v1170, 2147483648
        %v1212 = vor.u32 1.1754944e-38, %v1211
        %v1213 = vsel %vm1210, %v1212, %v1208
        %v1214 = vmul.f32 %v1104, %v1213
        %v1215 = vrcp.pop %v1171
        %v1216 = vmul.f32 %v1171, %v1215
        %v1217 = vsub.f32 1.0, %v1216
        %v1218 = vmul.f32 %v1215, %v1217
        %v1219 = vadd.f32 %v1215, %v1218
        %vm1220 = vweird.f32 %v1171
        %vm1221 = vweird.f32 %v1215
        %vm1222 = vmor %vm1220, %vm1221
        %v1223 = vsel %vm1222, %v1215, %v1219
        %v1224 = vand.u32 2147483647, %v1171
        %vm1225 = vcmp.eq.f32.partialorder %v1224, 8.507059e+37
        %v1226 = vand.u32 %v1171, 2147483648
        %v1227 = vor.u32 1.1754944e-38, %v1226
        %v1228 = vsel %vm1225, %v1227, %v1223
        %v1229 = vmul.f32 %v1106, %v1228
        %v1230 = vrcp.pop %v1172
        %v1231 = vmul.f32 %v1172, %v1230
        %v1232 = vsub.f32 1.0, %v1231
        %v1233 = vmul.f32 %v1230, %v1232
        %v1234 = vadd.f32 %v1230, %v1233
        %vm1235 = vweird.f32 %v1172
        %vm1236 = vweird.f32 %v1230
        %vm1237 = vmor %vm1235, %vm1236
        %v1238 = vsel %vm1237, %v1230, %v1234
        %v1239 = vand.u32 2147483647, %v1172
        %vm1240 = vcmp.eq.f32.partialorder %v1239, 8.507059e+37
        %v1241 = vand.u32 %v1172, 2147483648
        %v1242 = vor.u32 1.1754944e-38, %v1241
        %v1243 = vsel %vm1240, %v1242, %v1238
        %v1244 = vmul.f32 %v1108, %v1243
        %v1245 = vrcp.pop %v1173
        %v1246 = vmul.f32 %v1173, %v1245
        %v1247 = vsub.f32 1.0, %v1246
        %v1248 = vmul.f32 %v1245, %v1247
        %v1249 = vadd.f32 %v1245, %v1248
        %vm1250 = vweird.f32 %v1173
        %vm1251 = vweird.f32 %v1245
        %vm1252 = vmor %vm1250, %vm1251
        %v1253 = vsel %vm1252, %v1245, %v1249
        %v1254 = vand.u32 2147483647, %v1173
        %vm1255 = vcmp.eq.f32.partialorder %v1254, 8.507059e+37
        %v1256 = vand.u32 %v1173, 2147483648
        %v1257 = vor.u32 1.1754944e-38, %v1256
        %v1258 = vsel %vm1255, %v1257, %v1253
        %v1259 = vmul.f32 %v1110, %v1258
        %v1260 = vrcp.pop %v1174
        %v1261 = vmul.f32 %v1174, %v1260
        %v1262 = vsub.f32 1.0, %v1261
        %v1263 = vmul.f32 %v1260, %v1262
        %v1264 = vadd.f32 %v1260, %v1263
        %vm1265 = vweird.f32 %v1174
        %vm1266 = vweird.f32 %v1260
        %vm1267 = vmor %vm1265, %vm1266
        %v1268 = vsel %vm1267, %v1260, %v1264
        %v1269 = vand.u32 2147483647, %v1174
        %vm1270 = vcmp.eq.f32.partialorder %v1269, 8.507059e+37
        %v1271 = vand.u32 %v1174, 2147483648
        %v1272 = vor.u32 1.1754944e-38, %v1271
        %v1273 = vsel %vm1270, %v1272, %v1268
        %v1274 = vmul.f32 %v1112, %v1273
        %v1275 = vrcp.pop %v1175
        %v1276 = vmul.f32 %v1175, %v1275
        %v1277 = vsub.f32 1.0, %v1276
        %v1278 = vmul.f32 %v1275, %v1277
        %v1279 = vadd.f32 %v1275, %v1278
        %vm1280 = vweird.f32 %v1175
        %vm1281 = vweird.f32 %v1275
        %vm1282 = vmor %vm1280, %vm1281
        %v1283 = vsel %vm1282, %v1275, %v1279
        %v1284 = vand.u32 2147483647, %v1175
        %vm1285 = vcmp.eq.f32.partialorder %v1284, 8.507059e+37
        %v1286 = vand.u32 %v1175, 2147483648
        %v1287 = vor.u32 1.1754944e-38, %v1286
        %v1288 = vsel %vm1285, %v1287, %v1283
        %v1289 = vmul.f32 %v1114, %v1288
        %v1290 = vrcp.pop %v1176
        %v1291 = vmul.f32 %v1176, %v1290
        %v1292 = vsub.f32 1.0, %v1291
        %v1293 = vmul.f32 %v1290, %v1292
        %v1294 = vadd.f32 %v1290, %v1293
        %vm1295 = vweird.f32 %v1176
        %vm1296 = vweird.f32 %v1290
        %vm1297 = vmor %vm1295, %vm1296
        %v1298 = vsel %vm1297, %v1290, %v1294
        %v1299 = vand.u32 2147483647, %v1176
        %vm1300 = vcmp.eq.f32.partialorder %v1299, 8.507059e+37
        %v1301 = vand.u32 %v1176, 2147483648
        %v1302 = vor.u32 1.1754944e-38, %v1301
        %v1303 = vsel %vm1300, %v1302, %v1298
        %v1304 = vmul.f32 %v1116, %v1303
        %1306 = vset.pattern.permute.xlu0 0
        %1307 = vperm.xlu0 %1306, %v1199
        %v1308 = vpop.permute.xlu0 %1307
        %v1309 = vperm.slane %v1308, %v1048
        %v1310 = vsel %vm1072, %v1309, 0
        %1312 = vmatpush.msra.mxu0 0.0
        %1313 = vmatpush.msra.mxu0 0.0
        %1314 = vmatpush.msra.mxu0 0.0
        %1315 = vmatpush.msra.mxu0 0.0
        %1316 = vmatpush.msra.mxu0 0.0
        %1317 = vmatpush.msra.mxu0 0.0
        %1318 = vmatpush.msra.mxu0 0.0
        %1319 = vmatpush.msra.mxu0 0.0
        %1320 = vmatpush.msra.mxu0 0.0
        %1321 = vmatpush.msra.mxu0 0.0
        %1322 = vmatpush.msra.mxu0 0.0
        %1323 = vmatpush.msra.mxu0 0.0
        %1324 = vmatpush.msra.mxu0 0.0
        %1325 = vmatpush.msra.mxu0 0.0
        %1326 = vmatpush.msra.mxu0 0.0
        %v1327 = vand.u32 %v753, 4294901760
        %1328 = vmatpush.msra.mxu0 %v1327
        %v1329 = vand.u32 %v1310, 4294901760
        %v1330 = vsub.f32 %v1310, %v1329
        %v1331 = vand.u32 %v1330, 4294901760
        %v1332 = vsub.f32 %v1330, %v1331
        %v1333 = vand.u32 %v1332, 4294901760
        %1334 = vmatmul.f32.gmra.mxu0 %v1333
        %v1335 = vpop.f32.mrf.mxu0
        %v1336 = vadd.f32 0.0, %v1335
        %1337 = vdwg.mxu0
        %1338 = vmatpush.msra.mxu0 0.0
        %1339 = vmatpush.msra.mxu0 0.0
        %1340 = vmatpush.msra.mxu0 0.0
        %1341 = vmatpush.msra.mxu0 0.0
        %1342 = vmatpush.msra.mxu0 0.0
        %1343 = vmatpush.msra.mxu0 0.0
        %1344 = vmatpush.msra.mxu0 0.0
        %1345 = vmatpush.msra.mxu0 0.0
        %1346 = vmatpush.msra.mxu0 0.0
        %1347 = vmatpush.msra.mxu0 0.0
        %1348 = vmatpush.msra.mxu0 0.0
        %1349 = vmatpush.msra.mxu0 0.0
        %1350 = vmatpush.msra.mxu0 0.0
        %1351 = vmatpush.msra.mxu0 0.0
        %1352 = vmatpush.msra.mxu0 0.0
        %v1353 = vand.u32 %v753, 4294901760
        %v1354 = vsub.f32 %v753, %v1353
        %v1355 = vand.u32 %v1354, 4294901760
        %v1356 = vsub.f32 %v1354, %v1355
        %v1357 = vand.u32 %v1356, 4294901760
        %1358 = vmatpush.msra.mxu0 %v1357
        %v1359 = vand.u32 %v1310, 4294901760
        %1360 = vmatmul.f32.gmra.mxu0 %v1359
        %v1361 = vpop.f32.mrf.mxu0
        %v1362 = vadd.f32 %v1336, %v1361
        %1363 = vdwg.mxu0
        %1364 = vmatpush.msra.mxu0 0.0
        %1365 = vmatpush.msra.mxu0 0.0
        %1366 = vmatpush.msra.mxu0 0.0
        %1367 = vmatpush.msra.mxu0 0.0
        %1368 = vmatpush.msra.mxu0 0.0
        %1369 = vmatpush.msra.mxu0 0.0
        %1370 = vmatpush.msra.mxu0 0.0
        %1371 = vmatpush.msra.mxu0 0.0
        %1372 = vmatpush.msra.mxu0 0.0
        %1373 = vmatpush.msra.mxu0 0.0
        %1374 = vmatpush.msra.mxu0 0.0
        %1375 = vmatpush.msra.mxu0 0.0
        %1376 = vmatpush.msra.mxu0 0.0
        %1377 = vmatpush.msra.mxu0 0.0
        %1378 = vmatpush.msra.mxu0 0.0
        %v1379 = vand.u32 %v753, 4294901760
        %v1380 = vsub.f32 %v753, %v1379
        %1381 = vmatpush.msra.mxu0 %v1380
        %v1382 = vand.u32 %v1310, 4294901760
        %v1383 = vsub.f32 %v1310, %v1382
        %1384 = vmatmul.f32.gmra.mxu0 %v1383
        %v1385 = vpop.f32.mrf.mxu0
        %v1386 = vadd.f32 %v1362, %v1385
        %1387 = vdwg.mxu0
        %1388 = vmatpush.msra.mxu0 0.0
        %1389 = vmatpush.msra.mxu0 0.0
        %1390 = vmatpush.msra.mxu0 0.0
        %1391 = vmatpush.msra.mxu0 0.0
        %1392 = vmatpush.msra.mxu0 0.0
        %1393 = vmatpush.msra.mxu0 0.0
        %1394 = vmatpush.msra.mxu0 0.0
        %1395 = vmatpush.msra.mxu0 0.0
        %1396 = vmatpush.msra.mxu0 0.0
        %1397 = vmatpush.msra.mxu0 0.0
        %1398 = vmatpush.msra.mxu0 0.0
        %1399 = vmatpush.msra.mxu0 0.0
        %1400 = vmatpush.msra.mxu0 0.0
        %1401 = vmatpush.msra.mxu0 0.0
        %1402 = vmatpush.msra.mxu0 0.0
        %v1403 = vand.u32 %v753, 4294901760
        %1404 = vmatpush.msra.mxu0 %v1403
        %v1405 = vand.u32 %v1310, 4294901760
        %v1406 = vsub.f32 %v1310, %v1405
        %v1407 = vand.u32 %v1406, 4294901760
        %1408 = vmatmul.f32.gmra.mxu0 %v1407
        %v1409 = vpop.f32.mrf.mxu0
        %v1410 = vadd.f32 %v1386, %v1409
        %1411 = vdwg.mxu0
        %1412 = vmatpush.msra.mxu0 0.0
        %1413 = vmatpush.msra.mxu0 0.0
        %1414 = vmatpush.msra.mxu0 0.0
        %1415 = vmatpush.msra.mxu0 0.0
        %1416 = vmatpush.msra.mxu0 0.0
        %1417 = vmatpush.msra.mxu0 0.0
        %1418 = vmatpush.msra.mxu0 0.0
        %1419 = vmatpush.msra.mxu0 0.0
        %1420 = vmatpush.msra.mxu0 0.0
        %1421 = vmatpush.msra.mxu0 0.0
        %1422 = vmatpush.msra.mxu0 0.0
        %1423 = vmatpush.msra.mxu0 0.0
        %1424 = vmatpush.msra.mxu0 0.0
        %1425 = vmatpush.msra.mxu0 0.0
        %1426 = vmatpush.msra.mxu0 0.0
        %v1427 = vand.u32 %v753, 4294901760
        %v1428 = vsub.f32 %v753, %v1427
        %v1429 = vand.u32 %v1428, 4294901760
        %1430 = vmatpush.msra.mxu0 %v1429
        %v1431 = vand.u32 %v1310, 4294901760
        %1432 = vmatmul.f32.gmra.mxu0 %v1431
        %v1433 = vpop.f32.mrf.mxu0
        %v1434 = vadd.f32 %v1410, %v1433
        %1435 = vdwg.mxu0
        %1436 = vmatpush.msra.mxu0 0.0
        %1437 = vmatpush.msra.mxu0 0.0
        %1438 = vmatpush.msra.mxu0 0.0
        %1439 = vmatpush.msra.mxu0 0.0
        %1440 = vmatpush.msra.mxu0 0.0
        %1441 = vmatpush.msra.mxu0 0.0
        %1442 = vmatpush.msra.mxu0 0.0
        %1443 = vmatpush.msra.mxu0 0.0
        %1444 = vmatpush.msra.mxu0 0.0
        %1445 = vmatpush.msra.mxu0 0.0
        %1446 = vmatpush.msra.mxu0 0.0
        %1447 = vmatpush.msra.mxu0 0.0
        %1448 = vmatpush.msra.mxu0 0.0
        %1449 = vmatpush.msra.mxu0 0.0
        %1450 = vmatpush.msra.mxu0 0.0
        %v1451 = vand.u32 %v753, 4294901760
        %1452 = vmatpush.msra.mxu0 %v1451
        %v1453 = vand.u32 %v1310, 4294901760
        %1454 = vmatmul.f32.gmra.mxu0 %v1453
        %v1455 = vpop.f32.mrf.mxu0
        %v1456 = vadd.f32 %v1434, %v1455
        %1457 = vdwg.mxu0
        %1459 = vset.pattern.permute.xlu0 0
        %1460 = vperm.xlu0 %1459, %v1214
        %v1461 = vpop.permute.xlu0 %1460
        %v1462 = vperm.slane %v1461, %v1048
        %v1463 = vsel %vm1072, %v1462, 0
        %1465 = vmatpush.msra.mxu0 0.0
        %1466 = vmatpush.msra.mxu0 0.0
        %1467 = vmatpush.msra.mxu0 0.0
        %1468 = vmatpush.msra.mxu0 0.0
        %1469 = vmatpush.msra.mxu0 0.0
        %1470 = vmatpush.msra.mxu0 0.0
        %1471 = vmatpush.msra.mxu0 0.0
        %1472 = vmatpush.msra.mxu0 0.0
        %1473 = vmatpush.msra.mxu0 0.0
        %1474 = vmatpush.msra.mxu0 0.0
        %1475 = vmatpush.msra.mxu0 0.0
        %1476 = vmatpush.msra.mxu0 0.0
        %1477 = vmatpush.msra.mxu0 0.0
        %1478 = vmatpush.msra.mxu0 0.0
        %1479 = vmatpush.msra.mxu0 0.0
        %v1480 = vand.u32 %v754, 4294901760
        %1481 = vmatpush.msra.mxu0 %v1480
        %v1482 = vand.u32 %v1463, 4294901760
        %v1483 = vsub.f32 %v1463, %v1482
        %v1484 = vand.u32 %v1483, 4294901760
        %v1485 = vsub.f32 %v1483, %v1484
        %v1486 = vand.u32 %v1485, 4294901760
        %1487 = vmatmul.f32.gmra.mxu0 %v1486
        %v1488 = vpop.f32.mrf.mxu0
        %v1489 = vadd.f32 0.0, %v1488
        %1490 = vdwg.mxu0
        %1491 = vmatpush.msra.mxu0 0.0
        %1492 = vmatpush.msra.mxu0 0.0
        %1493 = vmatpush.msra.mxu0 0.0
        %1494 = vmatpush.msra.mxu0 0.0
        %1495 = vmatpush.msra.mxu0 0.0
        %1496 = vmatpush.msra.mxu0 0.0
        %1497 = vmatpush.msra.mxu0 0.0
        %1498 = vmatpush.msra.mxu0 0.0
        %1499 = vmatpush.msra.mxu0 0.0
        %1500 = vmatpush.msra.mxu0 0.0
        %1501 = vmatpush.msra.mxu0 0.0
        %1502 = vmatpush.msra.mxu0 0.0
        %1503 = vmatpush.msra.mxu0 0.0
        %1504 = vmatpush.msra.mxu0 0.0
        %1505 = vmatpush.msra.mxu0 0.0
        %v1506 = vand.u32 %v754, 4294901760
        %v1507 = vsub.f32 %v754, %v1506
        %v1508 = vand.u32 %v1507, 4294901760
        %v1509 = vsub.f32 %v1507, %v1508
        %v1510 = vand.u32 %v1509, 4294901760
        %1511 = vmatpush.msra.mxu0 %v1510
        %v1512 = vand.u32 %v1463, 4294901760
        %1513 = vmatmul.f32.gmra.mxu0 %v1512
        %v1514 = vpop.f32.mrf.mxu0
        %v1515 = vadd.f32 %v1489, %v1514
        %1516 = vdwg.mxu0
        %1517 = vmatpush.msra.mxu0 0.0
        %1518 = vmatpush.msra.mxu0 0.0
        %1519 = vmatpush.msra.mxu0 0.0
        %1520 = vmatpush.msra.mxu0 0.0
        %1521 = vmatpush.msra.mxu0 0.0
        %1522 = vmatpush.msra.mxu0 0.0
        %1523 = vmatpush.msra.mxu0 0.0
        %1524 = vmatpush.msra.mxu0 0.0
        %1525 = vmatpush.msra.mxu0 0.0
        %1526 = vmatpush.msra.mxu0 0.0
        %1527 = vmatpush.msra.mxu0 0.0
        %1528 = vmatpush.msra.mxu0 0.0
        %1529 = vmatpush.msra.mxu0 0.0
        %1530 = vmatpush.msra.mxu0 0.0
        %1531 = vmatpush.msra.mxu0 0.0
        %v1532 = vand.u32 %v754, 4294901760
        %v1533 = vsub.f32 %v754, %v1532
        %1534 = vmatpush.msra.mxu0 %v1533
        %v1535 = vand.u32 %v1463, 4294901760
        %v1536 = vsub.f32 %v1463, %v1535
        %1537 = vmatmul.f32.gmra.mxu0 %v1536
        %v1538 = vpop.f32.mrf.mxu0
        %v1539 = vadd.f32 %v1515, %v1538
        %1540 = vdwg.mxu0
        %1541 = vmatpush.msra.mxu0 0.0
        %1542 = vmatpush.msra.mxu0 0.0
        %1543 = vmatpush.msra.mxu0 0.0
        %1544 = vmatpush.msra.mxu0 0.0
        %1545 = vmatpush.msra.mxu0 0.0
        %1546 = vmatpush.msra.mxu0 0.0
        %1547 = vmatpush.msra.mxu0 0.0
        %1548 = vmatpush.msra.mxu0 0.0
        %1549 = vmatpush.msra.mxu0 0.0
        %1550 = vmatpush.msra.mxu0 0.0
        %1551 = vmatpush.msra.mxu0 0.0
        %1552 = vmatpush.msra.mxu0 0.0
        %1553 = vmatpush.msra.mxu0 0.0
        %1554 = vmatpush.msra.mxu0 0.0
        %1555 = vmatpush.msra.mxu0 0.0
        %v1556 = vand.u32 %v754, 4294901760
        %1557 = vmatpush.msra.mxu0 %v1556
        %v1558 = vand.u32 %v1463, 4294901760
        %v1559 = vsub.f32 %v1463, %v1558
        %v1560 = vand.u32 %v1559, 4294901760
        %1561 = vmatmul.f32.gmra.mxu0 %v1560
        %v1562 = vpop.f32.mrf.mxu0
        %v1563 = vadd.f32 %v1539, %v1562
        %1564 = vdwg.mxu0
        %1565 = vmatpush.msra.mxu0 0.0
        %1566 = vmatpush.msra.mxu0 0.0
        %1567 = vmatpush.msra.mxu0 0.0
        %1568 = vmatpush.msra.mxu0 0.0
        %1569 = vmatpush.msra.mxu0 0.0
        %1570 = vmatpush.msra.mxu0 0.0
        %1571 = vmatpush.msra.mxu0 0.0
        %1572 = vmatpush.msra.mxu0 0.0
        %1573 = vmatpush.msra.mxu0 0.0
        %1574 = vmatpush.msra.mxu0 0.0
        %1575 = vmatpush.msra.mxu0 0.0
        %1576 = vmatpush.msra.mxu0 0.0
        %1577 = vmatpush.msra.mxu0 0.0
        %1578 = vmatpush.msra.mxu0 0.0
        %1579 = vmatpush.msra.mxu0 0.0
        %v1580 = vand.u32 %v754, 4294901760
        %v1581 = vsub.f32 %v754, %v1580
        %v1582 = vand.u32 %v1581, 4294901760
        %1583 = vmatpush.msra.mxu0 %v1582
        %v1584 = vand.u32 %v1463, 4294901760
        %1585 = vmatmul.f32.gmra.mxu0 %v1584
        %v1586 = vpop.f32.mrf.mxu0
        %v1587 = vadd.f32 %v1563, %v1586
        %1588 = vdwg.mxu0
        %1589 = vmatpush.msra.mxu0 0.0
        %1590 = vmatpush.msra.mxu0 0.0
        %1591 = vmatpush.msra.mxu0 0.0
        %1592 = vmatpush.msra.mxu0 0.0
        %1593 = vmatpush.msra.mxu0 0.0
        %1594 = vmatpush.msra.mxu0 0.0
        %1595 = vmatpush.msra.mxu0 0.0
        %1596 = vmatpush.msra.mxu0 0.0
        %1597 = vmatpush.msra.mxu0 0.0
        %1598 = vmatpush.msra.mxu0 0.0
        %1599 = vmatpush.msra.mxu0 0.0
        %1600 = vmatpush.msra.mxu0 0.0
        %1601 = vmatpush.msra.mxu0 0.0
        %1602 = vmatpush.msra.mxu0 0.0
        %1603 = vmatpush.msra.mxu0 0.0
        %v1604 = vand.u32 %v754, 4294901760
        %1605 = vmatpush.msra.mxu0 %v1604
        %v1606 = vand.u32 %v1463, 4294901760
        %1607 = vmatmul.f32.gmra.mxu0 %v1606
        %v1608 = vpop.f32.mrf.mxu0
        %v1609 = vadd.f32 %v1587, %v1608
        %1610 = vdwg.mxu0
        %1612 = vset.pattern.permute.xlu0 0
        %1613 = vperm.xlu0 %1612, %v1229
        %v1614 = vpop.permute.xlu0 %1613
        %v1615 = vperm.slane %v1614, %v1048
        %v1616 = vsel %vm1072, %v1615, 0
        %1618 = vmatpush.msra.mxu0 0.0
        %1619 = vmatpush.msra.mxu0 0.0
        %1620 = vmatpush.msra.mxu0 0.0
        %1621 = vmatpush.msra.mxu0 0.0
        %1622 = vmatpush.msra.mxu0 0.0
        %1623 = vmatpush.msra.mxu0 0.0
        %1624 = vmatpush.msra.mxu0 0.0
        %1625 = vmatpush.msra.mxu0 0.0
        %1626 = vmatpush.msra.mxu0 0.0
        %1627 = vmatpush.msra.mxu0 0.0
        %1628 = vmatpush.msra.mxu0 0.0
        %1629 = vmatpush.msra.mxu0 0.0
        %1630 = vmatpush.msra.mxu0 0.0
        %1631 = vmatpush.msra.mxu0 0.0
        %1632 = vmatpush.msra.mxu0 0.0
        %v1633 = vand.u32 %v755, 4294901760
        %1634 = vmatpush.msra.mxu0 %v1633
        %v1635 = vand.u32 %v1616, 4294901760
        %v1636 = vsub.f32 %v1616, %v1635
        %v1637 = vand.u32 %v1636, 4294901760
        %v1638 = vsub.f32 %v1636, %v1637
        %v1639 = vand.u32 %v1638, 4294901760
        %1640 = vmatmul.f32.gmra.mxu0 %v1639
        %v1641 = vpop.f32.mrf.mxu0
        %v1642 = vadd.f32 0.0, %v1641
        %1643 = vdwg.mxu0
        %1644 = vmatpush.msra.mxu0 0.0
        %1645 = vmatpush.msra.mxu0 0.0
        %1646 = vmatpush.msra.mxu0 0.0
        %1647 = vmatpush.msra.mxu0 0.0
        %1648 = vmatpush.msra.mxu0 0.0
        %1649 = vmatpush.msra.mxu0 0.0
        %1650 = vmatpush.msra.mxu0 0.0
        %1651 = vmatpush.msra.mxu0 0.0
        %1652 = vmatpush.msra.mxu0 0.0
        %1653 = vmatpush.msra.mxu0 0.0
        %1654 = vmatpush.msra.mxu0 0.0
        %1655 = vmatpush.msra.mxu0 0.0
        %1656 = vmatpush.msra.mxu0 0.0
        %1657 = vmatpush.msra.mxu0 0.0
        %1658 = vmatpush.msra.mxu0 0.0
        %v1659 = vand.u32 %v755, 4294901760
        %v1660 = vsub.f32 %v755, %v1659
        %v1661 = vand.u32 %v1660, 4294901760
        %v1662 = vsub.f32 %v1660, %v1661
        %v1663 = vand.u32 %v1662, 4294901760
        %1664 = vmatpush.msra.mxu0 %v1663
        %v1665 = vand.u32 %v1616, 4294901760
        %1666 = vmatmul.f32.gmra.mxu0 %v1665
        %v1667 = vpop.f32.mrf.mxu0
        %v1668 = vadd.f32 %v1642, %v1667
        %1669 = vdwg.mxu0
        %1670 = vmatpush.msra.mxu0 0.0
        %1671 = vmatpush.msra.mxu0 0.0
        %1672 = vmatpush.msra.mxu0 0.0
        %1673 = vmatpush.msra.mxu0 0.0
        %1674 = vmatpush.msra.mxu0 0.0
        %1675 = vmatpush.msra.mxu0 0.0
        %1676 = vmatpush.msra.mxu0 0.0
        %1677 = vmatpush.msra.mxu0 0.0
        %1678 = vmatpush.msra.mxu0 0.0
        %1679 = vmatpush.msra.mxu0 0.0
        %1680 = vmatpush.msra.mxu0 0.0
        %1681 = vmatpush.msra.mxu0 0.0
        %1682 = vmatpush.msra.mxu0 0.0
        %1683 = vmatpush.msra.mxu0 0.0
        %1684 = vmatpush.msra.mxu0 0.0
        %v1685 = vand.u32 %v755, 4294901760
        %v1686 = vsub.f32 %v755, %v1685
        %1687 = vmatpush.msra.mxu0 %v1686
        %v1688 = vand.u32 %v1616, 4294901760
        %v1689 = vsub.f32 %v1616, %v1688
        %1690 = vmatmul.f32.gmra.mxu0 %v1689
        %v1691 = vpop.f32.mrf.mxu0
        %v1692 = vadd.f32 %v1668, %v1691
        %1693 = vdwg.mxu0
        %1694 = vmatpush.msra.mxu0 0.0
        %1695 = vmatpush.msra.mxu0 0.0
        %1696 = vmatpush.msra.mxu0 0.0
        %1697 = vmatpush.msra.mxu0 0.0
        %1698 = vmatpush.msra.mxu0 0.0
        %1699 = vmatpush.msra.mxu0 0.0
        %1700 = vmatpush.msra.mxu0 0.0
        %1701 = vmatpush.msra.mxu0 0.0
        %1702 = vmatpush.msra.mxu0 0.0
        %1703 = vmatpush.msra.mxu0 0.0
        %1704 = vmatpush.msra.mxu0 0.0
        %1705 = vmatpush.msra.mxu0 0.0
        %1706 = vmatpush.msra.mxu0 0.0
        %1707 = vmatpush.msra.mxu0 0.0
        %1708 = vmatpush.msra.mxu0 0.0
        %v1709 = vand.u32 %v755, 4294901760
        %1710 = vmatpush.msra.mxu0 %v1709
        %v1711 = vand.u32 %v1616, 4294901760
        %v1712 = vsub.f32 %v1616, %v1711
        %v1713 = vand.u32 %v1712, 4294901760
        %1714 = vmatmul.f32.gmra.mxu0 %v1713
        %v1715 = vpop.f32.mrf.mxu0
        %v1716 = vadd.f32 %v1692, %v1715
        %1717 = vdwg.mxu0
        %1718 = vmatpush.msra.mxu0 0.0
        %1719 = vmatpush.msra.mxu0 0.0
        %1720 = vmatpush.msra.mxu0 0.0
        %1721 = vmatpush.msra.mxu0 0.0
        %1722 = vmatpush.msra.mxu0 0.0
        %1723 = vmatpush.msra.mxu0 0.0
        %1724 = vmatpush.msra.mxu0 0.0
        %1725 = vmatpush.msra.mxu0 0.0
        %1726 = vmatpush.msra.mxu0 0.0
        %1727 = vmatpush.msra.mxu0 0.0
        %1728 = vmatpush.msra.mxu0 0.0
        %1729 = vmatpush.msra.mxu0 0.0
        %1730 = vmatpush.msra.mxu0 0.0
        %1731 = vmatpush.msra.mxu0 0.0
        %1732 = vmatpush.msra.mxu0 0.0
        %v1733 = vand.u32 %v755, 4294901760
        %v1734 = vsub.f32 %v755, %v1733
        %v1735 = vand.u32 %v1734, 4294901760
        %1736 = vmatpush.msra.mxu0 %v1735
        %v1737 = vand.u32 %v1616, 4294901760
        %1738 = vmatmul.f32.gmra.mxu0 %v1737
        %v1739 = vpop.f32.mrf.mxu0
        %v1740 = vadd.f32 %v1716, %v1739
        %1741 = vdwg.mxu0
        %1742 = vmatpush.msra.mxu0 0.0
        %1743 = vmatpush.msra.mxu0 0.0
        %1744 = vmatpush.msra.mxu0 0.0
        %1745 = vmatpush.msra.mxu0 0.0
        %1746 = vmatpush.msra.mxu0 0.0
        %1747 = vmatpush.msra.mxu0 0.0
        %1748 = vmatpush.msra.mxu0 0.0
        %1749 = vmatpush.msra.mxu0 0.0
        %1750 = vmatpush.msra.mxu0 0.0
        %1751 = vmatpush.msra.mxu0 0.0
        %1752 = vmatpush.msra.mxu0 0.0
        %1753 = vmatpush.msra.mxu0 0.0
        %1754 = vmatpush.msra.mxu0 0.0
        %1755 = vmatpush.msra.mxu0 0.0
        %1756 = vmatpush.msra.mxu0 0.0
        %v1757 = vand.u32 %v755, 4294901760
        %1758 = vmatpush.msra.mxu0 %v1757
        %v1759 = vand.u32 %v1616, 4294901760
        %1760 = vmatmul.f32.gmra.mxu0 %v1759
        %v1761 = vpop.f32.mrf.mxu0
        %v1762 = vadd.f32 %v1740, %v1761
        %1763 = vdwg.mxu0
        %1765 = vset.pattern.permute.xlu0 0
        %1766 = vperm.xlu0 %1765, %v1244
        %v1767 = vpop.permute.xlu0 %1766
        %v1768 = vperm.slane %v1767, %v1048
        %v1769 = vsel %vm1072, %v1768, 0
        %1771 = vmatpush.msra.mxu0 0.0
        %1772 = vmatpush.msra.mxu0 0.0
        %1773 = vmatpush.msra.mxu0 0.0
        %1774 = vmatpush.msra.mxu0 0.0
        %1775 = vmatpush.msra.mxu0 0.0
        %1776 = vmatpush.msra.mxu0 0.0
        %1777 = vmatpush.msra.mxu0 0.0
        %1778 = vmatpush.msra.mxu0 0.0
        %1779 = vmatpush.msra.mxu0 0.0
        %1780 = vmatpush.msra.mxu0 0.0
        %1781 = vmatpush.msra.mxu0 0.0
        %1782 = vmatpush.msra.mxu0 0.0
        %1783 = vmatpush.msra.mxu0 0.0
        %1784 = vmatpush.msra.mxu0 0.0
        %1785 = vmatpush.msra.mxu0 0.0
        %v1786 = vand.u32 %v756, 4294901760
        %1787 = vmatpush.msra.mxu0 %v1786
        %v1788 = vand.u32 %v1769, 4294901760
        %v1789 = vsub.f32 %v1769, %v1788
        %v1790 = vand.u32 %v1789, 4294901760
        %v1791 = vsub.f32 %v1789, %v1790
        %v1792 = vand.u32 %v1791, 4294901760
        %1793 = vmatmul.f32.gmra.mxu0 %v1792
        %v1794 = vpop.f32.mrf.mxu0
        %v1795 = vadd.f32 0.0, %v1794
        %1796 = vdwg.mxu0
        %1797 = vmatpush.msra.mxu0 0.0
        %1798 = vmatpush.msra.mxu0 0.0
        %1799 = vmatpush.msra.mxu0 0.0
        %1800 = vmatpush.msra.mxu0 0.0
        %1801 = vmatpush.msra.mxu0 0.0
        %1802 = vmatpush.msra.mxu0 0.0
        %1803 = vmatpush.msra.mxu0 0.0
        %1804 = vmatpush.msra.mxu0 0.0
        %1805 = vmatpush.msra.mxu0 0.0
        %1806 = vmatpush.msra.mxu0 0.0
        %1807 = vmatpush.msra.mxu0 0.0
        %1808 = vmatpush.msra.mxu0 0.0
        %1809 = vmatpush.msra.mxu0 0.0
        %1810 = vmatpush.msra.mxu0 0.0
        %1811 = vmatpush.msra.mxu0 0.0
        %v1812 = vand.u32 %v756, 4294901760
        %v1813 = vsub.f32 %v756, %v1812
        %v1814 = vand.u32 %v1813, 4294901760
        %v1815 = vsub.f32 %v1813, %v1814
        %v1816 = vand.u32 %v1815, 4294901760
        %1817 = vmatpush.msra.mxu0 %v1816
        %v1818 = vand.u32 %v1769, 4294901760
        %1819 = vmatmul.f32.gmra.mxu0 %v1818
        %v1820 = vpop.f32.mrf.mxu0
        %v1821 = vadd.f32 %v1795, %v1820
        %1822 = vdwg.mxu0
        %1823 = vmatpush.msra.mxu0 0.0
        %1824 = vmatpush.msra.mxu0 0.0
        %1825 = vmatpush.msra.mxu0 0.0
        %1826 = vmatpush.msra.mxu0 0.0
        %1827 = vmatpush.msra.mxu0 0.0
        %1828 = vmatpush.msra.mxu0 0.0
        %1829 = vmatpush.msra.mxu0 0.0
        %1830 = vmatpush.msra.mxu0 0.0
        %1831 = vmatpush.msra.mxu0 0.0
        %1832 = vmatpush.msra.mxu0 0.0
        %1833 = vmatpush.msra.mxu0 0.0
        %1834 = vmatpush.msra.mxu0 0.0
        %1835 = vmatpush.msra.mxu0 0.0
        %1836 = vmatpush.msra.mxu0 0.0
        %1837 = vmatpush.msra.mxu0 0.0
        %v1838 = vand.u32 %v756, 4294901760
        %v1839 = vsub.f32 %v756, %v1838
        %1840 = vmatpush.msra.mxu0 %v1839
        %v1841 = vand.u32 %v1769, 4294901760
        %v1842 = vsub.f32 %v1769, %v1841
        %1843 = vmatmul.f32.gmra.mxu0 %v1842
        %v1844 = vpop.f32.mrf.mxu0
        %v1845 = vadd.f32 %v1821, %v1844
        %1846 = vdwg.mxu0
        %1847 = vmatpush.msra.mxu0 0.0
        %1848 = vmatpush.msra.mxu0 0.0
        %1849 = vmatpush.msra.mxu0 0.0
        %1850 = vmatpush.msra.mxu0 0.0
        %1851 = vmatpush.msra.mxu0 0.0
        %1852 = vmatpush.msra.mxu0 0.0
        %1853 = vmatpush.msra.mxu0 0.0
        %1854 = vmatpush.msra.mxu0 0.0
        %1855 = vmatpush.msra.mxu0 0.0
        %1856 = vmatpush.msra.mxu0 0.0
        %1857 = vmatpush.msra.mxu0 0.0
        %1858 = vmatpush.msra.mxu0 0.0
        %1859 = vmatpush.msra.mxu0 0.0
        %1860 = vmatpush.msra.mxu0 0.0
        %1861 = vmatpush.msra.mxu0 0.0
        %v1862 = vand.u32 %v756, 4294901760
        %1863 = vmatpush.msra.mxu0 %v1862
        %v1864 = vand.u32 %v1769, 4294901760
        %v1865 = vsub.f32 %v1769, %v1864
        %v1866 = vand.u32 %v1865, 4294901760
        %1867 = vmatmul.f32.gmra.mxu0 %v1866
        %v1868 = vpop.f32.mrf.mxu0
        %v1869 = vadd.f32 %v1845, %v1868
        %1870 = vdwg.mxu0
        %1871 = vmatpush.msra.mxu0 0.0
        %1872 = vmatpush.msra.mxu0 0.0
        %1873 = vmatpush.msra.mxu0 0.0
        %1874 = vmatpush.msra.mxu0 0.0
        %1875 = vmatpush.msra.mxu0 0.0
        %1876 = vmatpush.msra.mxu0 0.0
        %1877 = vmatpush.msra.mxu0 0.0
        %1878 = vmatpush.msra.mxu0 0.0
        %1879 = vmatpush.msra.mxu0 0.0
        %1880 = vmatpush.msra.mxu0 0.0
        %1881 = vmatpush.msra.mxu0 0.0
        %1882 = vmatpush.msra.mxu0 0.0
        %1883 = vmatpush.msra.mxu0 0.0
        %1884 = vmatpush.msra.mxu0 0.0
        %1885 = vmatpush.msra.mxu0 0.0
        %v1886 = vand.u32 %v756, 4294901760
        %v1887 = vsub.f32 %v756, %v1886
        %v1888 = vand.u32 %v1887, 4294901760
        %1889 = vmatpush.msra.mxu0 %v1888
        %v1890 = vand.u32 %v1769, 4294901760
        %1891 = vmatmul.f32.gmra.mxu0 %v1890
        %v1892 = vpop.f32.mrf.mxu0
        %v1893 = vadd.f32 %v1869, %v1892
        %1894 = vdwg.mxu0
        %1895 = vmatpush.msra.mxu0 0.0
        %1896 = vmatpush.msra.mxu0 0.0
        %1897 = vmatpush.msra.mxu0 0.0
        %1898 = vmatpush.msra.mxu0 0.0
        %1899 = vmatpush.msra.mxu0 0.0
        %1900 = vmatpush.msra.mxu0 0.0
        %1901 = vmatpush.msra.mxu0 0.0
        %1902 = vmatpush.msra.mxu0 0.0
        %1903 = vmatpush.msra.mxu0 0.0
        %1904 = vmatpush.msra.mxu0 0.0
        %1905 = vmatpush.msra.mxu0 0.0
        %1906 = vmatpush.msra.mxu0 0.0
        %1907 = vmatpush.msra.mxu0 0.0
        %1908 = vmatpush.msra.mxu0 0.0
        %1909 = vmatpush.msra.mxu0 0.0
        %v1910 = vand.u32 %v756, 4294901760
        %1911 = vmatpush.msra.mxu0 %v1910
        %v1912 = vand.u32 %v1769, 4294901760
        %1913 = vmatmul.f32.gmra.mxu0 %v1912
        %v1914 = vpop.f32.mrf.mxu0
        %v1915 = vadd.f32 %v1893, %v1914
        %1916 = vdwg.mxu0
        %1918 = vset.pattern.permute.xlu0 0
        %1919 = vperm.xlu0 %1918, %v1259
        %v1920 = vpop.permute.xlu0 %1919
        %v1921 = vperm.slane %v1920, %v1048
        %v1922 = vsel %vm1072, %v1921, 0
        %1924 = vmatpush.msra.mxu0 0.0
        %1925 = vmatpush.msra.mxu0 0.0
        %1926 = vmatpush.msra.mxu0 0.0
        %1927 = vmatpush.msra.mxu0 0.0
        %1928 = vmatpush.msra.mxu0 0.0
        %1929 = vmatpush.msra.mxu0 0.0
        %1930 = vmatpush.msra.mxu0 0.0
        %1931 = vmatpush.msra.mxu0 0.0
        %1932 = vmatpush.msra.mxu0 0.0
        %1933 = vmatpush.msra.mxu0 0.0
        %1934 = vmatpush.msra.mxu0 0.0
        %1935 = vmatpush.msra.mxu0 0.0
        %1936 = vmatpush.msra.mxu0 0.0
        %1937 = vmatpush.msra.mxu0 0.0
        %1938 = vmatpush.msra.mxu0 0.0
        %v1939 = vand.u32 %v757, 4294901760
        %1940 = vmatpush.msra.mxu0 %v1939
        %v1941 = vand.u32 %v1922, 4294901760
        %v1942 = vsub.f32 %v1922, %v1941
        %v1943 = vand.u32 %v1942, 4294901760
        %v1944 = vsub.f32 %v1942, %v1943
        %v1945 = vand.u32 %v1944, 4294901760
        %1946 = vmatmul.f32.gmra.mxu0 %v1945
        %v1947 = vpop.f32.mrf.mxu0
        %v1948 = vadd.f32 0.0, %v1947
        %1949 = vdwg.mxu0
        %1950 = vmatpush.msra.mxu0 0.0
        %1951 = vmatpush.msra.mxu0 0.0
        %1952 = vmatpush.msra.mxu0 0.0
        %1953 = vmatpush.msra.mxu0 0.0
        %1954 = vmatpush.msra.mxu0 0.0
        %1955 = vmatpush.msra.mxu0 0.0
        %1956 = vmatpush.msra.mxu0 0.0
        %1957 = vmatpush.msra.mxu0 0.0
        %1958 = vmatpush.msra.mxu0 0.0
        %1959 = vmatpush.msra.mxu0 0.0
        %1960 = vmatpush.msra.mxu0 0.0
        %1961 = vmatpush.msra.mxu0 0.0
        %1962 = vmatpush.msra.mxu0 0.0
        %1963 = vmatpush.msra.mxu0 0.0
        %1964 = vmatpush.msra.mxu0 0.0
        %v1965 = vand.u32 %v757, 4294901760
        %v1966 = vsub.f32 %v757, %v1965
        %v1967 = vand.u32 %v1966, 4294901760
        %v1968 = vsub.f32 %v1966, %v1967
        %v1969 = vand.u32 %v1968, 4294901760
        %1970 = vmatpush.msra.mxu0 %v1969
        %v1971 = vand.u32 %v1922, 4294901760
        %1972 = vmatmul.f32.gmra.mxu0 %v1971
        %v1973 = vpop.f32.mrf.mxu0
        %v1974 = vadd.f32 %v1948, %v1973
        %1975 = vdwg.mxu0
        %1976 = vmatpush.msra.mxu0 0.0
        %1977 = vmatpush.msra.mxu0 0.0
        %1978 = vmatpush.msra.mxu0 0.0
        %1979 = vmatpush.msra.mxu0 0.0
        %1980 = vmatpush.msra.mxu0 0.0
        %1981 = vmatpush.msra.mxu0 0.0
        %1982 = vmatpush.msra.mxu0 0.0
        %1983 = vmatpush.msra.mxu0 0.0
        %1984 = vmatpush.msra.mxu0 0.0
        %1985 = vmatpush.msra.mxu0 0.0
        %1986 = vmatpush.msra.mxu0 0.0
        %1987 = vmatpush.msra.mxu0 0.0
        %1988 = vmatpush.msra.mxu0 0.0
        %1989 = vmatpush.msra.mxu0 0.0
        %1990 = vmatpush.msra.mxu0 0.0
        %v1991 = vand.u32 %v757, 4294901760
        %v1992 = vsub.f32 %v757, %v1991
        %1993 = vmatpush.msra.mxu0 %v1992
        %v1994 = vand.u32 %v1922, 4294901760
        %v1995 = vsub.f32 %v1922, %v1994
        %1996 = vmatmul.f32.gmra.mxu0 %v1995
        %v1997 = vpop.f32.mrf.mxu0
        %v1998 = vadd.f32 %v1974, %v1997
        %1999 = vdwg.mxu0
        %2000 = vmatpush.msra.mxu0 0.0
        %2001 = vmatpush.msra.mxu0 0.0
        %2002 = vmatpush.msra.mxu0 0.0
        %2003 = vmatpush.msra.mxu0 0.0
        %2004 = vmatpush.msra.mxu0 0.0
        %2005 = vmatpush.msra.mxu0 0.0
        %2006 = vmatpush.msra.mxu0 0.0
        %2007 = vmatpush.msra.mxu0 0.0
        %2008 = vmatpush.msra.mxu0 0.0
        %2009 = vmatpush.msra.mxu0 0.0
        %2010 = vmatpush.msra.mxu0 0.0
        %2011 = vmatpush.msra.mxu0 0.0
        %2012 = vmatpush.msra.mxu0 0.0
        %2013 = vmatpush.msra.mxu0 0.0
        %2014 = vmatpush.msra.mxu0 0.0
        %v2015 = vand.u32 %v757, 4294901760
        %2016 = vmatpush.msra.mxu0 %v2015
        %v2017 = vand.u32 %v1922, 4294901760
        %v2018 = vsub.f32 %v1922, %v2017
        %v2019 = vand.u32 %v2018, 4294901760
        %2020 = vmatmul.f32.gmra.mxu0 %v2019
        %v2021 = vpop.f32.mrf.mxu0
        %v2022 = vadd.f32 %v1998, %v2021
        %2023 = vdwg.mxu0
        %2024 = vmatpush.msra.mxu0 0.0
        %2025 = vmatpush.msra.mxu0 0.0
        %2026 = vmatpush.msra.mxu0 0.0
        %2027 = vmatpush.msra.mxu0 0.0
        %2028 = vmatpush.msra.mxu0 0.0
        %2029 = vmatpush.msra.mxu0 0.0
        %2030 = vmatpush.msra.mxu0 0.0
        %2031 = vmatpush.msra.mxu0 0.0
        %2032 = vmatpush.msra.mxu0 0.0
        %2033 = vmatpush.msra.mxu0 0.0
        %2034 = vmatpush.msra.mxu0 0.0
        %2035 = vmatpush.msra.mxu0 0.0
        %2036 = vmatpush.msra.mxu0 0.0
        %2037 = vmatpush.msra.mxu0 0.0
        %2038 = vmatpush.msra.mxu0 0.0
        %v2039 = vand.u32 %v757, 4294901760
        %v2040 = vsub.f32 %v757, %v2039
        %v2041 = vand.u32 %v2040, 4294901760
        %2042 = vmatpush.msra.mxu0 %v2041
        %v2043 = vand.u32 %v1922, 4294901760
        %2044 = vmatmul.f32.gmra.mxu0 %v2043
        %v2045 = vpop.f32.mrf.mxu0
        %v2046 = vadd.f32 %v2022, %v2045
        %2047 = vdwg.mxu0
        %2048 = vmatpush.msra.mxu0 0.0
        %2049 = vmatpush.msra.mxu0 0.0
        %2050 = vmatpush.msra.mxu0 0.0
        %2051 = vmatpush.msra.mxu0 0.0
        %2052 = vmatpush.msra.mxu0 0.0
        %2053 = vmatpush.msra.mxu0 0.0
        %2054 = vmatpush.msra.mxu0 0.0
        %2055 = vmatpush.msra.mxu0 0.0
        %2056 = vmatpush.msra.mxu0 0.0
        %2057 = vmatpush.msra.mxu0 0.0
        %2058 = vmatpush.msra.mxu0 0.0
        %2059 = vmatpush.msra.mxu0 0.0
        %2060 = vmatpush.msra.mxu0 0.0
        %2061 = vmatpush.msra.mxu0 0.0
        %2062 = vmatpush.msra.mxu0 0.0
        %v2063 = vand.u32 %v757, 4294901760
        %2064 = vmatpush.msra.mxu0 %v2063
        %v2065 = vand.u32 %v1922, 4294901760
        %2066 = vmatmul.f32.gmra.mxu0 %v2065
        %v2067 = vpop.f32.mrf.mxu0
        %v2068 = vadd.f32 %v2046, %v2067
        %2069 = vdwg.mxu0
        %2071 = vset.pattern.permute.xlu0 0
        %2072 = vperm.xlu0 %2071, %v1274
        %v2073 = vpop.permute.xlu0 %2072
        %v2074 = vperm.slane %v2073, %v1048
        %v2075 = vsel %vm1072, %v2074, 0
        %2077 = vmatpush.msra.mxu0 0.0
        %2078 = vmatpush.msra.mxu0 0.0
        %2079 = vmatpush.msra.mxu0 0.0
        %2080 = vmatpush.msra.mxu0 0.0
        %2081 = vmatpush.msra.mxu0 0.0
        %2082 = vmatpush.msra.mxu0 0.0
        %2083 = vmatpush.msra.mxu0 0.0
        %2084 = vmatpush.msra.mxu0 0.0
        %2085 = vmatpush.msra.mxu0 0.0
        %2086 = vmatpush.msra.mxu0 0.0
        %2087 = vmatpush.msra.mxu0 0.0
        %2088 = vmatpush.msra.mxu0 0.0
        %2089 = vmatpush.msra.mxu0 0.0
        %2090 = vmatpush.msra.mxu0 0.0
        %2091 = vmatpush.msra.mxu0 0.0
        %v2092 = vand.u32 %v758, 4294901760
        %2093 = vmatpush.msra.mxu0 %v2092
        %v2094 = vand.u32 %v2075, 4294901760
        %v2095 = vsub.f32 %v2075, %v2094
        %v2096 = vand.u32 %v2095, 4294901760
        %v2097 = vsub.f32 %v2095, %v2096
        %v2098 = vand.u32 %v2097, 4294901760
        %2099 = vmatmul.f32.gmra.mxu0 %v2098
        %v2100 = vpop.f32.mrf.mxu0
        %v2101 = vadd.f32 0.0, %v2100
        %2102 = vdwg.mxu0
        %2103 = vmatpush.msra.mxu0 0.0
        %2104 = vmatpush.msra.mxu0 0.0
        %2105 = vmatpush.msra.mxu0 0.0
        %2106 = vmatpush.msra.mxu0 0.0
        %2107 = vmatpush.msra.mxu0 0.0
        %2108 = vmatpush.msra.mxu0 0.0
        %2109 = vmatpush.msra.mxu0 0.0
        %2110 = vmatpush.msra.mxu0 0.0
        %2111 = vmatpush.msra.mxu0 0.0
        %2112 = vmatpush.msra.mxu0 0.0
        %2113 = vmatpush.msra.mxu0 0.0
        %2114 = vmatpush.msra.mxu0 0.0
        %2115 = vmatpush.msra.mxu0 0.0
        %2116 = vmatpush.msra.mxu0 0.0
        %2117 = vmatpush.msra.mxu0 0.0
        %v2118 = vand.u32 %v758, 4294901760
        %v2119 = vsub.f32 %v758, %v2118
        %v2120 = vand.u32 %v2119, 4294901760
        %v2121 = vsub.f32 %v2119, %v2120
        %v2122 = vand.u32 %v2121, 4294901760
        %2123 = vmatpush.msra.mxu0 %v2122
        %v2124 = vand.u32 %v2075, 4294901760
        %2125 = vmatmul.f32.gmra.mxu0 %v2124
        %v2126 = vpop.f32.mrf.mxu0
        %v2127 = vadd.f32 %v2101, %v2126
        %2128 = vdwg.mxu0
        %2129 = vmatpush.msra.mxu0 0.0
        %2130 = vmatpush.msra.mxu0 0.0
        %2131 = vmatpush.msra.mxu0 0.0
        %2132 = vmatpush.msra.mxu0 0.0
        %2133 = vmatpush.msra.mxu0 0.0
        %2134 = vmatpush.msra.mxu0 0.0
        %2135 = vmatpush.msra.mxu0 0.0
        %2136 = vmatpush.msra.mxu0 0.0
        %2137 = vmatpush.msra.mxu0 0.0
        %2138 = vmatpush.msra.mxu0 0.0
        %2139 = vmatpush.msra.mxu0 0.0
        %2140 = vmatpush.msra.mxu0 0.0
        %2141 = vmatpush.msra.mxu0 0.0
        %2142 = vmatpush.msra.mxu0 0.0
        %2143 = vmatpush.msra.mxu0 0.0
        %v2144 = vand.u32 %v758, 4294901760
        %v2145 = vsub.f32 %v758, %v2144
        %2146 = vmatpush.msra.mxu0 %v2145
        %v2147 = vand.u32 %v2075, 4294901760
        %v2148 = vsub.f32 %v2075, %v2147
        %2149 = vmatmul.f32.gmra.mxu0 %v2148
        %v2150 = vpop.f32.mrf.mxu0
        %v2151 = vadd.f32 %v2127, %v2150
        %2152 = vdwg.mxu0
        %2153 = vmatpush.msra.mxu0 0.0
        %2154 = vmatpush.msra.mxu0 0.0
        %2155 = vmatpush.msra.mxu0 0.0
        %2156 = vmatpush.msra.mxu0 0.0
        %2157 = vmatpush.msra.mxu0 0.0
        %2158 = vmatpush.msra.mxu0 0.0
        %2159 = vmatpush.msra.mxu0 0.0
        %2160 = vmatpush.msra.mxu0 0.0
        %2161 = vmatpush.msra.mxu0 0.0
        %2162 = vmatpush.msra.mxu0 0.0
        %2163 = vmatpush.msra.mxu0 0.0
        %2164 = vmatpush.msra.mxu0 0.0
        %2165 = vmatpush.msra.mxu0 0.0
        %2166 = vmatpush.msra.mxu0 0.0
        %2167 = vmatpush.msra.mxu0 0.0
        %v2168 = vand.u32 %v758, 4294901760
        %2169 = vmatpush.msra.mxu0 %v2168
        %v2170 = vand.u32 %v2075, 4294901760
        %v2171 = vsub.f32 %v2075, %v2170
        %v2172 = vand.u32 %v2171, 4294901760
        %2173 = vmatmul.f32.gmra.mxu0 %v2172
        %v2174 = vpop.f32.mrf.mxu0
        %v2175 = vadd.f32 %v2151, %v2174
        %2176 = vdwg.mxu0
        %2177 = vmatpush.msra.mxu0 0.0
        %2178 = vmatpush.msra.mxu0 0.0
        %2179 = vmatpush.msra.mxu0 0.0
        %2180 = vmatpush.msra.mxu0 0.0
        %2181 = vmatpush.msra.mxu0 0.0
        %2182 = vmatpush.msra.mxu0 0.0
        %2183 = vmatpush.msra.mxu0 0.0
        %2184 = vmatpush.msra.mxu0 0.0
        %2185 = vmatpush.msra.mxu0 0.0
        %2186 = vmatpush.msra.mxu0 0.0
        %2187 = vmatpush.msra.mxu0 0.0
        %2188 = vmatpush.msra.mxu0 0.0
        %2189 = vmatpush.msra.mxu0 0.0
        %2190 = vmatpush.msra.mxu0 0.0
        %2191 = vmatpush.msra.mxu0 0.0
        %v2192 = vand.u32 %v758, 4294901760
        %v2193 = vsub.f32 %v758, %v2192
        %v2194 = vand.u32 %v2193, 4294901760
        %2195 = vmatpush.msra.mxu0 %v2194
        %v2196 = vand.u32 %v2075, 4294901760
        %2197 = vmatmul.f32.gmra.mxu0 %v2196
        %v2198 = vpop.f32.mrf.mxu0
        %v2199 = vadd.f32 %v2175, %v2198
        %2200 = vdwg.mxu0
        %2201 = vmatpush.msra.mxu0 0.0
        %2202 = vmatpush.msra.mxu0 0.0
        %2203 = vmatpush.msra.mxu0 0.0
        %2204 = vmatpush.msra.mxu0 0.0
        %2205 = vmatpush.msra.mxu0 0.0
        %2206 = vmatpush.msra.mxu0 0.0
        %2207 = vmatpush.msra.mxu0 0.0
        %2208 = vmatpush.msra.mxu0 0.0
        %2209 = vmatpush.msra.mxu0 0.0
        %2210 = vmatpush.msra.mxu0 0.0
        %2211 = vmatpush.msra.mxu0 0.0
        %2212 = vmatpush.msra.mxu0 0.0
        %2213 = vmatpush.msra.mxu0 0.0
        %2214 = vmatpush.msra.mxu0 0.0
        %2215 = vmatpush.msra.mxu0 0.0
        %v2216 = vand.u32 %v758, 4294901760
        %2217 = vmatpush.msra.mxu0 %v2216
        %v2218 = vand.u32 %v2075, 4294901760
        %2219 = vmatmul.f32.gmra.mxu0 %v2218
        %v2220 = vpop.f32.mrf.mxu0
        %v2221 = vadd.f32 %v2199, %v2220
        %2222 = vdwg.mxu0
        %2224 = vset.pattern.permute.xlu0 0
        %2225 = vperm.xlu0 %2224, %v1289
        %v2226 = vpop.permute.xlu0 %2225
        %v2227 = vperm.slane %v2226, %v1048
        %v2228 = vsel %vm1072, %v2227, 0
        %2230 = vmatpush.msra.mxu0 0.0
        %2231 = vmatpush.msra.mxu0 0.0
        %2232 = vmatpush.msra.mxu0 0.0
        %2233 = vmatpush.msra.mxu0 0.0
        %2234 = vmatpush.msra.mxu0 0.0
        %2235 = vmatpush.msra.mxu0 0.0
        %2236 = vmatpush.msra.mxu0 0.0
        %2237 = vmatpush.msra.mxu0 0.0
        %2238 = vmatpush.msra.mxu0 0.0
        %2239 = vmatpush.msra.mxu0 0.0
        %2240 = vmatpush.msra.mxu0 0.0
        %2241 = vmatpush.msra.mxu0 0.0
        %2242 = vmatpush.msra.mxu0 0.0
        %2243 = vmatpush.msra.mxu0 0.0
        %2244 = vmatpush.msra.mxu0 0.0
        %v2245 = vand.u32 %v759, 4294901760
        %2246 = vmatpush.msra.mxu0 %v2245
        %v2247 = vand.u32 %v2228, 4294901760
        %v2248 = vsub.f32 %v2228, %v2247
        %v2249 = vand.u32 %v2248, 4294901760
        %v2250 = vsub.f32 %v2248, %v2249
        %v2251 = vand.u32 %v2250, 4294901760
        %2252 = vmatmul.f32.gmra.mxu0 %v2251
        %v2253 = vpop.f32.mrf.mxu0
        %v2254 = vadd.f32 0.0, %v2253
        %2255 = vdwg.mxu0
        %2256 = vmatpush.msra.mxu0 0.0
        %2257 = vmatpush.msra.mxu0 0.0
        %2258 = vmatpush.msra.mxu0 0.0
        %2259 = vmatpush.msra.mxu0 0.0
        %2260 = vmatpush.msra.mxu0 0.0
        %2261 = vmatpush.msra.mxu0 0.0
        %2262 = vmatpush.msra.mxu0 0.0
        %2263 = vmatpush.msra.mxu0 0.0
        %2264 = vmatpush.msra.mxu0 0.0
        %2265 = vmatpush.msra.mxu0 0.0
        %2266 = vmatpush.msra.mxu0 0.0
        %2267 = vmatpush.msra.mxu0 0.0
        %2268 = vmatpush.msra.mxu0 0.0
        %2269 = vmatpush.msra.mxu0 0.0
        %2270 = vmatpush.msra.mxu0 0.0
        %v2271 = vand.u32 %v759, 4294901760
        %v2272 = vsub.f32 %v759, %v2271
        %v2273 = vand.u32 %v2272, 4294901760
        %v2274 = vsub.f32 %v2272, %v2273
        %v2275 = vand.u32 %v2274, 4294901760
        %2276 = vmatpush.msra.mxu0 %v2275
        %v2277 = vand.u32 %v2228, 4294901760
        %2278 = vmatmul.f32.gmra.mxu0 %v2277
        %v2279 = vpop.f32.mrf.mxu0
        %v2280 = vadd.f32 %v2254, %v2279
        %2281 = vdwg.mxu0
        %2282 = vmatpush.msra.mxu0 0.0
        %2283 = vmatpush.msra.mxu0 0.0
        %2284 = vmatpush.msra.mxu0 0.0
        %2285 = vmatpush.msra.mxu0 0.0
        %2286 = vmatpush.msra.mxu0 0.0
        %2287 = vmatpush.msra.mxu0 0.0
        %2288 = vmatpush.msra.mxu0 0.0
        %2289 = vmatpush.msra.mxu0 0.0
        %2290 = vmatpush.msra.mxu0 0.0
        %2291 = vmatpush.msra.mxu0 0.0
        %2292 = vmatpush.msra.mxu0 0.0
        %2293 = vmatpush.msra.mxu0 0.0
        %2294 = vmatpush.msra.mxu0 0.0
        %2295 = vmatpush.msra.mxu0 0.0
        %2296 = vmatpush.msra.mxu0 0.0
        %v2297 = vand.u32 %v759, 4294901760
        %v2298 = vsub.f32 %v759, %v2297
        %2299 = vmatpush.msra.mxu0 %v2298
        %v2300 = vand.u32 %v2228, 4294901760
        %v2301 = vsub.f32 %v2228, %v2300
        %2302 = vmatmul.f32.gmra.mxu0 %v2301
        %v2303 = vpop.f32.mrf.mxu0
        %v2304 = vadd.f32 %v2280, %v2303
        %2305 = vdwg.mxu0
        %2306 = vmatpush.msra.mxu0 0.0
        %2307 = vmatpush.msra.mxu0 0.0
        %2308 = vmatpush.msra.mxu0 0.0
        %2309 = vmatpush.msra.mxu0 0.0
        %2310 = vmatpush.msra.mxu0 0.0
        %2311 = vmatpush.msra.mxu0 0.0
        %2312 = vmatpush.msra.mxu0 0.0
        %2313 = vmatpush.msra.mxu0 0.0
        %2314 = vmatpush.msra.mxu0 0.0
        %2315 = vmatpush.msra.mxu0 0.0
        %2316 = vmatpush.msra.mxu0 0.0
        %2317 = vmatpush.msra.mxu0 0.0
        %2318 = vmatpush.msra.mxu0 0.0
        %2319 = vmatpush.msra.mxu0 0.0
        %2320 = vmatpush.msra.mxu0 0.0
        %v2321 = vand.u32 %v759, 4294901760
        %2322 = vmatpush.msra.mxu0 %v2321
        %v2323 = vand.u32 %v2228, 4294901760
        %v2324 = vsub.f32 %v2228, %v2323
        %v2325 = vand.u32 %v2324, 4294901760
        %2326 = vmatmul.f32.gmra.mxu0 %v2325
        %v2327 = vpop.f32.mrf.mxu0
        %v2328 = vadd.f32 %v2304, %v2327
        %2329 = vdwg.mxu0
        %2330 = vmatpush.msra.mxu0 0.0
        %2331 = vmatpush.msra.mxu0 0.0
        %2332 = vmatpush.msra.mxu0 0.0
        %2333 = vmatpush.msra.mxu0 0.0
        %2334 = vmatpush.msra.mxu0 0.0
        %2335 = vmatpush.msra.mxu0 0.0
        %2336 = vmatpush.msra.mxu0 0.0
        %2337 = vmatpush.msra.mxu0 0.0
        %2338 = vmatpush.msra.mxu0 0.0
        %2339 = vmatpush.msra.mxu0 0.0
        %2340 = vmatpush.msra.mxu0 0.0
        %2341 = vmatpush.msra.mxu0 0.0
        %2342 = vmatpush.msra.mxu0 0.0
        %2343 = vmatpush.msra.mxu0 0.0
        %2344 = vmatpush.msra.mxu0 0.0
        %v2345 = vand.u32 %v759, 4294901760
        %v2346 = vsub.f32 %v759, %v2345
        %v2347 = vand.u32 %v2346, 4294901760
        %2348 = vmatpush.msra.mxu0 %v2347
        %v2349 = vand.u32 %v2228, 4294901760
        %2350 = vmatmul.f32.gmra.mxu0 %v2349
        %v2351 = vpop.f32.mrf.mxu0
        %v2352 = vadd.f32 %v2328, %v2351
        %2353 = vdwg.mxu0
        %2354 = vmatpush.msra.mxu0 0.0
        %2355 = vmatpush.msra.mxu0 0.0
        %2356 = vmatpush.msra.mxu0 0.0
        %2357 = vmatpush.msra.mxu0 0.0
        %2358 = vmatpush.msra.mxu0 0.0
        %2359 = vmatpush.msra.mxu0 0.0
        %2360 = vmatpush.msra.mxu0 0.0
        %2361 = vmatpush.msra.mxu0 0.0
        %2362 = vmatpush.msra.mxu0 0.0
        %2363 = vmatpush.msra.mxu0 0.0
        %2364 = vmatpush.msra.mxu0 0.0
        %2365 = vmatpush.msra.mxu0 0.0
        %2366 = vmatpush.msra.mxu0 0.0
        %2367 = vmatpush.msra.mxu0 0.0
        %2368 = vmatpush.msra.mxu0 0.0
        %v2369 = vand.u32 %v759, 4294901760
        %2370 = vmatpush.msra.mxu0 %v2369
        %v2371 = vand.u32 %v2228, 4294901760
        %2372 = vmatmul.f32.gmra.mxu0 %v2371
        %v2373 = vpop.f32.mrf.mxu0
        %v2374 = vadd.f32 %v2352, %v2373
        %2375 = vdwg.mxu0
        %2377 = vset.pattern.permute.xlu0 0
        %2378 = vperm.xlu0 %2377, %v1304
        %v2379 = vpop.permute.xlu0 %2378
        %v2380 = vperm.slane %v2379, %v1048
        %v2381 = vsel %vm1072, %v2380, 0
        %2383 = vmatpush.msra.mxu0 0.0
        %2384 = vmatpush.msra.mxu0 0.0
        %2385 = vmatpush.msra.mxu0 0.0
        %2386 = vmatpush.msra.mxu0 0.0
        %2387 = vmatpush.msra.mxu0 0.0
        %2388 = vmatpush.msra.mxu0 0.0
        %2389 = vmatpush.msra.mxu0 0.0
        %2390 = vmatpush.msra.mxu0 0.0
        %2391 = vmatpush.msra.mxu0 0.0
        %2392 = vmatpush.msra.mxu0 0.0
        %2393 = vmatpush.msra.mxu0 0.0
        %2394 = vmatpush.msra.mxu0 0.0
        %2395 = vmatpush.msra.mxu0 0.0
        %2396 = vmatpush.msra.mxu0 0.0
        %2397 = vmatpush.msra.mxu0 0.0
        %v2398 = vand.u32 %v760, 4294901760
        %2399 = vmatpush.msra.mxu0 %v2398
        %v2400 = vand.u32 %v2381, 4294901760
        %v2401 = vsub.f32 %v2381, %v2400
        %v2402 = vand.u32 %v2401, 4294901760
        %v2403 = vsub.f32 %v2401, %v2402
        %v2404 = vand.u32 %v2403, 4294901760
        %2405 = vmatmul.f32.gmra.mxu0 %v2404
        %v2406 = vpop.f32.mrf.mxu0
        %v2407 = vadd.f32 0.0, %v2406
        %2408 = vdwg.mxu0
        %2409 = vmatpush.msra.mxu0 0.0
        %2410 = vmatpush.msra.mxu0 0.0
        %2411 = vmatpush.msra.mxu0 0.0
        %2412 = vmatpush.msra.mxu0 0.0
        %2413 = vmatpush.msra.mxu0 0.0
        %2414 = vmatpush.msra.mxu0 0.0
        %2415 = vmatpush.msra.mxu0 0.0
        %2416 = vmatpush.msra.mxu0 0.0
        %2417 = vmatpush.msra.mxu0 0.0
        %2418 = vmatpush.msra.mxu0 0.0
        %2419 = vmatpush.msra.mxu0 0.0
        %2420 = vmatpush.msra.mxu0 0.0
        %2421 = vmatpush.msra.mxu0 0.0
        %2422 = vmatpush.msra.mxu0 0.0
        %2423 = vmatpush.msra.mxu0 0.0
        %v2424 = vand.u32 %v760, 4294901760
        %v2425 = vsub.f32 %v760, %v2424
        %v2426 = vand.u32 %v2425, 4294901760
        %v2427 = vsub.f32 %v2425, %v2426
        %v2428 = vand.u32 %v2427, 4294901760
        %2429 = vmatpush.msra.mxu0 %v2428
        %v2430 = vand.u32 %v2381, 4294901760
        %2431 = vmatmul.f32.gmra.mxu0 %v2430
        %v2432 = vpop.f32.mrf.mxu0
        %v2433 = vadd.f32 %v2407, %v2432
        %2434 = vdwg.mxu0
        %2435 = vmatpush.msra.mxu0 0.0
        %2436 = vmatpush.msra.mxu0 0.0
        %2437 = vmatpush.msra.mxu0 0.0
        %2438 = vmatpush.msra.mxu0 0.0
        %2439 = vmatpush.msra.mxu0 0.0
        %2440 = vmatpush.msra.mxu0 0.0
        %2441 = vmatpush.msra.mxu0 0.0
        %2442 = vmatpush.msra.mxu0 0.0
        %2443 = vmatpush.msra.mxu0 0.0
        %2444 = vmatpush.msra.mxu0 0.0
        %2445 = vmatpush.msra.mxu0 0.0
        %2446 = vmatpush.msra.mxu0 0.0
        %2447 = vmatpush.msra.mxu0 0.0
        %2448 = vmatpush.msra.mxu0 0.0
        %2449 = vmatpush.msra.mxu0 0.0
        %v2450 = vand.u32 %v760, 4294901760
        %v2451 = vsub.f32 %v760, %v2450
        %2452 = vmatpush.msra.mxu0 %v2451
        %v2453 = vand.u32 %v2381, 4294901760
        %v2454 = vsub.f32 %v2381, %v2453
        %2455 = vmatmul.f32.gmra.mxu0 %v2454
        %v2456 = vpop.f32.mrf.mxu0
        %v2457 = vadd.f32 %v2433, %v2456
        %2458 = vdwg.mxu0
        %2459 = vmatpush.msra.mxu0 0.0
        %2460 = vmatpush.msra.mxu0 0.0
        %2461 = vmatpush.msra.mxu0 0.0
        %2462 = vmatpush.msra.mxu0 0.0
        %2463 = vmatpush.msra.mxu0 0.0
        %2464 = vmatpush.msra.mxu0 0.0
        %2465 = vmatpush.msra.mxu0 0.0
        %2466 = vmatpush.msra.mxu0 0.0
        %2467 = vmatpush.msra.mxu0 0.0
        %2468 = vmatpush.msra.mxu0 0.0
        %2469 = vmatpush.msra.mxu0 0.0
        %2470 = vmatpush.msra.mxu0 0.0
        %2471 = vmatpush.msra.mxu0 0.0
        %2472 = vmatpush.msra.mxu0 0.0
        %2473 = vmatpush.msra.mxu0 0.0
        %v2474 = vand.u32 %v760, 4294901760
        %2475 = vmatpush.msra.mxu0 %v2474
        %v2476 = vand.u32 %v2381, 4294901760
        %v2477 = vsub.f32 %v2381, %v2476
        %v2478 = vand.u32 %v2477, 4294901760
        %2479 = vmatmul.f32.gmra.mxu0 %v2478
        %v2480 = vpop.f32.mrf.mxu0
        %v2481 = vadd.f32 %v2457, %v2480
        %2482 = vdwg.mxu0
        %2483 = vmatpush.msra.mxu0 0.0
        %2484 = vmatpush.msra.mxu0 0.0
        %2485 = vmatpush.msra.mxu0 0.0
        %2486 = vmatpush.msra.mxu0 0.0
        %2487 = vmatpush.msra.mxu0 0.0
        %2488 = vmatpush.msra.mxu0 0.0
        %2489 = vmatpush.msra.mxu0 0.0
        %2490 = vmatpush.msra.mxu0 0.0
        %2491 = vmatpush.msra.mxu0 0.0
        %2492 = vmatpush.msra.mxu0 0.0
        %2493 = vmatpush.msra.mxu0 0.0
        %2494 = vmatpush.msra.mxu0 0.0
        %2495 = vmatpush.msra.mxu0 0.0
        %2496 = vmatpush.msra.mxu0 0.0
        %2497 = vmatpush.msra.mxu0 0.0
        %v2498 = vand.u32 %v760, 4294901760
        %v2499 = vsub.f32 %v760, %v2498
        %v2500 = vand.u32 %v2499, 4294901760
        %2501 = vmatpush.msra.mxu0 %v2500
        %v2502 = vand.u32 %v2381, 4294901760
        %2503 = vmatmul.f32.gmra.mxu0 %v2502
        %v2504 = vpop.f32.mrf.mxu0
        %v2505 = vadd.f32 %v2481, %v2504
        %2506 = vdwg.mxu0
        %2507 = vmatpush.msra.mxu0 0.0
        %2508 = vmatpush.msra.mxu0 0.0
        %2509 = vmatpush.msra.mxu0 0.0
        %2510 = vmatpush.msra.mxu0 0.0
        %2511 = vmatpush.msra.mxu0 0.0
        %2512 = vmatpush.msra.mxu0 0.0
        %2513 = vmatpush.msra.mxu0 0.0
        %2514 = vmatpush.msra.mxu0 0.0
        %2515 = vmatpush.msra.mxu0 0.0
        %2516 = vmatpush.msra.mxu0 0.0
        %2517 = vmatpush.msra.mxu0 0.0
        %2518 = vmatpush.msra.mxu0 0.0
        %2519 = vmatpush.msra.mxu0 0.0
        %2520 = vmatpush.msra.mxu0 0.0
        %2521 = vmatpush.msra.mxu0 0.0
        %v2522 = vand.u32 %v760, 4294901760
        %2523 = vmatpush.msra.mxu0 %v2522
        %v2524 = vand.u32 %v2381, 4294901760
        %2525 = vmatmul.f32.gmra.mxu0 %v2524
        %v2526 = vpop.f32.mrf.mxu0
        %v2527 = vadd.f32 %v2505, %v2526
        %2528 = vdwg.mxu0
        %v2537 = vrot.slane %v1609, 7
        %v2538 = vsel %vm1057, %v2537, %v1456
        %v2539 = vrot.slane %v1762, 6
        %v2540 = vsel %vm1059, %v2539, %v2538
        %v2541 = vrot.slane %v1915, 5
        %v2542 = vsel %vm1061, %v2541, %v2540
        %v2543 = vrot.slane %v2068, 4
        %v2544 = vsel %vm1063, %v2543, %v2542
        %v2545 = vrot.slane %v2221, 3
        %v2546 = vsel %vm1065, %v2545, %v2544
        %v2547 = vrot.slane %v2374, 2
        %v2548 = vsel %vm1067, %v2547, %v2546
        %v2549 = vrot.slane %v2527, 1
        %v2550 = vsel %vm1069, %v2549, %v2548
        %2551 = vrot.lane.b32.xlu0 %v2550, 8
        %v2552 = vpop.permute.xlu0 %2551
        %v2554 = vsel %vm1072, %v752, %v2552
        %vm2555 = vcmask 326656
        %v2556 = vsel %vm2555, %v2554, 0.0
        %v2557 = vld [vmem:[%s0 + $0x40] sm:$0xff]
        %v2558 = vld [vmem:[%s0 + $0x48] sm:$0xff]
        %v2559 = vld [vmem:[%s0 + $0x50] sm:$0xff]
        %v2560 = vld [vmem:[%s0 + $0x58] sm:$0xff]
        %v2561 = vld [vmem:[%s0 + $0x60] sm:$0xff]
        %v2562 = vld [vmem:[%s0 + $0x68] sm:$0xff]
        %vm2563 = vcmask 392192
        %v2565 = vsel %vm2563, %v2556, 0
        %2567 = vmatpush.msra.mxu0 0.0
        %2568 = vmatpush.msra.mxu0 0.0
        %2569 = vmatpush.msra.mxu0 0.0
        %2570 = vmatpush.msra.mxu0 0.0
        %2571 = vmatpush.msra.mxu0 0.0
        %2572 = vmatpush.msra.mxu0 0.0
        %2573 = vmatpush.msra.mxu0 0.0
        %2574 = vmatpush.msra.mxu0 0.0
        %2575 = vmatpush.msra.mxu0 0.0
        %2576 = vmatpush.msra.mxu0 0.0
        %v2577 = vand.u32 %v2562, 4294901760
        %2578 = vmatpush.msra.mxu0 %v2577
        %v2579 = vand.u32 %v2561, 4294901760
        %2580 = vmatpush.msra.mxu0 %v2579
        %v2581 = vand.u32 %v2560, 4294901760
        %2582 = vmatpush.msra.mxu0 %v2581
        %v2583 = vand.u32 %v2559, 4294901760
        %2584 = vmatpush.msra.mxu0 %v2583
        %v2585 = vand.u32 %v2558, 4294901760
        %2586 = vmatpush.msra.mxu0 %v2585
        %v2587 = vand.u32 %v2557, 4294901760
        %2588 = vmatpush.msra.mxu0 %v2587
        %v2589 = vand.u32 %v2565, 4294901760
        %v2590 = vsub.f32 %v2565, %v2589
        %v2591 = vand.u32 %v2590, 4294901760
        %v2592 = vsub.f32 %v2590, %v2591
        %v2593 = vand.u32 %v2592, 4294901760
        %2594 = vmatmul.f32.gmra.mxu0 %v2593
        %v2595 = vpop.f32.mrf.mxu0
        %v2596 = vadd.f32 0.0, %v2595
        %2597 = vdwg.mxu0
        %2598 = vmatpush.msra.mxu0 0.0
        %2599 = vmatpush.msra.mxu0 0.0
        %2600 = vmatpush.msra.mxu0 0.0
        %2601 = vmatpush.msra.mxu0 0.0
        %2602 = vmatpush.msra.mxu0 0.0
        %2603 = vmatpush.msra.mxu0 0.0
        %2604 = vmatpush.msra.mxu0 0.0
        %2605 = vmatpush.msra.mxu0 0.0
        %2606 = vmatpush.msra.mxu0 0.0
        %2607 = vmatpush.msra.mxu0 0.0
        %v2608 = vand.u32 %v2562, 4294901760
        %v2609 = vsub.f32 %v2562, %v2608
        %v2610 = vand.u32 %v2609, 4294901760
        %v2611 = vsub.f32 %v2609, %v2610
        %v2612 = vand.u32 %v2611, 4294901760
        %2613 = vmatpush.msra.mxu0 %v2612
        %v2614 = vand.u32 %v2561, 4294901760
        %v2615 = vsub.f32 %v2561, %v2614
        %v2616 = vand.u32 %v2615, 4294901760
        %v2617 = vsub.f32 %v2615, %v2616
        %v2618 = vand.u32 %v2617, 4294901760
        %2619 = vmatpush.msra.mxu0 %v2618
        %v2620 = vand.u32 %v2560, 4294901760
        %v2621 = vsub.f32 %v2560, %v2620
        %v2622 = vand.u32 %v2621, 4294901760
        %v2623 = vsub.f32 %v2621, %v2622
        %v2624 = vand.u32 %v2623, 4294901760
        %2625 = vmatpush.msra.mxu0 %v2624
        %v2626 = vand.u32 %v2559, 4294901760
        %v2627 = vsub.f32 %v2559, %v2626
        %v2628 = vand.u32 %v2627, 4294901760
        %v2629 = vsub.f32 %v2627, %v2628
        %v2630 = vand.u32 %v2629, 4294901760
        %2631 = vmatpush.msra.mxu0 %v2630
        %v2632 = vand.u32 %v2558, 4294901760
        %v2633 = vsub.f32 %v2558, %v2632
        %v2634 = vand.u32 %v2633, 4294901760
        %v2635 = vsub.f32 %v2633, %v2634
        %v2636 = vand.u32 %v2635, 4294901760
        %2637 = vmatpush.msra.mxu0 %v2636
        %v2638 = vand.u32 %v2557, 4294901760
        %v2639 = vsub.f32 %v2557, %v2638
        %v2640 = vand.u32 %v2639, 4294901760
        %v2641 = vsub.f32 %v2639, %v2640
        %v2642 = vand.u32 %v2641, 4294901760
        %2643 = vmatpush.msra.mxu0 %v2642
        %v2644 = vand.u32 %v2565, 4294901760
        %2645 = vmatmul.f32.gmra.mxu0 %v2644
        %v2646 = vpop.f32.mrf.mxu0
        %v2647 = vadd.f32 %v2596, %v2646
        %2648 = vdwg.mxu0
        %2649 = vmatpush.msra.mxu0 0.0
        %2650 = vmatpush.msra.mxu0 0.0
        %2651 = vmatpush.msra.mxu0 0.0
        %2652 = vmatpush.msra.mxu0 0.0
        %2653 = vmatpush.msra.mxu0 0.0
        %2654 = vmatpush.msra.mxu0 0.0
        %2655 = vmatpush.msra.mxu0 0.0
        %2656 = vmatpush.msra.mxu0 0.0
        %2657 = vmatpush.msra.mxu0 0.0
        %2658 = vmatpush.msra.mxu0 0.0
        %v2659 = vand.u32 %v2562, 4294901760
        %v2660 = vsub.f32 %v2562, %v2659
        %2661 = vmatpush.msra.mxu0 %v2660
        %v2662 = vand.u32 %v2561, 4294901760
        %v2663 = vsub.f32 %v2561, %v2662
        %2664 = vmatpush.msra.mxu0 %v2663
        %v2665 = vand.u32 %v2560, 4294901760
        %v2666 = vsub.f32 %v2560, %v2665
        %2667 = vmatpush.msra.mxu0 %v2666
        %v2668 = vand.u32 %v2559, 4294901760
        %v2669 = vsub.f32 %v2559, %v2668
        %2670 = vmatpush.msra.mxu0 %v2669
        %v2671 = vand.u32 %v2558, 4294901760
        %v2672 = vsub.f32 %v2558, %v2671
        %2673 = vmatpush.msra.mxu0 %v2672
        %v2674 = vand.u32 %v2557, 4294901760
        %v2675 = vsub.f32 %v2557, %v2674
        %2676 = vmatpush.msra.mxu0 %v2675
        %v2677 = vand.u32 %v2565, 4294901760
        %v2678 = vsub.f32 %v2565, %v2677
        %2679 = vmatmul.f32.gmra.mxu0 %v2678
        %v2680 = vpop.f32.mrf.mxu0
        %v2681 = vadd.f32 %v2647, %v2680
        %2682 = vdwg.mxu0
        %2683 = vmatpush.msra.mxu0 0.0
        %2684 = vmatpush.msra.mxu0 0.0
        %2685 = vmatpush.msra.mxu0 0.0
        %2686 = vmatpush.msra.mxu0 0.0
        %2687 = vmatpush.msra.mxu0 0.0
        %2688 = vmatpush.msra.mxu0 0.0
        %2689 = vmatpush.msra.mxu0 0.0
        %2690 = vmatpush.msra.mxu0 0.0
        %2691 = vmatpush.msra.mxu0 0.0
        %2692 = vmatpush.msra.mxu0 0.0
        %v2693 = vand.u32 %v2562, 4294901760
        %2694 = vmatpush.msra.mxu0 %v2693
        %v2695 = vand.u32 %v2561, 4294901760
        %2696 = vmatpush.msra.mxu0 %v2695
        %v2697 = vand.u32 %v2560, 4294901760
        %2698 = vmatpush.msra.mxu0 %v2697
        %v2699 = vand.u32 %v2559, 4294901760
        %2700 = vmatpush.msra.mxu0 %v2699
        %v2701 = vand.u32 %v2558, 4294901760
        %2702 = vmatpush.msra.mxu0 %v2701
        %v2703 = vand.u32 %v2557, 4294901760
        %2704 = vmatpush.msra.mxu0 %v2703
        %v2705 = vand.u32 %v2565, 4294901760
        %v2706 = vsub.f32 %v2565, %v2705
        %v2707 = vand.u32 %v2706, 4294901760
        %2708 = vmatmul.f32.gmra.mxu0 %v2707
        %v2709 = vpop.f32.mrf.mxu0
        %v2710 = vadd.f32 %v2681, %v2709
        %2711 = vdwg.mxu0
        %2712 = vmatpush.msra.mxu0 0.0
        %2713 = vmatpush.msra.mxu0 0.0
        %2714 = vmatpush.msra.mxu0 0.0
        %2715 = vmatpush.msra.mxu0 0.0
        %2716 = vmatpush.msra.mxu0 0.0
        %2717 = vmatpush.msra.mxu0 0.0
        %2718 = vmatpush.msra.mxu0 0.0
        %2719 = vmatpush.msra.mxu0 0.0
        %2720 = vmatpush.msra.mxu0 0.0
        %2721 = vmatpush.msra.mxu0 0.0
        %v2722 = vand.u32 %v2562, 4294901760
        %v2723 = vsub.f32 %v2562, %v2722
        %v2724 = vand.u32 %v2723, 4294901760
        %2725 = vmatpush.msra.mxu0 %v2724
        %v2726 = vand.u32 %v2561, 4294901760
        %v2727 = vsub.f32 %v2561, %v2726
        %v2728 = vand.u32 %v2727, 4294901760
        %2729 = vmatpush.msra.mxu0 %v2728
        %v2730 = vand.u32 %v2560, 4294901760
        %v2731 = vsub.f32 %v2560, %v2730
        %v2732 = vand.u32 %v2731, 4294901760
        %2733 = vmatpush.msra.mxu0 %v2732
        %v2734 = vand.u32 %v2559, 4294901760
        %v2735 = vsub.f32 %v2559, %v2734
        %v2736 = vand.u32 %v2735, 4294901760
        %2737 = vmatpush.msra.mxu0 %v2736
        %v2738 = vand.u32 %v2558, 4294901760
        %v2739 = vsub.f32 %v2558, %v2738
        %v2740 = vand.u32 %v2739, 4294901760
        %2741 = vmatpush.msra.mxu0 %v2740
        %v2742 = vand.u32 %v2557, 4294901760
        %v2743 = vsub.f32 %v2557, %v2742
        %v2744 = vand.u32 %v2743, 4294901760
        %2745 = vmatpush.msra.mxu0 %v2744
        %v2746 = vand.u32 %v2565, 4294901760
        %2747 = vmatmul.f32.gmra.mxu0 %v2746
        %v2748 = vpop.f32.mrf.mxu0
        %v2749 = vadd.f32 %v2710, %v2748
        %2750 = vdwg.mxu0
        %2751 = vmatpush.msra.mxu0 0.0
        %2752 = vmatpush.msra.mxu0 0.0
        %2753 = vmatpush.msra.mxu0 0.0
        %2754 = vmatpush.msra.mxu0 0.0
        %2755 = vmatpush.msra.mxu0 0.0
        %2756 = vmatpush.msra.mxu0 0.0
        %2757 = vmatpush.msra.mxu0 0.0
        %2758 = vmatpush.msra.mxu0 0.0
        %2759 = vmatpush.msra.mxu0 0.0
        %2760 = vmatpush.msra.mxu0 0.0
        %v2761 = vand.u32 %v2562, 4294901760
        %2762 = vmatpush.msra.mxu0 %v2761
        %v2763 = vand.u32 %v2561, 4294901760
        %2764 = vmatpush.msra.mxu0 %v2763
        %v2765 = vand.u32 %v2560, 4294901760
        %2766 = vmatpush.msra.mxu0 %v2765
        %v2767 = vand.u32 %v2559, 4294901760
        %2768 = vmatpush.msra.mxu0 %v2767
        %v2769 = vand.u32 %v2558, 4294901760
        %2770 = vmatpush.msra.mxu0 %v2769
        %v2771 = vand.u32 %v2557, 4294901760
        %2772 = vmatpush.msra.mxu0 %v2771
        %v2773 = vand.u32 %v2565, 4294901760
        %2774 = vmatmul.f32.gmra.mxu0 %v2773
        %v2775 = vpop.f32.mrf.mxu0
        %v2776 = vadd.f32 %v2749, %v2775
        %2777 = vdwg.mxu0
        %v2778 = vperm.slane %v761, 0
        %v2779 = vadd.f32 %v2776, %v2778
        %v2780 = vperm.slane %v762, 0
        %2782 = vrot.lane.b32.xlu0 %v2780, 32
        %v2783 = vpop.permute.xlu0 %2782
        %v2785 = vadd.f32 %v956, %v2783
        %2787 = vrot.lane.b32.xlu0 %v2785, 96
        %v2788 = vpop.permute.xlu0 %2787
        %v2790 = vadd.f32 %v2779, %v2788
        %v2791 = vxor.u32 %v2790, 2147483648
        %v2792 = vmul.f32 %v2791, 1.442695
        %v2793 = vpow.pop %v2792
        %v2794 = vadd.f32 %v2793, 1.0
        %v2795 = vrcp.pop %v2794
        %v2796 = vmul.f32 %v2794, %v2795
        %v2797 = vsub.f32 1.0, %v2796
        %v2798 = vmul.f32 %v2795, %v2797
        %v2799 = vadd.f32 %v2795, %v2798
        %vm2800 = vweird.f32 %v2794
        %vm2801 = vweird.f32 %v2795
        %vm2802 = vmor %vm2800, %vm2801
        %v2803 = vsel %vm2802, %v2795, %v2799
        %v2804 = vand.u32 2147483647, %v2794
        %vm2805 = vcmp.eq.f32.partialorder %v2804, 8.507059e+37
        %v2806 = vand.u32 %v2794, 2147483648
        %v2807 = vor.u32 1.1754944e-38, %v2806
        %v2808 = vsel %vm2805, %v2807, %v2803
        %v2809 = vmul.f32 1.0, %v2808
        %2810 = vrot.lane.b32.xlu0 %v2785, 32
        %v2811 = vpop.permute.xlu0 %2810
        %v2813 = vmul.f32 %v2809, %v2811
        %2815 = vrot.lane.b32.xlu0 %v2813, 64
        %v2816 = vpop.permute.xlu0 %2815
        %v2818 = vadd.f32 %v2779, %v2816
        %v2819 = vtanh.pop %v2818
        %v2820 = vsub.f32 1.0, %v2809
        %2822 = vrot.lane.b32.xlu0 %v2819, 96
        %v2823 = vpop.permute.xlu0 %2822
        %v2825 = vmul.f32 %v2820, %v2823
        %2826 = vrot.lane.b32.xlu0 %v751, 32
        %v2827 = vpop.permute.xlu0 %2826
        %v2829 = vmul.f32 %v2809, %v2827
        %v2830 = vadd.f32 %v2825, %v2829
        %v2831 = vld [vmem:[%s0 + $0x70] sm:$0xff]
        %v2832 = vld [vmem:[%s0 + $0x78] sm:$0xff]
        %v2833 = vld [vmem:[%s0 + $0x80] sm:$0xff]
        %v2834 = vld [vmem:[%s0 + $0x88] sm:$0xff]
        %2836 = vrot.lane.b32.xlu0 %v2830, 96
        %v2837 = vpop.permute.xlu0 %2836
        %v2838 = vsel %vm769, %v2837, 0
        %2840 = vmatpush.msra.mxu0 0.0
        %2841 = vmatpush.msra.mxu0 0.0
        %2842 = vmatpush.msra.mxu0 0.0
        %2843 = vmatpush.msra.mxu0 0.0
        %2844 = vmatpush.msra.mxu0 0.0
        %2845 = vmatpush.msra.mxu0 0.0
        %2846 = vmatpush.msra.mxu0 0.0
        %2847 = vmatpush.msra.mxu0 0.0
        %2848 = vmatpush.msra.mxu0 0.0
        %2849 = vmatpush.msra.mxu0 0.0
        %2850 = vmatpush.msra.mxu0 0.0
        %2851 = vmatpush.msra.mxu0 0.0
        %v2852 = vand.u32 %v2834, 4294901760
        %2853 = vmatpush.msra.mxu0 %v2852
        %v2854 = vand.u32 %v2833, 4294901760
        %2855 = vmatpush.msra.mxu0 %v2854
        %v2856 = vand.u32 %v2832, 4294901760
        %2857 = vmatpush.msra.mxu0 %v2856
        %v2858 = vand.u32 %v2831, 4294901760
        %2859 = vmatpush.msra.mxu0 %v2858
        %v2860 = vand.u32 %v2838, 4294901760
        %v2861 = vsub.f32 %v2838, %v2860
        %v2862 = vand.u32 %v2861, 4294901760
        %v2863 = vsub.f32 %v2861, %v2862
        %v2864 = vand.u32 %v2863, 4294901760
        %2865 = vmatmul.f32.gmra.mxu0 %v2864
        %v2866 = vpop.f32.mrf.mxu0
        %v2867 = vadd.f32 0.0, %v2866
        %2868 = vdwg.mxu0
        %2869 = vmatpush.msra.mxu0 0.0
        %2870 = vmatpush.msra.mxu0 0.0
        %2871 = vmatpush.msra.mxu0 0.0
        %2872 = vmatpush.msra.mxu0 0.0
        %2873 = vmatpush.msra.mxu0 0.0
        %2874 = vmatpush.msra.mxu0 0.0
        %2875 = vmatpush.msra.mxu0 0.0
        %2876 = vmatpush.msra.mxu0 0.0
        %2877 = vmatpush.msra.mxu0 0.0
        %2878 = vmatpush.msra.mxu0 0.0
        %2879 = vmatpush.msra.mxu0 0.0
        %2880 = vmatpush.msra.mxu0 0.0
        %v2881 = vand.u32 %v2834, 4294901760
        %v2882 = vsub.f32 %v2834, %v2881
        %v2883 = vand.u32 %v2882, 4294901760
        %v2884 = vsub.f32 %v2882, %v2883
        %v2885 = vand.u32 %v2884, 4294901760
        %2886 = vmatpush.msra.mxu0 %v2885
        %v2887 = vand.u32 %v2833, 4294901760
        %v2888 = vsub.f32 %v2833, %v2887
        %v2889 = vand.u32 %v2888, 4294901760
        %v2890 = vsub.f32 %v2888, %v2889
        %v2891 = vand.u32 %v2890, 4294901760
        %2892 = vmatpush.msra.mxu0 %v2891
        %v2893 = vand.u32 %v2832, 4294901760
        %v2894 = vsub.f32 %v2832, %v2893
        %v2895 = vand.u32 %v2894, 4294901760
        %v2896 = vsub.f32 %v2894, %v2895
        %v2897 = vand.u32 %v2896, 4294901760
        %2898 = vmatpush.msra.mxu0 %v2897
        %v2899 = vand.u32 %v2831, 4294901760
        %v2900 = vsub.f32 %v2831, %v2899
        %v2901 = vand.u32 %v2900, 4294901760
        %v2902 = vsub.f32 %v2900, %v2901
        %v2903 = vand.u32 %v2902, 4294901760
        %2904 = vmatpush.msra.mxu0 %v2903
        %v2905 = vand.u32 %v2838, 4294901760
        %2906 = vmatmul.f32.gmra.mxu0 %v2905
        %v2907 = vpop.f32.mrf.mxu0
        %v2908 = vadd.f32 %v2867, %v2907
        %2909 = vdwg.mxu0
        %2910 = vmatpush.msra.mxu0 0.0
        %2911 = vmatpush.msra.mxu0 0.0
        %2912 = vmatpush.msra.mxu0 0.0
        %2913 = vmatpush.msra.mxu0 0.0
        %2914 = vmatpush.msra.mxu0 0.0
        %2915 = vmatpush.msra.mxu0 0.0
        %2916 = vmatpush.msra.mxu0 0.0
        %2917 = vmatpush.msra.mxu0 0.0
        %2918 = vmatpush.msra.mxu0 0.0
        %2919 = vmatpush.msra.mxu0 0.0
        %2920 = vmatpush.msra.mxu0 0.0
        %2921 = vmatpush.msra.mxu0 0.0
        %v2922 = vand.u32 %v2834, 4294901760
        %v2923 = vsub.f32 %v2834, %v2922
        %2924 = vmatpush.msra.mxu0 %v2923
        %v2925 = vand.u32 %v2833, 4294901760
        %v2926 = vsub.f32 %v2833, %v2925
        %2927 = vmatpush.msra.mxu0 %v2926
        %v2928 = vand.u32 %v2832, 4294901760
        %v2929 = vsub.f32 %v2832, %v2928
        %2930 = vmatpush.msra.mxu0 %v2929
        %v2931 = vand.u32 %v2831, 4294901760
        %v2932 = vsub.f32 %v2831, %v2931
        %2933 = vmatpush.msra.mxu0 %v2932
        %v2934 = vand.u32 %v2838, 4294901760
        %v2935 = vsub.f32 %v2838, %v2934
        %2936 = vmatmul.f32.gmra.mxu0 %v2935
        %v2937 = vpop.f32.mrf.mxu0
        %v2938 = vadd.f32 %v2908, %v2937
        %2939 = vdwg.mxu0
        %2940 = vmatpush.msra.mxu0 0.0
        %2941 = vmatpush.msra.mxu0 0.0
        %2942 = vmatpush.msra.mxu0 0.0
        %2943 = vmatpush.msra.mxu0 0.0
        %2944 = vmatpush.msra.mxu0 0.0
        %2945 = vmatpush.msra.mxu0 0.0
        %2946 = vmatpush.msra.mxu0 0.0
        %2947 = vmatpush.msra.mxu0 0.0
        %2948 = vmatpush.msra.mxu0 0.0
        %2949 = vmatpush.msra.mxu0 0.0
        %2950 = vmatpush.msra.mxu0 0.0
        %2951 = vmatpush.msra.mxu0 0.0
        %v2952 = vand.u32 %v2834, 4294901760
        %2953 = vmatpush.msra.mxu0 %v2952
        %v2954 = vand.u32 %v2833, 4294901760
        %2955 = vmatpush.msra.mxu0 %v2954
        %v2956 = vand.u32 %v2832, 4294901760
        %2957 = vmatpush.msra.mxu0 %v2956
        %v2958 = vand.u32 %v2831, 4294901760
        %2959 = vmatpush.msra.mxu0 %v2958
        %v2960 = vand.u32 %v2838, 4294901760
        %v2961 = vsub.f32 %v2838, %v2960
        %v2962 = vand.u32 %v2961, 4294901760
        %2963 = vmatmul.f32.gmra.mxu0 %v2962
        %v2964 = vpop.f32.mrf.mxu0
        %v2965 = vadd.f32 %v2938, %v2964
        %2966 = vdwg.mxu0
        %2967 = vmatpush.msra.mxu0 0.0
        %2968 = vmatpush.msra.mxu0 0.0
        %2969 = vmatpush.msra.mxu0 0.0
        %2970 = vmatpush.msra.mxu0 0.0
        %2971 = vmatpush.msra.mxu0 0.0
        %2972 = vmatpush.msra.mxu0 0.0
        %2973 = vmatpush.msra.mxu0 0.0
        %2974 = vmatpush.msra.mxu0 0.0
        %2975 = vmatpush.msra.mxu0 0.0
        %2976 = vmatpush.msra.mxu0 0.0
        %2977 = vmatpush.msra.mxu0 0.0
        %2978 = vmatpush.msra.mxu0 0.0
        %v2979 = vand.u32 %v2834, 4294901760
        %v2980 = vsub.f32 %v2834, %v2979
        %v2981 = vand.u32 %v2980, 4294901760
        %2982 = vmatpush.msra.mxu0 %v2981
        %v2983 = vand.u32 %v2833, 4294901760
        %v2984 = vsub.f32 %v2833, %v2983
        %v2985 = vand.u32 %v2984, 4294901760
        %2986 = vmatpush.msra.mxu0 %v2985
        %v2987 = vand.u32 %v2832, 4294901760
        %v2988 = vsub.f32 %v2832, %v2987
        %v2989 = vand.u32 %v2988, 4294901760
        %2990 = vmatpush.msra.mxu0 %v2989
        %v2991 = vand.u32 %v2831, 4294901760
        %v2992 = vsub.f32 %v2831, %v2991
        %v2993 = vand.u32 %v2992, 4294901760
        %2994 = vmatpush.msra.mxu0 %v2993
        %v2995 = vand.u32 %v2838, 4294901760
        %2996 = vmatmul.f32.gmra.mxu0 %v2995
        %v2997 = vpop.f32.mrf.mxu0
        %v2998 = vadd.f32 %v2965, %v2997
        %2999 = vdwg.mxu0
        %3000 = vmatpush.msra.mxu0 0.0
        %3001 = vmatpush.msra.mxu0 0.0
        %3002 = vmatpush.msra.mxu0 0.0
        %3003 = vmatpush.msra.mxu0 0.0
        %3004 = vmatpush.msra.mxu0 0.0
        %3005 = vmatpush.msra.mxu0 0.0
        %3006 = vmatpush.msra.mxu0 0.0
        %3007 = vmatpush.msra.mxu0 0.0
        %3008 = vmatpush.msra.mxu0 0.0
        %3009 = vmatpush.msra.mxu0 0.0
        %3010 = vmatpush.msra.mxu0 0.0
        %3011 = vmatpush.msra.mxu0 0.0
        %v3012 = vand.u32 %v2834, 4294901760
        %3013 = vmatpush.msra.mxu0 %v3012
        %v3014 = vand.u32 %v2833, 4294901760
        %3015 = vmatpush.msra.mxu0 %v3014
        %v3016 = vand.u32 %v2832, 4294901760
        %3017 = vmatpush.msra.mxu0 %v3016
        %v3018 = vand.u32 %v2831, 4294901760
        %3019 = vmatpush.msra.mxu0 %v3018
        %v3020 = vand.u32 %v2838, 4294901760
        %3021 = vmatmul.f32.gmra.mxu0 %v3020
        %v3022 = vpop.f32.mrf.mxu0
        %v3023 = vadd.f32 %v2998, %v3022
        %3024 = vdwg.mxu0
        %3026 = vrot.lane.b32.xlu0 %v2776, 32
        %v3027 = vpop.permute.xlu0 %3026
        %v3029 = vadd.f32 %v3023, %v3027
        %v3030 = vperm.slane %v763, 0
        %v3031 = vadd.f32 %v3029, %v3030
        %3033 = vst.msk [vmem:[#allocation2] sm:$0xff] %vm769, %v2837
        %3035 = vrot.lane.b32.xlu0 %v3031, 32
        %v3036 = vpop.permute.xlu0 %3035
        %v3038 = vsel %vm769, %v2837, %v3036
        %v3039 = vsel %vm2563, %v3038, 0.0
        %3040 = vst [vmem:[%s275] sm:$0xff] %v3039
        %s3041 = sand.u32 %s164, 1
        %s3042 = scalar_lea.sflag [#allocation6], %s3041
        %s3043 = sand.u32 %s164, 1
        %s3044 = smul.addr %s3043, 8
        %s3045 = scalar_lea.vmem [#allocation7], %s3044
        // Predicated region
        $region49: #{tpu_custom_call.1} parent=39 // pred_check
          %p3046 = pneg %p174
        $region50: #{tpu_custom_call.1} parent=39 // pred_check_branch
          %3048 = sbr.rel (%p3046) target = $region52
        $region51: #{tpu_custom_call.1} parent=39 // pred_region
          %3050 = vsyncadd %s3042, 0
          %s3051 = sadd.s32 %s24, %s25
          %s3052 = smul.addr %s3051, 8
          %s3053 = scalar_lea.hbm %s5, %s3052
          %s3055 = sshll.u32 %s3045, 4
          %s3056 = int_to_ptr.vmem [resolvable:$true] %s3055
          %s3057 = sshll.u32 %s3053, 4
          %s3058 = int_to_ptr.hbm [resolvable:$true] %s3057
          %3060 = dma.vmem_to_hbm [thread:$0]  %s3056, 128, %s3058, %s3042
        $region52: #{tpu_custom_call.1} parent=39 // pred_fallthru
          _
      $region40: #{tpu_custom_call.1} parent=5 // pred_fallthru
        _
      %p3061 = scmp.le.s32.totalorder 2, %s15
      // Predicated region
      $region53: #{tpu_custom_call.1} parent=5 // pred_check
        %p3062 = pneg %p3061
      $region54: #{tpu_custom_call.1} parent=5 // pred_check_branch
        %3064 = sbr.rel (%p3062) target = $region56
      $region55: #{tpu_custom_call.1} parent=5 // pred_region
        %s3065 = ssub.s32 %s15, 2
        // Predicated region
        $region57: #{tpu_custom_call.1} parent=55 // pred_check
          %p3066 = pneg %p180
        $region58: #{tpu_custom_call.1} parent=55 // pred_check_branch
          %3068 = sbr.rel (%p3066) target = $region60
        $region59: #{tpu_custom_call.1} parent=55 // pred_region
          %s3069 = sand.u32 %s165, 1
          %s3070 = scalar_lea.sflag [#allocation6], %s3069
          %s3071 = sand.u32 %s165, 1
          %s3072 = smul.addr %s3071, 8
          %s3073 = scalar_lea.vmem [#allocation7], %s3072
          %3075 = dma.done %s3070, 128
        $region60: #{tpu_custom_call.1} parent=55 // pred_fallthru
          _
      $region56: #{tpu_custom_call.1} parent=5 // pred_fallthru
        _
    $region6: #{tpu_custom_call.1} parent=1 // loop_footer
      %s19 = sadd.s32 1, %s15
    $region7: #{tpu_custom_call.1} parent=1 // loop_footer_branch
      %14 = sbr.rel target = $region3
    $region8: #{tpu_custom_call.1} parent=1 // loop_exit
      _
    %3076 = vsyncpa [#allocation5], 1
    %s3077 = scalar_lea.sflag [#allocation5], 1
    %3078 = vsyncpa %s3077, 1
    %3079 = vsyncpa [#allocation6], 1
    %s3080 = scalar_lea.sflag [#allocation6], 1
    %3081 = vsyncpa %s3080, 1

</llo_original>
